<compile_context>
chip_gen: v5e
topology: v5e:2x2
jax: 0.10.0
libtpu: 0.0.40
codegen_flags: <defaults>
</compile_context>

<pallas_src>
import jax
import jax.numpy as jnp
from jax.experimental import pallas as pl
from jax.experimental.pallas import tpu as pltpu

K = 7                 # conv kernel size
PAD = K // 2          # padding = 3
ROW0 = 8              # sublane-aligned row offset of the map interior in scratch


def _spatial_attention_kernel(wb_ref, x_ref, o_ref, maps_ref):
    # wb_ref:   VMEM (K, 2W, W)   fused banded weights (avg rows [0,W), max [W,2W))
    # x_ref:    VMEM (Bt, C, HW)  lane-dense input block (HW = H*W on lanes)
    # o_ref:    VMEM (Bt, 1, H, W) output attention maps
    # maps_ref: VMEM (H+16, 2W)   H-zero-padded avg|max maps, interior at ROW0
    Bt, C, HW = x_ref.shape
    H, W = o_ref.shape[2], o_ref.shape[3]
    inv_c = jnp.float32(1.0 / C)

    # Zero only the halo rows (shared by every batch element in this grid step).
    maps_ref[ROW0 - PAD:ROW0, :] = jnp.zeros((PAD, 2 * W), jnp.float32)
    maps_ref[ROW0 + H:ROW0 + H + PAD, :] = jnp.zeros((PAD, 2 * W), jnp.float32)

    for b in range(Bt):                       # static unroll over the batch tile
        xb = x_ref.at[b]                      # (C, HW) ref view, zero-cost

        # --- channel mean & max fused into one lane-dense streaming pass -----
        def channel_step(c, carry):
            s, m = carry
            xc = xb[pl.ds(c, 1), :]           # (1, HW), input dtype
            return s + xc.astype(jnp.float32), jnp.maximum(m, xc)

        ssum, smax = jax.lax.fori_loop(
            0, C, channel_step,
            (jnp.zeros((1, HW), jnp.float32),
             jnp.full((1, HW), -jnp.inf, x_ref.dtype)),
            unroll=min(8, C))
        avg_flat = ssum * inv_c               # mul by static 1/C, no divide
        max_flat = smax.astype(jnp.float32)

        # --- unflatten the two tiny maps into the padded scratch -------------
        # Per-row lane slices written at a sublane-aligned interior offset.
        for r in range(H):
            sl = slice(r * W, (r + 1) * W)
            maps_ref[ROW0 + r:ROW0 + r + 1, :] = jnp.concatenate(
                [avg_flat[:, sl], max_flat[:, sl]], axis=-1)

        # --- 7x7 conv as K fused MXU matmuls: (H, 2W) @ (2W, W) --------------
        # The banded weights fold the kw taps and the W-direction zero padding,
        # so only static sublane slices of the H-padded scratch are needed.
        acc = jnp.zeros((H, W), jnp.float32)
        for kh in range(K):                   # static unroll: K = 7 dots
            lhs = maps_ref[ROW0 - PAD + kh:ROW0 - PAD + kh + H, :]
            acc = acc + jnp.dot(lhs, wb_ref[kh],
                                preferred_element_type=jnp.float32,
                                precision=jax.lax.Precision.HIGHEST)

        o_ref[b, 0] = jax.nn.sigmoid(acc).astype(o_ref.dtype)   # EUP slot, ~free


def _banded_weights(conv_weight, W):
    """Fold the kw taps + W-direction zero padding into fused banded matrices:
    band[kh, ch*W + i, j] = weight[ch, kh, i - j + PAD] if |i - j| <= PAD else 0,
    so avg occupies contraction rows [0, W) and max rows [W, 2W)."""
    w = conv_weight.reshape(2, K, K).astype(jnp.float32)          # (ch, kh, kw)
    i = jnp.arange(W)[:, None]
    j = jnp.arange(W)[None, :]
    d = i - j + PAD
    valid = (d >= 0) & (d < K)
    band = jnp.where(valid[None, None], w[:, :, jnp.clip(d, 0, K - 1)], 0.0)
    return band.transpose(1, 0, 2, 3).reshape(K, 2 * W, W)        # (K, 2W, W)


def _round_up(v, m):
    return (v + m - 1) // m * m


def _pick_batch_tile(N, C, HW, itemsize):
    """Batch elements per grid step: amortize the ~0.35us/step overhead on tiny
    maps while keeping double-buffered blocks modest and static unroll bounded."""
    per_image = C * _round_up(HW, 128) * itemsize
    target = 256 << 10                       # block size that amortizes overhead
    budget = 8 << 20                         # per input buffer (double-buffered)
    best = 1
    for bt in range(1, min(N, 8) + 1):       # cap the in-kernel static unroll
        if N % bt:
            continue
        if bt * per_image > budget:
            break
        best = bt
        if bt * per_image >= target:
            break
    return best


def _vmem_limit_bytes(Bt, C, H, W, x_itemsize):
    """Generation-aware VMEM plan: estimate the (double-buffered) tiles and fail
    loudly if they cannot fit this device's VMEM, instead of silently clamping."""
    HW = H * W
    lane = lambda n: _round_up(n, 128)
    sub = lambda n: _round_up(n, 8)
    x_blk = Bt * sub(C) * lane(HW) * x_itemsize
    o_blk = Bt * sub(H) * lane(W) * x_itemsize
    band = K * sub(2 * W) * lane(W) * 4
    scratch = sub(H + 16) * lane(2 * W) * 4
    est = 2 * (x_blk + o_blk + band) + scratch      # pipeline double-buffering
    est = int(est * 1.4) + (2 << 20)                # temporaries / compiler scratch
    try:
        capacity = int(pltpu.get_tpu_info().vmem_capacity_bytes)  # 64 MiB v7x, 128 v5e/v6e
    except Exception:
        capacity = 64 << 20                         # conservative fallback: v7x
    cap = capacity - (8 << 20)                      # runtime headroom
    if est > cap:
        # TODO(synk): add an inner "arbitrary" C-tile grid axis (running sum/max
        # in scratch with pl.when init/finalize) for very large C*H*W blocks.
        raise ValueError(
            f"SpatialAttention block plan needs ~{est >> 20} MiB VMEM but only "
            f"~{cap >> 20} MiB is available on this TPU; reduce the batch tile "
            f"or add channel tiling.")
    return min(max(est, 32 << 20), cap)


def spatial_attention(x, conv_weight):
    """x: (N, C, H, W).  conv_weight: (1, 2, K, K), no bias.
    Returns sigmoid(conv2d(concat([mean_c(x), max_c(x)], 1))): (N, 1, H, W)."""
    N, C, H, W = x.shape
    HW = H * W
    if W > 256:
        # TODO(synk): tile W (per-tile bands of (Wt+2*PAD, Wt)) or fall back to
        # shifted-slice accumulation; the O(W^2) band is only sized for W <= 256.
        raise NotImplementedError("banded-conv path is sized for W <= 256")

    x_flat = x.reshape(N, C, HW)              # free metadata reshape for NCHW
    wband = _banded_weights(conv_weight, W)   # (K, 2W, W) — tiny, VMEM-resident
    Bt = _pick_batch_tile(N, C, HW, x.dtype.itemsize)

    return pl.pallas_call(
        _spatial_attention_kernel,
        out_shape=jax.ShapeDtypeStruct((N, 1, H, W), x.dtype),
        grid_spec=pltpu.PrefetchScalarGridSpec(
            num_scalar_prefetch=0,
            grid=(N // Bt,),
            in_specs=[
                # Banded weights: constant index_map -> fetched once, resident.
                pl.BlockSpec((K, 2 * W, W), lambda n: (0, 0, 0)),
                # Lane-dense input block: Bt batch elements, full (C, H*W).
                pl.BlockSpec((Bt, C, HW), lambda n: (n, 0, 0)),
            ],
            out_specs=pl.BlockSpec((Bt, 1, H, W), lambda n: (n, 0, 0, 0)),
            scratch_shapes=[pltpu.VMEM((H + 16, 2 * W), jnp.float32)],
        ),
        compiler_params=pltpu.CompilerParams(
            dimension_semantics=("parallel",),     # batch tiles shard across TCs
            vmem_limit_bytes=_vmem_limit_bytes(Bt, C, H, W, x.dtype.itemsize),
        ),
    )(wband, x_flat)


def _reference(x, conv_weight):
    """Pure-JAX reference matching the PyTorch forward."""
    avg = jnp.mean(x, axis=1, keepdims=True)
    mx = jnp.max(x, axis=1, keepdims=True)
    cat = jnp.concatenate([avg, mx], axis=1)
    out = jax.lax.conv_general_dilated(
        cat, conv_weight, window_strides=(1, 1),
        padding=((PAD, PAD), (PAD, PAD)),
        dimension_numbers=("NCHW", "OIHW", "NCHW"),
        precision=jax.lax.Precision.HIGHEST)
    return jax.nn.sigmoid(out)


if __name__ == "__main__":
    key = jax.random.PRNGKey(0)
    kx, kw = jax.random.split(key)

    N, C, H, W = 2, 4, 16, 16
    x = jax.random.normal(kx, (N, C, H, W), dtype=jnp.float32)
    # Deterministic synthetic conv weight, shape (out=1, in=2, K, K), no bias.
    conv_w = 0.1 * jax.random.normal(kw, (1, 2, K, K), dtype=jnp.float32)

    out = spatial_attention(x, conv_w)
    out = jax.block_until_ready(out)

    ref = _reference(x, conv_w)
    assert out.shape == (N, 1, H, W)
    assert jnp.allclose(out, ref, atol=1e-4, rtol=1e-4), "mismatch vs reference"

    print("KERNEL_OK")
</pallas_src>

<mosaic_0001>
module attributes {stable_mosaic.version = 11 : i64} {
  func.func @_spatial_attention_kernel(%arg0: i32, %arg1: memref<7x32x16xf32, #tpu.memory_space<vmem>>, %arg2: memref<2x4x256xf32, #tpu.memory_space<vmem>>, %arg3: memref<2x1x16x16xf32, #tpu.memory_space<vmem>>, %arg4: memref<32x32xf32, #tpu.memory_space<vmem>>) attributes {dimension_semantics = [#tpu.dimension_semantics<parallel>], iteration_bounds = array<i64: 1>, scalar_prefetch = 0 : i64, scratch_operands = 1 : i64, tpu.core_type = #tpu.core_type<tc>, window_params = [{pipeline_mode = #tpu.pipeline_mode<synchronous>, transform_indices = @transform_0, window_bounds = array<i64: 7, 32, 16>}, {transform_indices = @transform_1, window_bounds = array<i64: 2, 4, 256>}, {transform_indices = @transform_2, window_bounds = array<i64: 2, 1, 16, 16>}]} {
    %cst = arith.constant 0.000000e+00 : f32
    %0 = vector.broadcast %cst : f32 to vector<3x32xf32>
    %c5 = arith.constant 5 : index
    %c0 = arith.constant 0 : index
    %1 = vector.load %arg4[%c5, %c0] : memref<32x32xf32, #tpu.memory_space<vmem>>, vector<3x32xf32>
    tpu.vector_store %arg4[%c5, %c0], %0 {strides = array<i32>} : memref<32x32xf32, #tpu.memory_space<vmem>>, vector<3x32xf32>,
    %cst_0 = arith.constant 0.000000e+00 : f32
    %2 = vector.broadcast %cst_0 : f32 to vector<3x32xf32>
    %c24 = arith.constant 24 : index
    %c0_1 = arith.constant 0 : index
    %3 = vector.load %arg4[%c24, %c0_1] : memref<32x32xf32, #tpu.memory_space<vmem>>, vector<3x32xf32>
    tpu.vector_store %arg4[%c24, %c0_1], %2 {strides = array<i32>} : memref<32x32xf32, #tpu.memory_space<vmem>>, vector<3x32xf32>,
    %cst_2 = arith.constant 0.000000e+00 : f32
    %4 = vector.broadcast %cst_2 : f32 to vector<1x256xf32>
    %cst_3 = arith.constant 0xFF800000 : f32
    %5 = vector.broadcast %cst_3 : f32 to vector<1x256xf32>
    %c0_i32 = arith.constant 0 : i32
    %c0_i32_4 = arith.constant 0 : i32
    %c0_i32_5 = arith.constant 0 : i32
    %c0_i32_6 = arith.constant 0 : i32
    %6 = tpu.memref_slice %arg2[%c0_i32, %c0_i32_5, %c0_i32_6] : memref<2x4x256xf32, #tpu.memory_space<vmem>> -> memref<1x4x256xf32, #tpu.memory_space<vmem>>
    %7 = tpu.memref_squeeze %6 : memref<1x4x256xf32, #tpu.memory_space<vmem>> -> memref<4x256xf32, #tpu.memory_space<vmem>>
    %8 = arith.index_cast %c0_i32_4 : i32 to index
    %c0_7 = arith.constant 0 : index
    %9 = vector.load %7[%8, %c0_7] : memref<4x256xf32, #tpu.memory_space<vmem>>, vector<1x256xf32>
    %10 = arith.addf %4, %9 : vector<1x256xf32>
    %11 = arith.maximumf %5, %9 : vector<1x256xf32>
    %c1_i32 = arith.constant 1 : i32
    %c0_i32_8 = arith.constant 0 : i32
    %c0_i32_9 = arith.constant 0 : i32
    %12 = tpu.memref_slice %arg2[%c0_i32, %c0_i32_8, %c0_i32_9] : memref<2x4x256xf32, #tpu.memory_space<vmem>> -> memref<1x4x256xf32, #tpu.memory_space<vmem>>
    %13 = tpu.memref_squeeze %12 : memref<1x4x256xf32, #tpu.memory_space<vmem>> -> memref<4x256xf32, #tpu.memory_space<vmem>>
    %14 = arith.index_cast %c1_i32 : i32 to index
    %c0_10 = arith.constant 0 : index
    %15 = vector.load %13[%14, %c0_10] : memref<4x256xf32, #tpu.memory_space<vmem>>, vector<1x256xf32>
    %16 = arith.addf %10, %15 : vector<1x256xf32>
    %17 = arith.maximumf %11, %15 : vector<1x256xf32>
    %c2_i32 = arith.constant 2 : i32
    %c0_i32_11 = arith.constant 0 : i32
    %c0_i32_12 = arith.constant 0 : i32
    %18 = tpu.memref_slice %arg2[%c0_i32, %c0_i32_11, %c0_i32_12] : memref<2x4x256xf32, #tpu.memory_space<vmem>> -> memref<1x4x256xf32, #tpu.memory_space<vmem>>
    %19 = tpu.memref_squeeze %18 : memref<1x4x256xf32, #tpu.memory_space<vmem>> -> memref<4x256xf32, #tpu.memory_space<vmem>>
    %20 = arith.index_cast %c2_i32 : i32 to index
    %c0_13 = arith.constant 0 : index
    %21 = vector.load %19[%20, %c0_13] : memref<4x256xf32, #tpu.memory_space<vmem>>, vector<1x256xf32>
    %22 = arith.addf %16, %21 : vector<1x256xf32>
    %23 = arith.maximumf %17, %21 : vector<1x256xf32>
    %c3_i32 = arith.constant 3 : i32
    %c0_i32_14 = arith.constant 0 : i32
    %c0_i32_15 = arith.constant 0 : i32
    %24 = tpu.memref_slice %arg2[%c0_i32, %c0_i32_14, %c0_i32_15] : memref<2x4x256xf32, #tpu.memory_space<vmem>> -> memref<1x4x256xf32, #tpu.memory_space<vmem>>
    %25 = tpu.memref_squeeze %24 : memref<1x4x256xf32, #tpu.memory_space<vmem>> -> memref<4x256xf32, #tpu.memory_space<vmem>>
    %26 = arith.index_cast %c3_i32 : i32 to index
    %c0_16 = arith.constant 0 : index
    %27 = vector.load %25[%26, %c0_16] : memref<4x256xf32, #tpu.memory_space<vmem>>, vector<1x256xf32>
    %28 = arith.addf %22, %27 : vector<1x256xf32>
    %29 = arith.maximumf %23, %27 : vector<1x256xf32>
    %c4_i32 = arith.constant 4 : i32
    %cst_17 = arith.constant 2.500000e-01 : f32
    %30 = vector.broadcast %cst_17 : f32 to vector<1x256xf32>
    %31 = arith.mulf %28, %30 : vector<1x256xf32>
    %32 = vector.extract_strided_slice %31 {offsets = [0, 0], sizes = [1, 16], strides = [1, 1]} : vector<1x256xf32> to vector<1x16xf32>
    %33 = vector.extract_strided_slice %29 {offsets = [0, 0], sizes = [1, 16], strides = [1, 1]} : vector<1x256xf32> to vector<1x16xf32>
    %34 = tpu.concatenate %32, %33 in 1 : vector<1x16xf32>, vector<1x16xf32> -> vector<1x32xf32>
    %c8 = arith.constant 8 : index
    %c0_18 = arith.constant 0 : index
    %35 = vector.load %arg4[%c8, %c0_18] : memref<32x32xf32, #tpu.memory_space<vmem>>, vector<1x32xf32>
    tpu.vector_store %arg4[%c8, %c0_18], %34 {strides = array<i32>} : memref<32x32xf32, #tpu.memory_space<vmem>>, vector<1x32xf32>,
    %36 = vector.extract_strided_slice %31 {offsets = [0, 16], sizes = [1, 16], strides = [1, 1]} : vector<1x256xf32> to vector<1x16xf32>
    %37 = vector.extract_strided_slice %29 {offsets = [0, 16], sizes = [1, 16], strides = [1, 1]} : vector<1x256xf32> to vector<1x16xf32>
    %38 = tpu.concatenate %36, %37 in 1 : vector<1x16xf32>, vector<1x16xf32> -> vector<1x32xf32>
    %c9 = arith.constant 9 : index
    %c0_19 = arith.constant 0 : index
    %39 = vector.load %arg4[%c9, %c0_19] : memref<32x32xf32, #tpu.memory_space<vmem>>, vector<1x32xf32>
    tpu.vector_store %arg4[%c9, %c0_19], %38 {strides = array<i32>} : memref<32x32xf32, #tpu.memory_space<vmem>>, vector<1x32xf32>,
    %40 = vector.extract_strided_slice %31 {offsets = [0, 32], sizes = [1, 16], strides = [1, 1]} : vector<1x256xf32> to vector<1x16xf32>
    %41 = vector.extract_strided_slice %29 {offsets = [0, 32], sizes = [1, 16], strides = [1, 1]} : vector<1x256xf32> to vector<1x16xf32>
    %42 = tpu.concatenate %40, %41 in 1 : vector<1x16xf32>, vector<1x16xf32> -> vector<1x32xf32>
    %c10 = arith.constant 10 : index
    %c0_20 = arith.constant 0 : index
    %43 = vector.load %arg4[%c10, %c0_20] : memref<32x32xf32, #tpu.memory_space<vmem>>, vector<1x32xf32>
    tpu.vector_store %arg4[%c10, %c0_20], %42 {strides = array<i32>} : memref<32x32xf32, #tpu.memory_space<vmem>>, vector<1x32xf32>,
    %44 = vector.extract_strided_slice %31 {offsets = [0, 48], sizes = [1, 16], strides = [1, 1]} : vector<1x256xf32> to vector<1x16xf32>
    %45 = vector.extract_strided_slice %29 {offsets = [0, 48], sizes = [1, 16], strides = [1, 1]} : vector<1x256xf32> to vector<1x16xf32>
    %46 = tpu.concatenate %44, %45 in 1 : vector<1x16xf32>, vector<1x16xf32> -> vector<1x32xf32>
    %c11 = arith.constant 11 : index
    %c0_21 = arith.constant 0 : index
    %47 = vector.load %arg4[%c11, %c0_21] : memref<32x32xf32, #tpu.memory_space<vmem>>, vector<1x32xf32>
    tpu.vector_store %arg4[%c11, %c0_21], %46 {strides = array<i32>} : memref<32x32xf32, #tpu.memory_space<vmem>>, vector<1x32xf32>,
    %48 = vector.extract_strided_slice %31 {offsets = [0, 64], sizes = [1, 16], strides = [1, 1]} : vector<1x256xf32> to vector<1x16xf32>
    %49 = vector.extract_strided_slice %29 {offsets = [0, 64], sizes = [1, 16], strides = [1, 1]} : vector<1x256xf32> to vector<1x16xf32>
    %50 = tpu.concatenate %48, %49 in 1 : vector<1x16xf32>, vector<1x16xf32> -> vector<1x32xf32>
    %c12 = arith.constant 12 : index
    %c0_22 = arith.constant 0 : index
    %51 = vector.load %arg4[%c12, %c0_22] : memref<32x32xf32, #tpu.memory_space<vmem>>, vector<1x32xf32>
    tpu.vector_store %arg4[%c12, %c0_22], %50 {strides = array<i32>} : memref<32x32xf32, #tpu.memory_space<vmem>>, vector<1x32xf32>,
    %52 = vector.extract_strided_slice %31 {offsets = [0, 80], sizes = [1, 16], strides = [1, 1]} : vector<1x256xf32> to vector<1x16xf32>
    %53 = vector.extract_strided_slice %29 {offsets = [0, 80], sizes = [1, 16], strides = [1, 1]} : vector<1x256xf32> to vector<1x16xf32>
    %54 = tpu.concatenate %52, %53 in 1 : vector<1x16xf32>, vector<1x16xf32> -> vector<1x32xf32>
    %c13 = arith.constant 13 : index
    %c0_23 = arith.constant 0 : index
    %55 = vector.load %arg4[%c13, %c0_23] : memref<32x32xf32, #tpu.memory_space<vmem>>, vector<1x32xf32>
    tpu.vector_store %arg4[%c13, %c0_23], %54 {strides = array<i32>} : memref<32x32xf32, #tpu.memory_space<vmem>>, vector<1x32xf32>,
    %56 = vector.extract_strided_slice %31 {offsets = [0, 96], sizes = [1, 16], strides = [1, 1]} : vector<1x256xf32> to vector<1x16xf32>
    %57 = vector.extract_strided_slice %29 {offsets = [0, 96], sizes = [1, 16], strides = [1, 1]} : vector<1x256xf32> to vector<1x16xf32>
    %58 = tpu.concatenate %56, %57 in 1 : vector<1x16xf32>, vector<1x16xf32> -> vector<1x32xf32>
    %c14 = arith.constant 14 : index
    %c0_24 = arith.constant 0 : index
    %59 = vector.load %arg4[%c14, %c0_24] : memref<32x32xf32, #tpu.memory_space<vmem>>, vector<1x32xf32>
    tpu.vector_store %arg4[%c14, %c0_24], %58 {strides = array<i32>} : memref<32x32xf32, #tpu.memory_space<vmem>>, vector<1x32xf32>,
    %60 = vector.extract_strided_slice %31 {offsets = [0, 112], sizes = [1, 16], strides = [1, 1]} : vector<1x256xf32> to vector<1x16xf32>
    %61 = vector.extract_strided_slice %29 {offsets = [0, 112], sizes = [1, 16], strides = [1, 1]} : vector<1x256xf32> to vector<1x16xf32>
    %62 = tpu.concatenate %60, %61 in 1 : vector<1x16xf32>, vector<1x16xf32> -> vector<1x32xf32>
    %c15 = arith.constant 15 : index
    %c0_25 = arith.constant 0 : index
    %63 = vector.load %arg4[%c15, %c0_25] : memref<32x32xf32, #tpu.memory_space<vmem>>, vector<1x32xf32>
    tpu.vector_store %arg4[%c15, %c0_25], %62 {strides = array<i32>} : memref<32x32xf32, #tpu.memory_space<vmem>>, vector<1x32xf32>,
    %64 = vector.extract_strided_slice %31 {offsets = [0, 128], sizes = [1, 16], strides = [1, 1]} : vector<1x256xf32> to vector<1x16xf32>
    %65 = vector.extract_strided_slice %29 {offsets = [0, 128], sizes = [1, 16], strides = [1, 1]} : vector<1x256xf32> to vector<1x16xf32>
    %66 = tpu.concatenate %64, %65 in 1 : vector<1x16xf32>, vector<1x16xf32> -> vector<1x32xf32>
    %c16 = arith.constant 16 : index
    %c0_26 = arith.constant 0 : index
    %67 = vector.load %arg4[%c16, %c0_26] : memref<32x32xf32, #tpu.memory_space<vmem>>, vector<1x32xf32>
    tpu.vector_store %arg4[%c16, %c0_26], %66 {strides = array<i32>} : memref<32x32xf32, #tpu.memory_space<vmem>>, vector<1x32xf32>,
    %68 = vector.extract_strided_slice %31 {offsets = [0, 144], sizes = [1, 16], strides = [1, 1]} : vector<1x256xf32> to vector<1x16xf32>
    %69 = vector.extract_strided_slice %29 {offsets = [0, 144], sizes = [1, 16], strides = [1, 1]} : vector<1x256xf32> to vector<1x16xf32>
    %70 = tpu.concatenate %68, %69 in 1 : vector<1x16xf32>, vector<1x16xf32> -> vector<1x32xf32>
    %c17 = arith.constant 17 : index
    %c0_27 = arith.constant 0 : index
    %71 = vector.load %arg4[%c17, %c0_27] : memref<32x32xf32, #tpu.memory_space<vmem>>, vector<1x32xf32>
    tpu.vector_store %arg4[%c17, %c0_27], %70 {strides = array<i32>} : memref<32x32xf32, #tpu.memory_space<vmem>>, vector<1x32xf32>,
    %72 = vector.extract_strided_slice %31 {offsets = [0, 160], sizes = [1, 16], strides = [1, 1]} : vector<1x256xf32> to vector<1x16xf32>
    %73 = vector.extract_strided_slice %29 {offsets = [0, 160], sizes = [1, 16], strides = [1, 1]} : vector<1x256xf32> to vector<1x16xf32>
    %74 = tpu.concatenate %72, %73 in 1 : vector<1x16xf32>, vector<1x16xf32> -> vector<1x32xf32>
    %c18 = arith.constant 18 : index
    %c0_28 = arith.constant 0 : index
    %75 = vector.load %arg4[%c18, %c0_28] : memref<32x32xf32, #tpu.memory_space<vmem>>, vector<1x32xf32>
    tpu.vector_store %arg4[%c18, %c0_28], %74 {strides = array<i32>} : memref<32x32xf32, #tpu.memory_space<vmem>>, vector<1x32xf32>,
    %76 = vector.extract_strided_slice %31 {offsets = [0, 176], sizes = [1, 16], strides = [1, 1]} : vector<1x256xf32> to vector<1x16xf32>
    %77 = vector.extract_strided_slice %29 {offsets = [0, 176], sizes = [1, 16], strides = [1, 1]} : vector<1x256xf32> to vector<1x16xf32>
    %78 = tpu.concatenate %76, %77 in 1 : vector<1x16xf32>, vector<1x16xf32> -> vector<1x32xf32>
    %c19 = arith.constant 19 : index
    %c0_29 = arith.constant 0 : index
    %79 = vector.load %arg4[%c19, %c0_29] : memref<32x32xf32, #tpu.memory_space<vmem>>, vector<1x32xf32>
    tpu.vector_store %arg4[%c19, %c0_29], %78 {strides = array<i32>} : memref<32x32xf32, #tpu.memory_space<vmem>>, vector<1x32xf32>,
    %80 = vector.extract_strided_slice %31 {offsets = [0, 192], sizes = [1, 16], strides = [1, 1]} : vector<1x256xf32> to vector<1x16xf32>
    %81 = vector.extract_strided_slice %29 {offsets = [0, 192], sizes = [1, 16], strides = [1, 1]} : vector<1x256xf32> to vector<1x16xf32>
    %82 = tpu.concatenate %80, %81 in 1 : vector<1x16xf32>, vector<1x16xf32> -> vector<1x32xf32>
    %c20 = arith.constant 20 : index
    %c0_30 = arith.constant 0 : index
    %83 = vector.load %arg4[%c20, %c0_30] : memref<32x32xf32, #tpu.memory_space<vmem>>, vector<1x32xf32>
    tpu.vector_store %arg4[%c20, %c0_30], %82 {strides = array<i32>} : memref<32x32xf32, #tpu.memory_space<vmem>>, vector<1x32xf32>,
    %84 = vector.extract_strided_slice %31 {offsets = [0, 208], sizes = [1, 16], strides = [1, 1]} : vector<1x256xf32> to vector<1x16xf32>
    %85 = vector.extract_strided_slice %29 {offsets = [0, 208], sizes = [1, 16], strides = [1, 1]} : vector<1x256xf32> to vector<1x16xf32>
    %86 = tpu.concatenate %84, %85 in 1 : vector<1x16xf32>, vector<1x16xf32> -> vector<1x32xf32>
    %c21 = arith.constant 21 : index
    %c0_31 = arith.constant 0 : index
    %87 = vector.load %arg4[%c21, %c0_31] : memref<32x32xf32, #tpu.memory_space<vmem>>, vector<1x32xf32>
    tpu.vector_store %arg4[%c21, %c0_31], %86 {strides = array<i32>} : memref<32x32xf32, #tpu.memory_space<vmem>>, vector<1x32xf32>,
    %88 = vector.extract_strided_slice %31 {offsets = [0, 224], sizes = [1, 16], strides = [1, 1]} : vector<1x256xf32> to vector<1x16xf32>
    %89 = vector.extract_strided_slice %29 {offsets = [0, 224], sizes = [1, 16], strides = [1, 1]} : vector<1x256xf32> to vector<1x16xf32>
    %90 = tpu.concatenate %88, %89 in 1 : vector<1x16xf32>, vector<1x16xf32> -> vector<1x32xf32>
    %c22 = arith.constant 22 : index
    %c0_32 = arith.constant 0 : index
    %91 = vector.load %arg4[%c22, %c0_32] : memref<32x32xf32, #tpu.memory_space<vmem>>, vector<1x32xf32>
    tpu.vector_store %arg4[%c22, %c0_32], %90 {strides = array<i32>} : memref<32x32xf32, #tpu.memory_space<vmem>>, vector<1x32xf32>,
    %92 = vector.extract_strided_slice %31 {offsets = [0, 240], sizes = [1, 16], strides = [1, 1]} : vector<1x256xf32> to vector<1x16xf32>
    %93 = vector.extract_strided_slice %29 {offsets = [0, 240], sizes = [1, 16], strides = [1, 1]} : vector<1x256xf32> to vector<1x16xf32>
    %94 = tpu.concatenate %92, %93 in 1 : vector<1x16xf32>, vector<1x16xf32> -> vector<1x32xf32>
    %c23 = arith.constant 23 : index
    %c0_33 = arith.constant 0 : index
    %95 = vector.load %arg4[%c23, %c0_33] : memref<32x32xf32, #tpu.memory_space<vmem>>, vector<1x32xf32>
    tpu.vector_store %arg4[%c23, %c0_33], %94 {strides = array<i32>} : memref<32x32xf32, #tpu.memory_space<vmem>>, vector<1x32xf32>,
    %cst_34 = arith.constant 0.000000e+00 : f32
    %96 = vector.broadcast %cst_34 : f32 to vector<16x16xf32>
    %c5_35 = arith.constant 5 : index
    %c0_36 = arith.constant 0 : index
    %97 = vector.load %arg4[%c5_35, %c0_36] : memref<32x32xf32, #tpu.memory_space<vmem>>, vector<16x32xf32>
    %c0_37 = arith.constant 0 : index
    %c0_38 = arith.constant 0 : index
    %c0_39 = arith.constant 0 : index
    %98 = vector.load %arg1[%c0_37, %c0_38, %c0_39] : memref<7x32x16xf32, #tpu.memory_space<vmem>>, vector<1x32x16xf32>
    %99 = vector.shape_cast %98 : vector<1x32x16xf32> to vector<32x16xf32>
    %cst_40 = arith.constant dense<0.000000e+00> : vector<16x16xf32>
    %100 = tpu.matmul %97, %99, %cst_40 {dimension_numbers = #tpu.dot_dimension_numbers<[1], [0], [0], [1], [0, 0, 1, 1], [], []>, precision = #tpu.contract_precision<fp32>} : vector<16x32xf32>, vector<32x16xf32>, vector<16x16xf32> -> vector<16x16xf32>
    %101 = arith.addf %96, %100 : vector<16x16xf32>
    %c6 = arith.constant 6 : index
    %c0_41 = arith.constant 0 : index
    %102 = vector.load %arg4[%c6, %c0_41] : memref<32x32xf32, #tpu.memory_space<vmem>>, vector<16x32xf32>
    %c1 = arith.constant 1 : index
    %c0_42 = arith.constant 0 : index
    %c0_43 = arith.constant 0 : index
    %103 = vector.load %arg1[%c1, %c0_42, %c0_43] : memref<7x32x16xf32, #tpu.memory_space<vmem>>, vector<1x32x16xf32>
    %104 = vector.shape_cast %103 : vector<1x32x16xf32> to vector<32x16xf32>
    %cst_44 = arith.constant dense<0.000000e+00> : vector<16x16xf32>
    %105 = tpu.matmul %102, %104, %cst_44 {dimension_numbers = #tpu.dot_dimension_numbers<[1], [0], [0], [1], [0, 0, 1, 1], [], []>, precision = #tpu.contract_precision<fp32>} : vector<16x32xf32>, vector<32x16xf32>, vector<16x16xf32> -> vector<16x16xf32>
    %106 = arith.addf %101, %105 : vector<16x16xf32>
    %c7 = arith.constant 7 : index
    %c0_45 = arith.constant 0 : index
    %107 = vector.load %arg4[%c7, %c0_45] : memref<32x32xf32, #tpu.memory_space<vmem>>, vector<16x32xf32>
    %c2 = arith.constant 2 : index
    %c0_46 = arith.constant 0 : index
    %c0_47 = arith.constant 0 : index
    %108 = vector.load %arg1[%c2, %c0_46, %c0_47] : memref<7x32x16xf32, #tpu.memory_space<vmem>>, vector<1x32x16xf32>
    %109 = vector.shape_cast %108 : vector<1x32x16xf32> to vector<32x16xf32>
    %cst_48 = arith.constant dense<0.000000e+00> : vector<16x16xf32>
    %110 = tpu.matmul %107, %109, %cst_48 {dimension_numbers = #tpu.dot_dimension_numbers<[1], [0], [0], [1], [0, 0, 1, 1], [], []>, precision = #tpu.contract_precision<fp32>} : vector<16x32xf32>, vector<32x16xf32>, vector<16x16xf32> -> vector<16x16xf32>
    %111 = arith.addf %106, %110 : vector<16x16xf32>
    %c8_49 = arith.constant 8 : index
    %c0_50 = arith.constant 0 : index
    %112 = vector.load %arg4[%c8_49, %c0_50] : memref<32x32xf32, #tpu.memory_space<vmem>>, vector<16x32xf32>
    %c3 = arith.constant 3 : index
    %c0_51 = arith.constant 0 : index
    %c0_52 = arith.constant 0 : index
    %113 = vector.load %arg1[%c3, %c0_51, %c0_52] : memref<7x32x16xf32, #tpu.memory_space<vmem>>, vector<1x32x16xf32>
    %114 = vector.shape_cast %113 : vector<1x32x16xf32> to vector<32x16xf32>
    %cst_53 = arith.constant dense<0.000000e+00> : vector<16x16xf32>
    %115 = tpu.matmul %112, %114, %cst_53 {dimension_numbers = #tpu.dot_dimension_numbers<[1], [0], [0], [1], [0, 0, 1, 1], [], []>, precision = #tpu.contract_precision<fp32>} : vector<16x32xf32>, vector<32x16xf32>, vector<16x16xf32> -> vector<16x16xf32>
    %116 = arith.addf %111, %115 : vector<16x16xf32>
    %c9_54 = arith.constant 9 : index
    %c0_55 = arith.constant 0 : index
    %117 = vector.load %arg4[%c9_54, %c0_55] : memref<32x32xf32, #tpu.memory_space<vmem>>, vector<16x32xf32>
    %c4 = arith.constant 4 : index
    %c0_56 = arith.constant 0 : index
    %c0_57 = arith.constant 0 : index
    %118 = vector.load %arg1[%c4, %c0_56, %c0_57] : memref<7x32x16xf32, #tpu.memory_space<vmem>>, vector<1x32x16xf32>
    %119 = vector.shape_cast %118 : vector<1x32x16xf32> to vector<32x16xf32>
    %cst_58 = arith.constant dense<0.000000e+00> : vector<16x16xf32>
    %120 = tpu.matmul %117, %119, %cst_58 {dimension_numbers = #tpu.dot_dimension_numbers<[1], [0], [0], [1], [0, 0, 1, 1], [], []>, precision = #tpu.contract_precision<fp32>} : vector<16x32xf32>, vector<32x16xf32>, vector<16x16xf32> -> vector<16x16xf32>
    %121 = arith.addf %116, %120 : vector<16x16xf32>
    %c10_59 = arith.constant 10 : index
    %c0_60 = arith.constant 0 : index
    %122 = vector.load %arg4[%c10_59, %c0_60] : memref<32x32xf32, #tpu.memory_space<vmem>>, vector<16x32xf32>
    %c5_61 = arith.constant 5 : index
    %c0_62 = arith.constant 0 : index
    %c0_63 = arith.constant 0 : index
    %123 = vector.load %arg1[%c5_61, %c0_62, %c0_63] : memref<7x32x16xf32, #tpu.memory_space<vmem>>, vector<1x32x16xf32>
    %124 = vector.shape_cast %123 : vector<1x32x16xf32> to vector<32x16xf32>
    %cst_64 = arith.constant dense<0.000000e+00> : vector<16x16xf32>
    %125 = tpu.matmul %122, %124, %cst_64 {dimension_numbers = #tpu.dot_dimension_numbers<[1], [0], [0], [1], [0, 0, 1, 1], [], []>, precision = #tpu.contract_precision<fp32>} : vector<16x32xf32>, vector<32x16xf32>, vector<16x16xf32> -> vector<16x16xf32>
    %126 = arith.addf %121, %125 : vector<16x16xf32>
    %c11_65 = arith.constant 11 : index
    %c0_66 = arith.constant 0 : index
    %127 = vector.load %arg4[%c11_65, %c0_66] : memref<32x32xf32, #tpu.memory_space<vmem>>, vector<16x32xf32>
    %c6_67 = arith.constant 6 : index
    %c0_68 = arith.constant 0 : index
    %c0_69 = arith.constant 0 : index
    %128 = vector.load %arg1[%c6_67, %c0_68, %c0_69] : memref<7x32x16xf32, #tpu.memory_space<vmem>>, vector<1x32x16xf32>
    %129 = vector.shape_cast %128 : vector<1x32x16xf32> to vector<32x16xf32>
    %cst_70 = arith.constant dense<0.000000e+00> : vector<16x16xf32>
    %130 = tpu.matmul %127, %129, %cst_70 {dimension_numbers = #tpu.dot_dimension_numbers<[1], [0], [0], [1], [0, 0, 1, 1], [], []>, precision = #tpu.contract_precision<fp32>} : vector<16x32xf32>, vector<32x16xf32>, vector<16x16xf32> -> vector<16x16xf32>
    %131 = arith.addf %126, %130 : vector<16x16xf32>
    %132 = arith.negf %131 : vector<16x16xf32>
    %133 = math.exp %132 : vector<16x16xf32>
    %cst_71 = arith.constant 1.000000e+00 : f32
    %134 = vector.broadcast %cst_71 : f32 to vector<16x16xf32>
    %135 = arith.addf %134, %133 : vector<16x16xf32>
    %136 = arith.divf %134, %135 : vector<16x16xf32>
    %c0_72 = arith.constant 0 : index
    %c0_73 = arith.constant 0 : index
    %c0_74 = arith.constant 0 : index
    %c0_75 = arith.constant 0 : index
    %137 = vector.load %arg3[%c0_72, %c0_73, %c0_74, %c0_75] : memref<2x1x16x16xf32, #tpu.memory_space<vmem>>, vector<1x1x16x16xf32>
    %138 = vector.shape_cast %137 : vector<1x1x16x16xf32> to vector<16x16xf32>
    %139 = vector.shape_cast %136 : vector<16x16xf32> to vector<1x1x16x16xf32>
    tpu.vector_store %arg3[%c0_72, %c0_73, %c0_74, %c0_75], %139 {strides = array<i32>} : memref<2x1x16x16xf32, #tpu.memory_space<vmem>>, vector<1x1x16x16xf32>,
    %cst_76 = arith.constant 0.000000e+00 : f32
    %140 = vector.broadcast %cst_76 : f32 to vector<1x256xf32>
    %cst_77 = arith.constant 0xFF800000 : f32
    %141 = vector.broadcast %cst_77 : f32 to vector<1x256xf32>
    %c1_i32_78 = arith.constant 1 : i32
    %c0_i32_79 = arith.constant 0 : i32
    %c0_i32_80 = arith.constant 0 : i32
    %c0_i32_81 = arith.constant 0 : i32
    %142 = tpu.memref_slice %arg2[%c1_i32_78, %c0_i32_80, %c0_i32_81] : memref<2x4x256xf32, #tpu.memory_space<vmem>> -> memref<1x4x256xf32, #tpu.memory_space<vmem>>
    %143 = tpu.memref_squeeze %142 : memref<1x4x256xf32, #tpu.memory_space<vmem>> -> memref<4x256xf32, #tpu.memory_space<vmem>>
    %144 = arith.index_cast %c0_i32_79 : i32 to index
    %c0_82 = arith.constant 0 : index
    %145 = vector.load %143[%144, %c0_82] : memref<4x256xf32, #tpu.memory_space<vmem>>, vector<1x256xf32>
    %146 = arith.addf %140, %145 : vector<1x256xf32>
    %147 = arith.maximumf %141, %145 : vector<1x256xf32>
    %c1_i32_83 = arith.constant 1 : i32
    %c0_i32_84 = arith.constant 0 : i32
    %c0_i32_85 = arith.constant 0 : i32
    %148 = tpu.memref_slice %arg2[%c1_i32_78, %c0_i32_84, %c0_i32_85] : memref<2x4x256xf32, #tpu.memory_space<vmem>> -> memref<1x4x256xf32, #tpu.memory_space<vmem>>
    %149 = tpu.memref_squeeze %148 : memref<1x4x256xf32, #tpu.memory_space<vmem>> -> memref<4x256xf32, #tpu.memory_space<vmem>>
    %150 = arith.index_cast %c1_i32_83 : i32 to index
    %c0_86 = arith.constant 0 : index
    %151 = vector.load %149[%150, %c0_86] : memref<4x256xf32, #tpu.memory_space<vmem>>, vector<1x256xf32>
    %152 = arith.addf %146, %151 : vector<1x256xf32>
    %153 = arith.maximumf %147, %151 : vector<1x256xf32>
    %c2_i32_87 = arith.constant 2 : i32
    %c0_i32_88 = arith.constant 0 : i32
    %c0_i32_89 = arith.constant 0 : i32
    %154 = tpu.memref_slice %arg2[%c1_i32_78, %c0_i32_88, %c0_i32_89] : memref<2x4x256xf32, #tpu.memory_space<vmem>> -> memref<1x4x256xf32, #tpu.memory_space<vmem>>
    %155 = tpu.memref_squeeze %154 : memref<1x4x256xf32, #tpu.memory_space<vmem>> -> memref<4x256xf32, #tpu.memory_space<vmem>>
    %156 = arith.index_cast %c2_i32_87 : i32 to index
    %c0_90 = arith.constant 0 : index
    %157 = vector.load %155[%156, %c0_90] : memref<4x256xf32, #tpu.memory_space<vmem>>, vector<1x256xf32>
    %158 = arith.addf %152, %157 : vector<1x256xf32>
    %159 = arith.maximumf %153, %157 : vector<1x256xf32>
    %c3_i32_91 = arith.constant 3 : i32
    %c0_i32_92 = arith.constant 0 : i32
    %c0_i32_93 = arith.constant 0 : i32
    %160 = tpu.memref_slice %arg2[%c1_i32_78, %c0_i32_92, %c0_i32_93] : memref<2x4x256xf32, #tpu.memory_space<vmem>> -> memref<1x4x256xf32, #tpu.memory_space<vmem>>
    %161 = tpu.memref_squeeze %160 : memref<1x4x256xf32, #tpu.memory_space<vmem>> -> memref<4x256xf32, #tpu.memory_space<vmem>>
    %162 = arith.index_cast %c3_i32_91 : i32 to index
    %c0_94 = arith.constant 0 : index
    %163 = vector.load %161[%162, %c0_94] : memref<4x256xf32, #tpu.memory_space<vmem>>, vector<1x256xf32>
    %164 = arith.addf %158, %163 : vector<1x256xf32>
    %165 = arith.maximumf %159, %163 : vector<1x256xf32>
    %c4_i32_95 = arith.constant 4 : i32
    %cst_96 = arith.constant 2.500000e-01 : f32
    %166 = vector.broadcast %cst_96 : f32 to vector<1x256xf32>
    %167 = arith.mulf %164, %166 : vector<1x256xf32>
    %168 = vector.extract_strided_slice %167 {offsets = [0, 0], sizes = [1, 16], strides = [1, 1]} : vector<1x256xf32> to vector<1x16xf32>
    %169 = vector.extract_strided_slice %165 {offsets = [0, 0], sizes = [1, 16], strides = [1, 1]} : vector<1x256xf32> to vector<1x16xf32>
    %170 = tpu.concatenate %168, %169 in 1 : vector<1x16xf32>, vector<1x16xf32> -> vector<1x32xf32>
    %c8_97 = arith.constant 8 : index
    %c0_98 = arith.constant 0 : index
    %171 = vector.load %arg4[%c8_97, %c0_98] : memref<32x32xf32, #tpu.memory_space<vmem>>, vector<1x32xf32>
    tpu.vector_store %arg4[%c8_97, %c0_98], %170 {strides = array<i32>} : memref<32x32xf32, #tpu.memory_space<vmem>>, vector<1x32xf32>,
    %172 = vector.extract_strided_slice %167 {offsets = [0, 16], sizes = [1, 16], strides = [1, 1]} : vector<1x256xf32> to vector<1x16xf32>
    %173 = vector.extract_strided_slice %165 {offsets = [0, 16], sizes = [1, 16], strides = [1, 1]} : vector<1x256xf32> to vector<1x16xf32>
    %174 = tpu.concatenate %172, %173 in 1 : vector<1x16xf32>, vector<1x16xf32> -> vector<1x32xf32>
    %c9_99 = arith.constant 9 : index
    %c0_100 = arith.constant 0 : index
    %175 = vector.load %arg4[%c9_99, %c0_100] : memref<32x32xf32, #tpu.memory_space<vmem>>, vector<1x32xf32>
    tpu.vector_store %arg4[%c9_99, %c0_100], %174 {strides = array<i32>} : memref<32x32xf32, #tpu.memory_space<vmem>>, vector<1x32xf32>,
    %176 = vector.extract_strided_slice %167 {offsets = [0, 32], sizes = [1, 16], strides = [1, 1]} : vector<1x256xf32> to vector<1x16xf32>
    %177 = vector.extract_strided_slice %165 {offsets = [0, 32], sizes = [1, 16], strides = [1, 1]} : vector<1x256xf32> to vector<1x16xf32>
    %178 = tpu.concatenate %176, %177 in 1 : vector<1x16xf32>, vector<1x16xf32> -> vector<1x32xf32>
    %c10_101 = arith.constant 10 : index
    %c0_102 = arith.constant 0 : index
    %179 = vector.load %arg4[%c10_101, %c0_102] : memref<32x32xf32, #tpu.memory_space<vmem>>, vector<1x32xf32>
    tpu.vector_store %arg4[%c10_101, %c0_102], %178 {strides = array<i32>} : memref<32x32xf32, #tpu.memory_space<vmem>>, vector<1x32xf32>,
    %180 = vector.extract_strided_slice %167 {offsets = [0, 48], sizes = [1, 16], strides = [1, 1]} : vector<1x256xf32> to vector<1x16xf32>
    %181 = vector.extract_strided_slice %165 {offsets = [0, 48], sizes = [1, 16], strides = [1, 1]} : vector<1x256xf32> to vector<1x16xf32>
    %182 = tpu.concatenate %180, %181 in 1 : vector<1x16xf32>, vector<1x16xf32> -> vector<1x32xf32>
    %c11_103 = arith.constant 11 : index
    %c0_104 = arith.constant 0 : index
    %183 = vector.load %arg4[%c11_103, %c0_104] : memref<32x32xf32, #tpu.memory_space<vmem>>, vector<1x32xf32>
    tpu.vector_store %arg4[%c11_103, %c0_104], %182 {strides = array<i32>} : memref<32x32xf32, #tpu.memory_space<vmem>>, vector<1x32xf32>,
    %184 = vector.extract_strided_slice %167 {offsets = [0, 64], sizes = [1, 16], strides = [1, 1]} : vector<1x256xf32> to vector<1x16xf32>
    %185 = vector.extract_strided_slice %165 {offsets = [0, 64], sizes = [1, 16], strides = [1, 1]} : vector<1x256xf32> to vector<1x16xf32>
    %186 = tpu.concatenate %184, %185 in 1 : vector<1x16xf32>, vector<1x16xf32> -> vector<1x32xf32>
    %c12_105 = arith.constant 12 : index
    %c0_106 = arith.constant 0 : index
    %187 = vector.load %arg4[%c12_105, %c0_106] : memref<32x32xf32, #tpu.memory_space<vmem>>, vector<1x32xf32>
    tpu.vector_store %arg4[%c12_105, %c0_106], %186 {strides = array<i32>} : memref<32x32xf32, #tpu.memory_space<vmem>>, vector<1x32xf32>,
    %188 = vector.extract_strided_slice %167 {offsets = [0, 80], sizes = [1, 16], strides = [1, 1]} : vector<1x256xf32> to vector<1x16xf32>
    %189 = vector.extract_strided_slice %165 {offsets = [0, 80], sizes = [1, 16], strides = [1, 1]} : vector<1x256xf32> to vector<1x16xf32>
    %190 = tpu.concatenate %188, %189 in 1 : vector<1x16xf32>, vector<1x16xf32> -> vector<1x32xf32>
    %c13_107 = arith.constant 13 : index
    %c0_108 = arith.constant 0 : index
    %191 = vector.load %arg4[%c13_107, %c0_108] : memref<32x32xf32, #tpu.memory_space<vmem>>, vector<1x32xf32>
    tpu.vector_store %arg4[%c13_107, %c0_108], %190 {strides = array<i32>} : memref<32x32xf32, #tpu.memory_space<vmem>>, vector<1x32xf32>,
    %192 = vector.extract_strided_slice %167 {offsets = [0, 96], sizes = [1, 16], strides = [1, 1]} : vector<1x256xf32> to vector<1x16xf32>
    %193 = vector.extract_strided_slice %165 {offsets = [0, 96], sizes = [1, 16], strides = [1, 1]} : vector<1x256xf32> to vector<1x16xf32>
    %194 = tpu.concatenate %192, %193 in 1 : vector<1x16xf32>, vector<1x16xf32> -> vector<1x32xf32>
    %c14_109 = arith.constant 14 : index
    %c0_110 = arith.constant 0 : index
    %195 = vector.load %arg4[%c14_109, %c0_110] : memref<32x32xf32, #tpu.memory_space<vmem>>, vector<1x32xf32>
    tpu.vector_store %arg4[%c14_109, %c0_110], %194 {strides = array<i32>} : memref<32x32xf32, #tpu.memory_space<vmem>>, vector<1x32xf32>,
    %196 = vector.extract_strided_slice %167 {offsets = [0, 112], sizes = [1, 16], strides = [1, 1]} : vector<1x256xf32> to vector<1x16xf32>
    %197 = vector.extract_strided_slice %165 {offsets = [0, 112], sizes = [1, 16], strides = [1, 1]} : vector<1x256xf32> to vector<1x16xf32>
    %198 = tpu.concatenate %196, %197 in 1 : vector<1x16xf32>, vector<1x16xf32> -> vector<1x32xf32>
    %c15_111 = arith.constant 15 : index
    %c0_112 = arith.constant 0 : index
    %199 = vector.load %arg4[%c15_111, %c0_112] : memref<32x32xf32, #tpu.memory_space<vmem>>, vector<1x32xf32>
    tpu.vector_store %arg4[%c15_111, %c0_112], %198 {strides = array<i32>} : memref<32x32xf32, #tpu.memory_space<vmem>>, vector<1x32xf32>,
    %200 = vector.extract_strided_slice %167 {offsets = [0, 128], sizes = [1, 16], strides = [1, 1]} : vector<1x256xf32> to vector<1x16xf32>
    %201 = vector.extract_strided_slice %165 {offsets = [0, 128], sizes = [1, 16], strides = [1, 1]} : vector<1x256xf32> to vector<1x16xf32>
    %202 = tpu.concatenate %200, %201 in 1 : vector<1x16xf32>, vector<1x16xf32> -> vector<1x32xf32>
    %c16_113 = arith.constant 16 : index
    %c0_114 = arith.constant 0 : index
    %203 = vector.load %arg4[%c16_113, %c0_114] : memref<32x32xf32, #tpu.memory_space<vmem>>, vector<1x32xf32>
    tpu.vector_store %arg4[%c16_113, %c0_114], %202 {strides = array<i32>} : memref<32x32xf32, #tpu.memory_space<vmem>>, vector<1x32xf32>,
    %204 = vector.extract_strided_slice %167 {offsets = [0, 144], sizes = [1, 16], strides = [1, 1]} : vector<1x256xf32> to vector<1x16xf32>
    %205 = vector.extract_strided_slice %165 {offsets = [0, 144], sizes = [1, 16], strides = [1, 1]} : vector<1x256xf32> to vector<1x16xf32>
    %206 = tpu.concatenate %204, %205 in 1 : vector<1x16xf32>, vector<1x16xf32> -> vector<1x32xf32>
    %c17_115 = arith.constant 17 : index
    %c0_116 = arith.constant 0 : index
    %207 = vector.load %arg4[%c17_115, %c0_116] : memref<32x32xf32, #tpu.memory_space<vmem>>, vector<1x32xf32>
    tpu.vector_store %arg4[%c17_115, %c0_116], %206 {strides = array<i32>} : memref<32x32xf32, #tpu.memory_space<vmem>>, vector<1x32xf32>,
    %208 = vector.extract_strided_slice %167 {offsets = [0, 160], sizes = [1, 16], strides = [1, 1]} : vector<1x256xf32> to vector<1x16xf32>
    %209 = vector.extract_strided_slice %165 {offsets = [0, 160], sizes = [1, 16], strides = [1, 1]} : vector<1x256xf32> to vector<1x16xf32>
    %210 = tpu.concatenate %208, %209 in 1 : vector<1x16xf32>, vector<1x16xf32> -> vector<1x32xf32>
    %c18_117 = arith.constant 18 : index
    %c0_118 = arith.constant 0 : index
    %211 = vector.load %arg4[%c18_117, %c0_118] : memref<32x32xf32, #tpu.memory_space<vmem>>, vector<1x32xf32>
    tpu.vector_store %arg4[%c18_117, %c0_118], %210 {strides = array<i32>} : memref<32x32xf32, #tpu.memory_space<vmem>>, vector<1x32xf32>,
    %212 = vector.extract_strided_slice %167 {offsets = [0, 176], sizes = [1, 16], strides = [1, 1]} : vector<1x256xf32> to vector<1x16xf32>
    %213 = vector.extract_strided_slice %165 {offsets = [0, 176], sizes = [1, 16], strides = [1, 1]} : vector<1x256xf32> to vector<1x16xf32>
    %214 = tpu.concatenate %212, %213 in 1 : vector<1x16xf32>, vector<1x16xf32> -> vector<1x32xf32>
    %c19_119 = arith.constant 19 : index
    %c0_120 = arith.constant 0 : index
    %215 = vector.load %arg4[%c19_119, %c0_120] : memref<32x32xf32, #tpu.memory_space<vmem>>, vector<1x32xf32>
    tpu.vector_store %arg4[%c19_119, %c0_120], %214 {strides = array<i32>} : memref<32x32xf32, #tpu.memory_space<vmem>>, vector<1x32xf32>,
    %216 = vector.extract_strided_slice %167 {offsets = [0, 192], sizes = [1, 16], strides = [1, 1]} : vector<1x256xf32> to vector<1x16xf32>
    %217 = vector.extract_strided_slice %165 {offsets = [0, 192], sizes = [1, 16], strides = [1, 1]} : vector<1x256xf32> to vector<1x16xf32>
    %218 = tpu.concatenate %216, %217 in 1 : vector<1x16xf32>, vector<1x16xf32> -> vector<1x32xf32>
    %c20_121 = arith.constant 20 : index
    %c0_122 = arith.constant 0 : index
    %219 = vector.load %arg4[%c20_121, %c0_122] : memref<32x32xf32, #tpu.memory_space<vmem>>, vector<1x32xf32>
    tpu.vector_store %arg4[%c20_121, %c0_122], %218 {strides = array<i32>} : memref<32x32xf32, #tpu.memory_space<vmem>>, vector<1x32xf32>,
    %220 = vector.extract_strided_slice %167 {offsets = [0, 208], sizes = [1, 16], strides = [1, 1]} : vector<1x256xf32> to vector<1x16xf32>
    %221 = vector.extract_strided_slice %165 {offsets = [0, 208], sizes = [1, 16], strides = [1, 1]} : vector<1x256xf32> to vector<1x16xf32>
    %222 = tpu.concatenate %220, %221 in 1 : vector<1x16xf32>, vector<1x16xf32> -> vector<1x32xf32>
    %c21_123 = arith.constant 21 : index
    %c0_124 = arith.constant 0 : index
    %223 = vector.load %arg4[%c21_123, %c0_124] : memref<32x32xf32, #tpu.memory_space<vmem>>, vector<1x32xf32>
    tpu.vector_store %arg4[%c21_123, %c0_124], %222 {strides = array<i32>} : memref<32x32xf32, #tpu.memory_space<vmem>>, vector<1x32xf32>,
    %224 = vector.extract_strided_slice %167 {offsets = [0, 224], sizes = [1, 16], strides = [1, 1]} : vector<1x256xf32> to vector<1x16xf32>
    %225 = vector.extract_strided_slice %165 {offsets = [0, 224], sizes = [1, 16], strides = [1, 1]} : vector<1x256xf32> to vector<1x16xf32>
    %226 = tpu.concatenate %224, %225 in 1 : vector<1x16xf32>, vector<1x16xf32> -> vector<1x32xf32>
    %c22_125 = arith.constant 22 : index
    %c0_126 = arith.constant 0 : index
    %227 = vector.load %arg4[%c22_125, %c0_126] : memref<32x32xf32, #tpu.memory_space<vmem>>, vector<1x32xf32>
    tpu.vector_store %arg4[%c22_125, %c0_126], %226 {strides = array<i32>} : memref<32x32xf32, #tpu.memory_space<vmem>>, vector<1x32xf32>,
    %228 = vector.extract_strided_slice %167 {offsets = [0, 240], sizes = [1, 16], strides = [1, 1]} : vector<1x256xf32> to vector<1x16xf32>
    %229 = vector.extract_strided_slice %165 {offsets = [0, 240], sizes = [1, 16], strides = [1, 1]} : vector<1x256xf32> to vector<1x16xf32>
    %230 = tpu.concatenate %228, %229 in 1 : vector<1x16xf32>, vector<1x16xf32> -> vector<1x32xf32>
    %c23_127 = arith.constant 23 : index
    %c0_128 = arith.constant 0 : index
    %231 = vector.load %arg4[%c23_127, %c0_128] : memref<32x32xf32, #tpu.memory_space<vmem>>, vector<1x32xf32>
    tpu.vector_store %arg4[%c23_127, %c0_128], %230 {strides = array<i32>} : memref<32x32xf32, #tpu.memory_space<vmem>>, vector<1x32xf32>,
    %cst_129 = arith.constant 0.000000e+00 : f32
    %232 = vector.broadcast %cst_129 : f32 to vector<16x16xf32>
    %c5_130 = arith.constant 5 : index
    %c0_131 = arith.constant 0 : index
    %233 = vector.load %arg4[%c5_130, %c0_131] : memref<32x32xf32, #tpu.memory_space<vmem>>, vector<16x32xf32>
    %c0_132 = arith.constant 0 : index
    %c0_133 = arith.constant 0 : index
    %c0_134 = arith.constant 0 : index
    %234 = vector.load %arg1[%c0_132, %c0_133, %c0_134] : memref<7x32x16xf32, #tpu.memory_space<vmem>>, vector<1x32x16xf32>
    %235 = vector.shape_cast %234 : vector<1x32x16xf32> to vector<32x16xf32>
    %cst_135 = arith.constant dense<0.000000e+00> : vector<16x16xf32>
    %236 = tpu.matmul %233, %235, %cst_135 {dimension_numbers = #tpu.dot_dimension_numbers<[1], [0], [0], [1], [0, 0, 1, 1], [], []>, precision = #tpu.contract_precision<fp32>} : vector<16x32xf32>, vector<32x16xf32>, vector<16x16xf32> -> vector<16x16xf32>
    %237 = arith.addf %232, %236 : vector<16x16xf32>
    %c6_136 = arith.constant 6 : index
    %c0_137 = arith.constant 0 : index
    %238 = vector.load %arg4[%c6_136, %c0_137] : memref<32x32xf32, #tpu.memory_space<vmem>>, vector<16x32xf32>
    %c1_138 = arith.constant 1 : index
    %c0_139 = arith.constant 0 : index
    %c0_140 = arith.constant 0 : index
    %239 = vector.load %arg1[%c1_138, %c0_139, %c0_140] : memref<7x32x16xf32, #tpu.memory_space<vmem>>, vector<1x32x16xf32>
    %240 = vector.shape_cast %239 : vector<1x32x16xf32> to vector<32x16xf32>
    %cst_141 = arith.constant dense<0.000000e+00> : vector<16x16xf32>
    %241 = tpu.matmul %238, %240, %cst_141 {dimension_numbers = #tpu.dot_dimension_numbers<[1], [0], [0], [1], [0, 0, 1, 1], [], []>, precision = #tpu.contract_precision<fp32>} : vector<16x32xf32>, vector<32x16xf32>, vector<16x16xf32> -> vector<16x16xf32>
    %242 = arith.addf %237, %241 : vector<16x16xf32>
    %c7_142 = arith.constant 7 : index
    %c0_143 = arith.constant 0 : index
    %243 = vector.load %arg4[%c7_142, %c0_143] : memref<32x32xf32, #tpu.memory_space<vmem>>, vector<16x32xf32>
    %c2_144 = arith.constant 2 : index
    %c0_145 = arith.constant 0 : index
    %c0_146 = arith.constant 0 : index
    %244 = vector.load %arg1[%c2_144, %c0_145, %c0_146] : memref<7x32x16xf32, #tpu.memory_space<vmem>>, vector<1x32x16xf32>
    %245 = vector.shape_cast %244 : vector<1x32x16xf32> to vector<32x16xf32>
    %cst_147 = arith.constant dense<0.000000e+00> : vector<16x16xf32>
    %246 = tpu.matmul %243, %245, %cst_147 {dimension_numbers = #tpu.dot_dimension_numbers<[1], [0], [0], [1], [0, 0, 1, 1], [], []>, precision = #tpu.contract_precision<fp32>} : vector<16x32xf32>, vector<32x16xf32>, vector<16x16xf32> -> vector<16x16xf32>
    %247 = arith.addf %242, %246 : vector<16x16xf32>
    %c8_148 = arith.constant 8 : index
    %c0_149 = arith.constant 0 : index
    %248 = vector.load %arg4[%c8_148, %c0_149] : memref<32x32xf32, #tpu.memory_space<vmem>>, vector<16x32xf32>
    %c3_150 = arith.constant 3 : index
    %c0_151 = arith.constant 0 : index
    %c0_152 = arith.constant 0 : index
    %249 = vector.load %arg1[%c3_150, %c0_151, %c0_152] : memref<7x32x16xf32, #tpu.memory_space<vmem>>, vector<1x32x16xf32>
    %250 = vector.shape_cast %249 : vector<1x32x16xf32> to vector<32x16xf32>
    %cst_153 = arith.constant dense<0.000000e+00> : vector<16x16xf32>
    %251 = tpu.matmul %248, %250, %cst_153 {dimension_numbers = #tpu.dot_dimension_numbers<[1], [0], [0], [1], [0, 0, 1, 1], [], []>, precision = #tpu.contract_precision<fp32>} : vector<16x32xf32>, vector<32x16xf32>, vector<16x16xf32> -> vector<16x16xf32>
    %252 = arith.addf %247, %251 : vector<16x16xf32>
    %c9_154 = arith.constant 9 : index
    %c0_155 = arith.constant 0 : index
    %253 = vector.load %arg4[%c9_154, %c0_155] : memref<32x32xf32, #tpu.memory_space<vmem>>, vector<16x32xf32>
    %c4_156 = arith.constant 4 : index
    %c0_157 = arith.constant 0 : index
    %c0_158 = arith.constant 0 : index
    %254 = vector.load %arg1[%c4_156, %c0_157, %c0_158] : memref<7x32x16xf32, #tpu.memory_space<vmem>>, vector<1x32x16xf32>
    %255 = vector.shape_cast %254 : vector<1x32x16xf32> to vector<32x16xf32>
    %cst_159 = arith.constant dense<0.000000e+00> : vector<16x16xf32>
    %256 = tpu.matmul %253, %255, %cst_159 {dimension_numbers = #tpu.dot_dimension_numbers<[1], [0], [0], [1], [0, 0, 1, 1], [], []>, precision = #tpu.contract_precision<fp32>} : vector<16x32xf32>, vector<32x16xf32>, vector<16x16xf32> -> vector<16x16xf32>
    %257 = arith.addf %252, %256 : vector<16x16xf32>
    %c10_160 = arith.constant 10 : index
    %c0_161 = arith.constant 0 : index
    %258 = vector.load %arg4[%c10_160, %c0_161] : memref<32x32xf32, #tpu.memory_space<vmem>>, vector<16x32xf32>
    %c5_162 = arith.constant 5 : index
    %c0_163 = arith.constant 0 : index
    %c0_164 = arith.constant 0 : index
    %259 = vector.load %arg1[%c5_162, %c0_163, %c0_164] : memref<7x32x16xf32, #tpu.memory_space<vmem>>, vector<1x32x16xf32>
    %260 = vector.shape_cast %259 : vector<1x32x16xf32> to vector<32x16xf32>
    %cst_165 = arith.constant dense<0.000000e+00> : vector<16x16xf32>
    %261 = tpu.matmul %258, %260, %cst_165 {dimension_numbers = #tpu.dot_dimension_numbers<[1], [0], [0], [1], [0, 0, 1, 1], [], []>, precision = #tpu.contract_precision<fp32>} : vector<16x32xf32>, vector<32x16xf32>, vector<16x16xf32> -> vector<16x16xf32>
    %262 = arith.addf %257, %261 : vector<16x16xf32>
    %c11_166 = arith.constant 11 : index
    %c0_167 = arith.constant 0 : index
    %263 = vector.load %arg4[%c11_166, %c0_167] : memref<32x32xf32, #tpu.memory_space<vmem>>, vector<16x32xf32>
    %c6_168 = arith.constant 6 : index
    %c0_169 = arith.constant 0 : index
    %c0_170 = arith.constant 0 : index
    %264 = vector.load %arg1[%c6_168, %c0_169, %c0_170] : memref<7x32x16xf32, #tpu.memory_space<vmem>>, vector<1x32x16xf32>
    %265 = vector.shape_cast %264 : vector<1x32x16xf32> to vector<32x16xf32>
    %cst_171 = arith.constant dense<0.000000e+00> : vector<16x16xf32>
    %266 = tpu.matmul %263, %265, %cst_171 {dimension_numbers = #tpu.dot_dimension_numbers<[1], [0], [0], [1], [0, 0, 1, 1], [], []>, precision = #tpu.contract_precision<fp32>} : vector<16x32xf32>, vector<32x16xf32>, vector<16x16xf32> -> vector<16x16xf32>
    %267 = arith.addf %262, %266 : vector<16x16xf32>
    %268 = arith.negf %267 : vector<16x16xf32>
    %269 = math.exp %268 : vector<16x16xf32>
    %cst_172 = arith.constant 1.000000e+00 : f32
    %270 = vector.broadcast %cst_172 : f32 to vector<16x16xf32>
    %271 = arith.addf %270, %269 : vector<16x16xf32>
    %272 = arith.divf %270, %271 : vector<16x16xf32>
    %c1_173 = arith.constant 1 : index
    %c0_174 = arith.constant 0 : index
    %c0_175 = arith.constant 0 : index
    %c0_176 = arith.constant 0 : index
    %273 = vector.load %arg3[%c1_173, %c0_174, %c0_175, %c0_176] : memref<2x1x16x16xf32, #tpu.memory_space<vmem>>, vector<1x1x16x16xf32>
    %274 = vector.shape_cast %273 : vector<1x1x16x16xf32> to vector<16x16xf32>
    %275 = vector.shape_cast %272 : vector<16x16xf32> to vector<1x1x16x16xf32>
    tpu.vector_store %arg3[%c1_173, %c0_174, %c0_175, %c0_176], %275 {strides = array<i32>} : memref<2x1x16x16xf32, #tpu.memory_space<vmem>>, vector<1x1x16x16xf32>,
    return
  }
  func.func @transform_0(%arg0: i32) -> (i32, i32, i32) {
    %c0_i32 = arith.constant 0 : i32
    %c0_i32_0 = arith.constant 0 : i32
    %c0_i32_1 = arith.constant 0 : i32
    %c0_i32_2 = arith.constant 0 : i32
    return %c0_i32, %c0_i32_0, %c0_i32_1 : i32, i32, i32
  }
  func.func @transform_1(%arg0: i32) -> (i32, i32, i32) {
    %c0_i32 = arith.constant 0 : i32
    %c0_i32_0 = arith.constant 0 : i32
    %c0_i32_1 = arith.constant 0 : i32
    return %arg0, %c0_i32, %c0_i32_0 : i32, i32, i32
  }
  func.func @transform_2(%arg0: i32) -> (i32, i32, i32, i32) {
    %c0_i32 = arith.constant 0 : i32
    %c0_i32_0 = arith.constant 0 : i32
    %c0_i32_1 = arith.constant 0 : i32
    %c0_i32_2 = arith.constant 0 : i32
    return %arg0, %c0_i32, %c0_i32_0, %c0_i32_1 : i32, i32, i32, i32
  }
}

</mosaic_0001>

<llo_original>
// kernel: tpu_custom_call.1
$region0: #{tpu_custom_call.1}
  #allocation0 [shape = 'u32[]', space=smem, size = 0x4, offset = 0x4, fixed_abs, tag = 'smem constant byte address 0x4 - core index']
  #allocation1 [shape = 'u32[72,128]{1,0:T(1,128)}', space=vmem, size = 0x9000, scoped, tag = 'internal scratch']
  #allocation2 [shape = 'f32[32,32]{1,0:T(8,128)}', space=vmem, size = 0x4000, scoped, tag = 'scratch operand']
  %s0 = inlined_call_operand.vmem [shape: f32[7,32,16], index: 0, kind: input, shape index: {}]
  %s1 = inlined_call_operand.vmem [shape: f32[2,4,256], index: 1, kind: input, shape index: {}]
  %s2 = inlined_call_operand.hbm [shape: f32[2,1,16,16], index: 2, kind: output, shape index: {}]
  %s3 = sld [smem:[#allocation0]]
  $region18: #{tpu_custom_call.1} parent=0
    _
  %s5 = ssub.s32 1, %s3
  %s6 = scalar_select 0, %s5, %s3
  $region1: #{tpu_custom_call.1} parent=0
    #allocation3 [shape = 'u8[16384]{0}', space=vmem, size = 0x4000, scoped, tag = 'output window, operand 0, single buffered']
    #allocation4 [shape = 's32[1]{0}', space=sflag, size = 0x4, scoped, tag = 'scoped memory for tpu_custom_call.1']
    %7 = vsyncpa [#allocation4], 0
    // Predicated region
    $region2: #{tpu_custom_call.1} parent=1 // pred_check
      _
    $region3: #{tpu_custom_call.1} parent=1 // pred_check_branch
      %9 = sbr.rel (0) target = $region5
    $region4: #{tpu_custom_call.1} parent=1 // pred_region
      _
    $region5: #{tpu_custom_call.1} parent=1 // pred_fallthru
      _
    // Predicated region
    $region6: #{tpu_custom_call.1} parent=1 // pred_check
      _
    $region7: #{tpu_custom_call.1} parent=1 // pred_check_branch
      %11 = sbr.rel (0) target = $region9
    $region8: #{tpu_custom_call.1} parent=1 // pred_region
      _
    $region9: #{tpu_custom_call.1} parent=1 // pred_fallthru
      _
    %vm12 = vcmask 256000
    %13 = vst.msk [vmem:[#allocation2 + $0x5] sm:$0x7] %vm12, 0.0
    %14 = vst.msk [vmem:[#allocation2 + $0x18] sm:$0x7] %vm12, 0.0
    %v15 = vld [vmem:[%s1] ss:$4 sm:$0x3]
    %v16 = vadd.f32 %v15, 0.0
    %s17 = scalar_lea.vmem %s1, 1
    %v18 = vld [vmem:[%s17] ss:$4 sm:$0x3]
    %v19 = vadd.f32 %v16, %v18
    %v20 = vmax.f32 %v15, %v18
    %s21 = scalar_lea.vmem %s1, 2
    %v22 = vld [vmem:[%s21] ss:$4 sm:$0x3]
    %v23 = vadd.f32 %v19, %v22
    %v24 = vmax.f32 %v20, %v22
    %s25 = scalar_lea.vmem %s1, 3
    %v26 = vld [vmem:[%s25] ss:$4 sm:$0x3]
    %v27 = vadd.f32 %v23, %v26
    %v28 = vmax.f32 %v24, %v26
    %v29 = vmul.f32 %v27, 0.25
    %v31 = vperm.slane %v28, 0
    %32 = vrot.lane.b32.xlu0 %v31, 16
    %v33 = vpop.permute.xlu0 %32
    %vm35 = vcmask 130048
    %v36 = vsel %vm35, %v29, %v33
    %vm37 = vcmask 253952
    %38 = vst.msk [vmem:[#allocation2 + $0x8] sm:$0x1] %vm37, %v36
    %v40 = vperm.slane %v29, 0
    %41 = vrot.lane.b32.xlu0 %v40, 112
    %v42 = vpop.permute.xlu0 %41
    %v44 = vsel %vm35, %v42, %v28
    %45 = vst.msk [vmem:[#allocation2 + $0x9] sm:$0x1] %vm37, %v44
    %46 = vrot.lane.b32.xlu0 %v40, 96
    %v47 = vpop.permute.xlu0 %46
    %49 = vrot.lane.b32.xlu0 %v31, 112
    %v50 = vpop.permute.xlu0 %49
    %v52 = vsel %vm35, %v47, %v50
    %53 = vst.msk [vmem:[#allocation2 + $0xa] sm:$0x1] %vm37, %v52
    %54 = vrot.lane.b32.xlu0 %v40, 80
    %v55 = vpop.permute.xlu0 %54
    %57 = vrot.lane.b32.xlu0 %v31, 96
    %v58 = vpop.permute.xlu0 %57
    %v60 = vsel %vm35, %v55, %v58
    %61 = vst.msk [vmem:[#allocation2 + $0xb] sm:$0x1] %vm37, %v60
    %62 = vrot.lane.b32.xlu0 %v40, 64
    %v63 = vpop.permute.xlu0 %62
    %65 = vrot.lane.b32.xlu0 %v31, 80
    %v66 = vpop.permute.xlu0 %65
    %v68 = vsel %vm35, %v63, %v66
    %69 = vst.msk [vmem:[#allocation2 + $0xc] sm:$0x1] %vm37, %v68
    %70 = vrot.lane.b32.xlu0 %v40, 48
    %v71 = vpop.permute.xlu0 %70
    %73 = vrot.lane.b32.xlu0 %v31, 64
    %v74 = vpop.permute.xlu0 %73
    %v76 = vsel %vm35, %v71, %v74
    %77 = vst.msk [vmem:[#allocation2 + $0xd] sm:$0x1] %vm37, %v76
    %78 = vrot.lane.b32.xlu0 %v40, 32
    %v79 = vpop.permute.xlu0 %78
    %81 = vrot.lane.b32.xlu0 %v31, 48
    %v82 = vpop.permute.xlu0 %81
    %v84 = vsel %vm35, %v79, %v82
    %85 = vst.msk [vmem:[#allocation2 + $0xe] sm:$0x1] %vm37, %v84
    %86 = vrot.lane.b32.xlu0 %v40, 16
    %v87 = vpop.permute.xlu0 %86
    %89 = vrot.lane.b32.xlu0 %v31, 32
    %v90 = vpop.permute.xlu0 %89
    %v92 = vsel %vm35, %v87, %v90
    %93 = vst.msk [vmem:[#allocation2 + $0xf] sm:$0x1] %vm37, %v92
    %v94 = vperm.slane %v29, 1
    %v96 = vperm.slane %v28, 1
    %97 = vrot.lane.b32.xlu0 %v96, 16
    %v98 = vpop.permute.xlu0 %97
    %v100 = vsel %vm35, %v94, %v98
    %101 = vst.msk [vmem:[#allocation2 + $0x10] sm:$0x1] %vm37, %v100
    %102 = vrot.lane.b32.xlu0 %v94, 112
    %v103 = vpop.permute.xlu0 %102
    %v106 = vsel %vm35, %v103, %v96
    %107 = vst.msk [vmem:[#allocation2 + $0x11] sm:$0x1] %vm37, %v106
    %108 = vrot.lane.b32.xlu0 %v94, 96
    %v109 = vpop.permute.xlu0 %108
    %111 = vrot.lane.b32.xlu0 %v96, 112
    %v112 = vpop.permute.xlu0 %111
    %v114 = vsel %vm35, %v109, %v112
    %115 = vst.msk [vmem:[#allocation2 + $0x12] sm:$0x1] %vm37, %v114
    %116 = vrot.lane.b32.xlu0 %v94, 80
    %v117 = vpop.permute.xlu0 %116
    %119 = vrot.lane.b32.xlu0 %v96, 96
    %v120 = vpop.permute.xlu0 %119
    %v122 = vsel %vm35, %v117, %v120
    %123 = vst.msk [vmem:[#allocation2 + $0x13] sm:$0x1] %vm37, %v122
    %124 = vrot.lane.b32.xlu0 %v94, 64
    %v125 = vpop.permute.xlu0 %124
    %127 = vrot.lane.b32.xlu0 %v96, 80
    %v128 = vpop.permute.xlu0 %127
    %v130 = vsel %vm35, %v125, %v128
    %131 = vst.msk [vmem:[#allocation2 + $0x14] sm:$0x1] %vm37, %v130
    %132 = vrot.lane.b32.xlu0 %v94, 48
    %v133 = vpop.permute.xlu0 %132
    %135 = vrot.lane.b32.xlu0 %v96, 64
    %v136 = vpop.permute.xlu0 %135
    %v138 = vsel %vm35, %v133, %v136
    %139 = vst.msk [vmem:[#allocation2 + $0x15] sm:$0x1] %vm37, %v138
    %140 = vrot.lane.b32.xlu0 %v94, 32
    %v141 = vpop.permute.xlu0 %140
    %143 = vrot.lane.b32.xlu0 %v96, 48
    %v144 = vpop.permute.xlu0 %143
    %v146 = vsel %vm35, %v141, %v144
    %147 = vst.msk [vmem:[#allocation2 + $0x16] sm:$0x1] %vm37, %v146
    %148 = vrot.lane.b32.xlu0 %v94, 16
    %v149 = vpop.permute.xlu0 %148
    %151 = vrot.lane.b32.xlu0 %v96, 32
    %v152 = vpop.permute.xlu0 %151
    %v154 = vsel %vm35, %v149, %v152
    %155 = vst.msk [vmem:[#allocation2 + $0x17] sm:$0x1] %vm37, %v154
    %v156 = vld [vmem:[#allocation2 + $0x5] sm:$0xff]
    %v157 = vld [vmem:[#allocation2 + $0xd] sm:$0xff]
    %v158 = vld [vmem:[%s0] sm:$0xff]
    %v159 = vld [vmem:[%s0 + $0x8] sm:$0xff]
    %v160 = vld [vmem:[%s0 + $0x10] sm:$0xff]
    %v161 = vld [vmem:[%s0 + $0x18] sm:$0xff]
    %v162 = vld [vmem:[#allocation2 + $0x6] sm:$0xff]
    %v163 = vld [vmem:[#allocation2 + $0xe] sm:$0xff]
    %s164 = scalar_lea.vmem %s0, 32
    %v165 = vld [vmem:[%s164] sm:$0xff]
    %v166 = vld [vmem:[%s164 + $0x8] sm:$0xff]
    %v167 = vld [vmem:[%s164 + $0x10] sm:$0xff]
    %v168 = vld [vmem:[%s164 + $0x18] sm:$0xff]
    %vm169 = vcmask 261120
    %v171 = vsel %vm169, %v162, 0
    %v174 = vsel %vm169, %v163, 0
    %176 = vmatpush.msra.mxu0 0.0
    %177 = vmatpush.msra.mxu0 0.0
    %178 = vmatpush.msra.mxu0 0.0
    %179 = vmatpush.msra.mxu0 0.0
    %180 = vmatpush.msra.mxu0 0.0
    %181 = vmatpush.msra.mxu0 0.0
    %182 = vmatpush.msra.mxu0 0.0
    %183 = vmatpush.msra.mxu0 0.0
    %184 = vmatpush.msra.mxu0 0.0
    %185 = vmatpush.msra.mxu0 0.0
    %186 = vmatpush.msra.mxu0 0.0
    %187 = vmatpush.msra.mxu0 0.0
    %v188 = vand.u32 %v168, 4294901760
    %189 = vmatpush.msra.mxu0 %v188
    %v190 = vand.u32 %v167, 4294901760
    %191 = vmatpush.msra.mxu0 %v190
    %v192 = vand.u32 %v166, 4294901760
    %193 = vmatpush.msra.mxu0 %v192
    %v194 = vand.u32 %v165, 4294901760
    %195 = vmatpush.msra.mxu0 %v194
    %v196 = vand.u32 %v171, 4294901760
    %v197 = vsub.f32 %v171, %v196
    %v198 = vand.u32 %v197, 4294901760
    %v199 = vsub.f32 %v197, %v198
    %v200 = vand.u32 %v199, 4294901760
    %201 = vmatmul.f32.gmra.mxu0 %v200
    %v202 = vpop.f32.mrf.mxu0
    %v203 = vadd.f32 0.0, %v202
    %v204 = vand.u32 %v174, 4294901760
    %v205 = vsub.f32 %v174, %v204
    %v206 = vand.u32 %v205, 4294901760
    %v207 = vsub.f32 %v205, %v206
    %v208 = vand.u32 %v207, 4294901760
    %209 = vmatmul.f32.gmra.mxu0 %v208
    %v210 = vpop.f32.mrf.mxu0
    %v211 = vadd.f32 0.0, %v210
    %212 = vdwg.mxu0
    %213 = vmatpush.msra.mxu0 0.0
    %214 = vmatpush.msra.mxu0 0.0
    %215 = vmatpush.msra.mxu0 0.0
    %216 = vmatpush.msra.mxu0 0.0
    %217 = vmatpush.msra.mxu0 0.0
    %218 = vmatpush.msra.mxu0 0.0
    %219 = vmatpush.msra.mxu0 0.0
    %220 = vmatpush.msra.mxu0 0.0
    %221 = vmatpush.msra.mxu0 0.0
    %222 = vmatpush.msra.mxu0 0.0
    %223 = vmatpush.msra.mxu0 0.0
    %224 = vmatpush.msra.mxu0 0.0
    %v225 = vand.u32 %v168, 4294901760
    %v226 = vsub.f32 %v168, %v225
    %v227 = vand.u32 %v226, 4294901760
    %v228 = vsub.f32 %v226, %v227
    %v229 = vand.u32 %v228, 4294901760
    %230 = vmatpush.msra.mxu0 %v229
    %v231 = vand.u32 %v167, 4294901760
    %v232 = vsub.f32 %v167, %v231
    %v233 = vand.u32 %v232, 4294901760
    %v234 = vsub.f32 %v232, %v233
    %v235 = vand.u32 %v234, 4294901760
    %236 = vmatpush.msra.mxu0 %v235
    %v237 = vand.u32 %v166, 4294901760
    %v238 = vsub.f32 %v166, %v237
    %v239 = vand.u32 %v238, 4294901760
    %v240 = vsub.f32 %v238, %v239
    %v241 = vand.u32 %v240, 4294901760
    %242 = vmatpush.msra.mxu0 %v241
    %v243 = vand.u32 %v165, 4294901760
    %v244 = vsub.f32 %v165, %v243
    %v245 = vand.u32 %v244, 4294901760
    %v246 = vsub.f32 %v244, %v245
    %v247 = vand.u32 %v246, 4294901760
    %248 = vmatpush.msra.mxu0 %v247
    %v249 = vand.u32 %v171, 4294901760
    %250 = vmatmul.f32.gmra.mxu0 %v249
    %v251 = vpop.f32.mrf.mxu0
    %v252 = vadd.f32 %v203, %v251
    %v253 = vand.u32 %v174, 4294901760
    %254 = vmatmul.f32.gmra.mxu0 %v253
    %v255 = vpop.f32.mrf.mxu0
    %v256 = vadd.f32 %v211, %v255
    %257 = vdwg.mxu0
    %258 = vmatpush.msra.mxu0 0.0
    %259 = vmatpush.msra.mxu0 0.0
    %260 = vmatpush.msra.mxu0 0.0
    %261 = vmatpush.msra.mxu0 0.0
    %262 = vmatpush.msra.mxu0 0.0
    %263 = vmatpush.msra.mxu0 0.0
    %264 = vmatpush.msra.mxu0 0.0
    %265 = vmatpush.msra.mxu0 0.0
    %266 = vmatpush.msra.mxu0 0.0
    %267 = vmatpush.msra.mxu0 0.0
    %268 = vmatpush.msra.mxu0 0.0
    %269 = vmatpush.msra.mxu0 0.0
    %v270 = vand.u32 %v168, 4294901760
    %v271 = vsub.f32 %v168, %v270
    %272 = vmatpush.msra.mxu0 %v271
    %v273 = vand.u32 %v167, 4294901760
    %v274 = vsub.f32 %v167, %v273
    %275 = vmatpush.msra.mxu0 %v274
    %v276 = vand.u32 %v166, 4294901760
    %v277 = vsub.f32 %v166, %v276
    %278 = vmatpush.msra.mxu0 %v277
    %v279 = vand.u32 %v165, 4294901760
    %v280 = vsub.f32 %v165, %v279
    %281 = vmatpush.msra.mxu0 %v280
    %v282 = vand.u32 %v171, 4294901760
    %v283 = vsub.f32 %v171, %v282
    %284 = vmatmul.f32.gmra.mxu0 %v283
    %v285 = vpop.f32.mrf.mxu0
    %v286 = vadd.f32 %v252, %v285
    %v287 = vand.u32 %v174, 4294901760
    %v288 = vsub.f32 %v174, %v287
    %289 = vmatmul.f32.gmra.mxu0 %v288
    %v290 = vpop.f32.mrf.mxu0
    %v291 = vadd.f32 %v256, %v290
    %292 = vdwg.mxu0
    %293 = vmatpush.msra.mxu0 0.0
    %294 = vmatpush.msra.mxu0 0.0
    %295 = vmatpush.msra.mxu0 0.0
    %296 = vmatpush.msra.mxu0 0.0
    %297 = vmatpush.msra.mxu0 0.0
    %298 = vmatpush.msra.mxu0 0.0
    %299 = vmatpush.msra.mxu0 0.0
    %300 = vmatpush.msra.mxu0 0.0
    %301 = vmatpush.msra.mxu0 0.0
    %302 = vmatpush.msra.mxu0 0.0
    %303 = vmatpush.msra.mxu0 0.0
    %304 = vmatpush.msra.mxu0 0.0
    %v305 = vand.u32 %v168, 4294901760
    %306 = vmatpush.msra.mxu0 %v305
    %v307 = vand.u32 %v167, 4294901760
    %308 = vmatpush.msra.mxu0 %v307
    %v309 = vand.u32 %v166, 4294901760
    %310 = vmatpush.msra.mxu0 %v309
    %v311 = vand.u32 %v165, 4294901760
    %312 = vmatpush.msra.mxu0 %v311
    %v313 = vand.u32 %v171, 4294901760
    %v314 = vsub.f32 %v171, %v313
    %v315 = vand.u32 %v314, 4294901760
    %316 = vmatmul.f32.gmra.mxu0 %v315
    %v317 = vpop.f32.mrf.mxu0
    %v318 = vadd.f32 %v286, %v317
    %v319 = vand.u32 %v174, 4294901760
    %v320 = vsub.f32 %v174, %v319
    %v321 = vand.u32 %v320, 4294901760
    %322 = vmatmul.f32.gmra.mxu0 %v321
    %v323 = vpop.f32.mrf.mxu0
    %v324 = vadd.f32 %v291, %v323
    %325 = vdwg.mxu0
    %326 = vmatpush.msra.mxu0 0.0
    %327 = vmatpush.msra.mxu0 0.0
    %328 = vmatpush.msra.mxu0 0.0
    %329 = vmatpush.msra.mxu0 0.0
    %330 = vmatpush.msra.mxu0 0.0
    %331 = vmatpush.msra.mxu0 0.0
    %332 = vmatpush.msra.mxu0 0.0
    %333 = vmatpush.msra.mxu0 0.0
    %334 = vmatpush.msra.mxu0 0.0
    %335 = vmatpush.msra.mxu0 0.0
    %336 = vmatpush.msra.mxu0 0.0
    %337 = vmatpush.msra.mxu0 0.0
    %v338 = vand.u32 %v168, 4294901760
    %v339 = vsub.f32 %v168, %v338
    %v340 = vand.u32 %v339, 4294901760
    %341 = vmatpush.msra.mxu0 %v340
    %v342 = vand.u32 %v167, 4294901760
    %v343 = vsub.f32 %v167, %v342
    %v344 = vand.u32 %v343, 4294901760
    %345 = vmatpush.msra.mxu0 %v344
    %v346 = vand.u32 %v166, 4294901760
    %v347 = vsub.f32 %v166, %v346
    %v348 = vand.u32 %v347, 4294901760
    %349 = vmatpush.msra.mxu0 %v348
    %v350 = vand.u32 %v165, 4294901760
    %v351 = vsub.f32 %v165, %v350
    %v352 = vand.u32 %v351, 4294901760
    %353 = vmatpush.msra.mxu0 %v352
    %v354 = vand.u32 %v171, 4294901760
    %355 = vmatmul.f32.gmra.mxu0 %v354
    %v356 = vpop.f32.mrf.mxu0
    %v357 = vadd.f32 %v318, %v356
    %v358 = vand.u32 %v174, 4294901760
    %359 = vmatmul.f32.gmra.mxu0 %v358
    %v360 = vpop.f32.mrf.mxu0
    %v361 = vadd.f32 %v324, %v360
    %362 = vdwg.mxu0
    %363 = vmatpush.msra.mxu0 0.0
    %364 = vmatpush.msra.mxu0 0.0
    %365 = vmatpush.msra.mxu0 0.0
    %366 = vmatpush.msra.mxu0 0.0
    %367 = vmatpush.msra.mxu0 0.0
    %368 = vmatpush.msra.mxu0 0.0
    %369 = vmatpush.msra.mxu0 0.0
    %370 = vmatpush.msra.mxu0 0.0
    %371 = vmatpush.msra.mxu0 0.0
    %372 = vmatpush.msra.mxu0 0.0
    %373 = vmatpush.msra.mxu0 0.0
    %374 = vmatpush.msra.mxu0 0.0
    %v375 = vand.u32 %v168, 4294901760
    %376 = vmatpush.msra.mxu0 %v375
    %v377 = vand.u32 %v167, 4294901760
    %378 = vmatpush.msra.mxu0 %v377
    %v379 = vand.u32 %v166, 4294901760
    %380 = vmatpush.msra.mxu0 %v379
    %v381 = vand.u32 %v165, 4294901760
    %382 = vmatpush.msra.mxu0 %v381
    %v383 = vand.u32 %v171, 4294901760
    %384 = vmatmul.f32.gmra.mxu0 %v383
    %v385 = vpop.f32.mrf.mxu0
    %v386 = vadd.f32 %v357, %v385
    %v387 = vand.u32 %v174, 4294901760
    %388 = vmatmul.f32.gmra.mxu0 %v387
    %v389 = vpop.f32.mrf.mxu0
    %v390 = vadd.f32 %v361, %v389
    %391 = vdwg.mxu0
    %v393 = vsel %vm169, %v156, 0
    %v396 = vsel %vm169, %v157, 0
    %398 = vmatpush.msra.mxu0 0.0
    %399 = vmatpush.msra.mxu0 0.0
    %400 = vmatpush.msra.mxu0 0.0
    %401 = vmatpush.msra.mxu0 0.0
    %402 = vmatpush.msra.mxu0 0.0
    %403 = vmatpush.msra.mxu0 0.0
    %404 = vmatpush.msra.mxu0 0.0
    %405 = vmatpush.msra.mxu0 0.0
    %406 = vmatpush.msra.mxu0 0.0
    %407 = vmatpush.msra.mxu0 0.0
    %408 = vmatpush.msra.mxu0 0.0
    %409 = vmatpush.msra.mxu0 0.0
    %v410 = vand.u32 %v161, 4294901760
    %411 = vmatpush.msra.mxu0 %v410
    %v412 = vand.u32 %v160, 4294901760
    %413 = vmatpush.msra.mxu0 %v412
    %v414 = vand.u32 %v159, 4294901760
    %415 = vmatpush.msra.mxu0 %v414
    %v416 = vand.u32 %v158, 4294901760
    %417 = vmatpush.msra.mxu0 %v416
    %v418 = vand.u32 %v393, 4294901760
    %v419 = vsub.f32 %v393, %v418
    %v420 = vand.u32 %v419, 4294901760
    %v421 = vsub.f32 %v419, %v420
    %v422 = vand.u32 %v421, 4294901760
    %423 = vmatmul.f32.gmra.mxu0 %v422
    %v424 = vpop.f32.mrf.mxu0
    %v425 = vadd.f32 %v386, %v424
    %v426 = vand.u32 %v396, 4294901760
    %v427 = vsub.f32 %v396, %v426
    %v428 = vand.u32 %v427, 4294901760
    %v429 = vsub.f32 %v427, %v428
    %v430 = vand.u32 %v429, 4294901760
    %431 = vmatmul.f32.gmra.mxu0 %v430
    %v432 = vpop.f32.mrf.mxu0
    %v433 = vadd.f32 %v390, %v432
    %434 = vdwg.mxu0
    %435 = vmatpush.msra.mxu0 0.0
    %436 = vmatpush.msra.mxu0 0.0
    %437 = vmatpush.msra.mxu0 0.0
    %438 = vmatpush.msra.mxu0 0.0
    %439 = vmatpush.msra.mxu0 0.0
    %440 = vmatpush.msra.mxu0 0.0
    %441 = vmatpush.msra.mxu0 0.0
    %442 = vmatpush.msra.mxu0 0.0
    %443 = vmatpush.msra.mxu0 0.0
    %444 = vmatpush.msra.mxu0 0.0
    %445 = vmatpush.msra.mxu0 0.0
    %446 = vmatpush.msra.mxu0 0.0
    %v447 = vand.u32 %v161, 4294901760
    %v448 = vsub.f32 %v161, %v447
    %v449 = vand.u32 %v448, 4294901760
    %v450 = vsub.f32 %v448, %v449
    %v451 = vand.u32 %v450, 4294901760
    %452 = vmatpush.msra.mxu0 %v451
    %v453 = vand.u32 %v160, 4294901760
    %v454 = vsub.f32 %v160, %v453
    %v455 = vand.u32 %v454, 4294901760
    %v456 = vsub.f32 %v454, %v455
    %v457 = vand.u32 %v456, 4294901760
    %458 = vmatpush.msra.mxu0 %v457
    %v459 = vand.u32 %v159, 4294901760
    %v460 = vsub.f32 %v159, %v459
    %v461 = vand.u32 %v460, 4294901760
    %v462 = vsub.f32 %v460, %v461
    %v463 = vand.u32 %v462, 4294901760
    %464 = vmatpush.msra.mxu0 %v463
    %v465 = vand.u32 %v158, 4294901760
    %v466 = vsub.f32 %v158, %v465
    %v467 = vand.u32 %v466, 4294901760
    %v468 = vsub.f32 %v466, %v467
    %v469 = vand.u32 %v468, 4294901760
    %470 = vmatpush.msra.mxu0 %v469
    %v471 = vand.u32 %v393, 4294901760
    %472 = vmatmul.f32.gmra.mxu0 %v471
    %v473 = vpop.f32.mrf.mxu0
    %v474 = vadd.f32 %v425, %v473
    %v475 = vand.u32 %v396, 4294901760
    %476 = vmatmul.f32.gmra.mxu0 %v475
    %v477 = vpop.f32.mrf.mxu0
    %v478 = vadd.f32 %v433, %v477
    %479 = vdwg.mxu0
    %480 = vmatpush.msra.mxu0 0.0
    %481 = vmatpush.msra.mxu0 0.0
    %482 = vmatpush.msra.mxu0 0.0
    %483 = vmatpush.msra.mxu0 0.0
    %484 = vmatpush.msra.mxu0 0.0
    %485 = vmatpush.msra.mxu0 0.0
    %486 = vmatpush.msra.mxu0 0.0
    %487 = vmatpush.msra.mxu0 0.0
    %488 = vmatpush.msra.mxu0 0.0
    %489 = vmatpush.msra.mxu0 0.0
    %490 = vmatpush.msra.mxu0 0.0
    %491 = vmatpush.msra.mxu0 0.0
    %v492 = vand.u32 %v161, 4294901760
    %v493 = vsub.f32 %v161, %v492
    %494 = vmatpush.msra.mxu0 %v493
    %v495 = vand.u32 %v160, 4294901760
    %v496 = vsub.f32 %v160, %v495
    %497 = vmatpush.msra.mxu0 %v496
    %v498 = vand.u32 %v159, 4294901760
    %v499 = vsub.f32 %v159, %v498
    %500 = vmatpush.msra.mxu0 %v499
    %v501 = vand.u32 %v158, 4294901760
    %v502 = vsub.f32 %v158, %v501
    %503 = vmatpush.msra.mxu0 %v502
    %v504 = vand.u32 %v393, 4294901760
    %v505 = vsub.f32 %v393, %v504
    %506 = vmatmul.f32.gmra.mxu0 %v505
    %v507 = vpop.f32.mrf.mxu0
    %v508 = vadd.f32 %v474, %v507
    %v509 = vand.u32 %v396, 4294901760
    %v510 = vsub.f32 %v396, %v509
    %511 = vmatmul.f32.gmra.mxu0 %v510
    %v512 = vpop.f32.mrf.mxu0
    %v513 = vadd.f32 %v478, %v512
    %514 = vdwg.mxu0
    %515 = vmatpush.msra.mxu0 0.0
    %516 = vmatpush.msra.mxu0 0.0
    %517 = vmatpush.msra.mxu0 0.0
    %518 = vmatpush.msra.mxu0 0.0
    %519 = vmatpush.msra.mxu0 0.0
    %520 = vmatpush.msra.mxu0 0.0
    %521 = vmatpush.msra.mxu0 0.0
    %522 = vmatpush.msra.mxu0 0.0
    %523 = vmatpush.msra.mxu0 0.0
    %524 = vmatpush.msra.mxu0 0.0
    %525 = vmatpush.msra.mxu0 0.0
    %526 = vmatpush.msra.mxu0 0.0
    %v527 = vand.u32 %v161, 4294901760
    %528 = vmatpush.msra.mxu0 %v527
    %v529 = vand.u32 %v160, 4294901760
    %530 = vmatpush.msra.mxu0 %v529
    %v531 = vand.u32 %v159, 4294901760
    %532 = vmatpush.msra.mxu0 %v531
    %v533 = vand.u32 %v158, 4294901760
    %534 = vmatpush.msra.mxu0 %v533
    %v535 = vand.u32 %v393, 4294901760
    %v536 = vsub.f32 %v393, %v535
    %v537 = vand.u32 %v536, 4294901760
    %538 = vmatmul.f32.gmra.mxu0 %v537
    %v539 = vpop.f32.mrf.mxu0
    %v540 = vadd.f32 %v508, %v539
    %v541 = vand.u32 %v396, 4294901760
    %v542 = vsub.f32 %v396, %v541
    %v543 = vand.u32 %v542, 4294901760
    %544 = vmatmul.f32.gmra.mxu0 %v543
    %v545 = vpop.f32.mrf.mxu0
    %v546 = vadd.f32 %v513, %v545
    %547 = vdwg.mxu0
    %548 = vmatpush.msra.mxu0 0.0
    %549 = vmatpush.msra.mxu0 0.0
    %550 = vmatpush.msra.mxu0 0.0
    %551 = vmatpush.msra.mxu0 0.0
    %552 = vmatpush.msra.mxu0 0.0
    %553 = vmatpush.msra.mxu0 0.0
    %554 = vmatpush.msra.mxu0 0.0
    %555 = vmatpush.msra.mxu0 0.0
    %556 = vmatpush.msra.mxu0 0.0
    %557 = vmatpush.msra.mxu0 0.0
    %558 = vmatpush.msra.mxu0 0.0
    %559 = vmatpush.msra.mxu0 0.0
    %v560 = vand.u32 %v161, 4294901760
    %v561 = vsub.f32 %v161, %v560
    %v562 = vand.u32 %v561, 4294901760
    %563 = vmatpush.msra.mxu0 %v562
    %v564 = vand.u32 %v160, 4294901760
    %v565 = vsub.f32 %v160, %v564
    %v566 = vand.u32 %v565, 4294901760
    %567 = vmatpush.msra.mxu0 %v566
    %v568 = vand.u32 %v159, 4294901760
    %v569 = vsub.f32 %v159, %v568
    %v570 = vand.u32 %v569, 4294901760
    %571 = vmatpush.msra.mxu0 %v570
    %v572 = vand.u32 %v158, 4294901760
    %v573 = vsub.f32 %v158, %v572
    %v574 = vand.u32 %v573, 4294901760
    %575 = vmatpush.msra.mxu0 %v574
    %v576 = vand.u32 %v393, 4294901760
    %577 = vmatmul.f32.gmra.mxu0 %v576
    %v578 = vpop.f32.mrf.mxu0
    %v579 = vadd.f32 %v540, %v578
    %v580 = vand.u32 %v396, 4294901760
    %581 = vmatmul.f32.gmra.mxu0 %v580
    %v582 = vpop.f32.mrf.mxu0
    %v583 = vadd.f32 %v546, %v582
    %584 = vdwg.mxu0
    %585 = vmatpush.msra.mxu0 0.0
    %586 = vmatpush.msra.mxu0 0.0
    %587 = vmatpush.msra.mxu0 0.0
    %588 = vmatpush.msra.mxu0 0.0
    %589 = vmatpush.msra.mxu0 0.0
    %590 = vmatpush.msra.mxu0 0.0
    %591 = vmatpush.msra.mxu0 0.0
    %592 = vmatpush.msra.mxu0 0.0
    %593 = vmatpush.msra.mxu0 0.0
    %594 = vmatpush.msra.mxu0 0.0
    %595 = vmatpush.msra.mxu0 0.0
    %596 = vmatpush.msra.mxu0 0.0
    %v597 = vand.u32 %v161, 4294901760
    %598 = vmatpush.msra.mxu0 %v597
    %v599 = vand.u32 %v160, 4294901760
    %600 = vmatpush.msra.mxu0 %v599
    %v601 = vand.u32 %v159, 4294901760
    %602 = vmatpush.msra.mxu0 %v601
    %v603 = vand.u32 %v158, 4294901760
    %604 = vmatpush.msra.mxu0 %v603
    %v605 = vand.u32 %v393, 4294901760
    %606 = vmatmul.f32.gmra.mxu0 %v605
    %v607 = vpop.f32.mrf.mxu0
    %v608 = vadd.f32 %v579, %v607
    %v609 = vand.u32 %v396, 4294901760
    %610 = vmatmul.f32.gmra.mxu0 %v609
    %v611 = vpop.f32.mrf.mxu0
    %v612 = vadd.f32 %v583, %v611
    %613 = vdwg.mxu0
    %v614 = vld [vmem:[#allocation2 + $0x7] sm:$0xff]
    %v615 = vld [vmem:[#allocation2 + $0xf] sm:$0xff]
    %s616 = scalar_lea.vmem %s0, 64
    %v617 = vld [vmem:[%s616] sm:$0xff]
    %v618 = vld [vmem:[%s616 + $0x8] sm:$0xff]
    %v619 = vld [vmem:[%s616 + $0x10] sm:$0xff]
    %v620 = vld [vmem:[%s616 + $0x18] sm:$0xff]
    %v622 = vsel %vm169, %v614, 0
    %v625 = vsel %vm169, %v615, 0
    %627 = vmatpush.msra.mxu0 0.0
    %628 = vmatpush.msra.mxu0 0.0
    %629 = vmatpush.msra.mxu0 0.0
    %630 = vmatpush.msra.mxu0 0.0
    %631 = vmatpush.msra.mxu0 0.0
    %632 = vmatpush.msra.mxu0 0.0
    %633 = vmatpush.msra.mxu0 0.0
    %634 = vmatpush.msra.mxu0 0.0
    %635 = vmatpush.msra.mxu0 0.0
    %636 = vmatpush.msra.mxu0 0.0
    %637 = vmatpush.msra.mxu0 0.0
    %638 = vmatpush.msra.mxu0 0.0
    %v639 = vand.u32 %v620, 4294901760
    %640 = vmatpush.msra.mxu0 %v639
    %v641 = vand.u32 %v619, 4294901760
    %642 = vmatpush.msra.mxu0 %v641
    %v643 = vand.u32 %v618, 4294901760
    %644 = vmatpush.msra.mxu0 %v643
    %v645 = vand.u32 %v617, 4294901760
    %646 = vmatpush.msra.mxu0 %v645
    %v647 = vand.u32 %v622, 4294901760
    %v648 = vsub.f32 %v622, %v647
    %v649 = vand.u32 %v648, 4294901760
    %v650 = vsub.f32 %v648, %v649
    %v651 = vand.u32 %v650, 4294901760
    %652 = vmatmul.f32.gmra.mxu0 %v651
    %v653 = vpop.f32.mrf.mxu0
    %v654 = vadd.f32 0.0, %v653
    %v655 = vand.u32 %v625, 4294901760
    %v656 = vsub.f32 %v625, %v655
    %v657 = vand.u32 %v656, 4294901760
    %v658 = vsub.f32 %v656, %v657
    %v659 = vand.u32 %v658, 4294901760
    %660 = vmatmul.f32.gmra.mxu0 %v659
    %v661 = vpop.f32.mrf.mxu0
    %v662 = vadd.f32 0.0, %v661
    %663 = vdwg.mxu0
    %664 = vmatpush.msra.mxu0 0.0
    %665 = vmatpush.msra.mxu0 0.0
    %666 = vmatpush.msra.mxu0 0.0
    %667 = vmatpush.msra.mxu0 0.0
    %668 = vmatpush.msra.mxu0 0.0
    %669 = vmatpush.msra.mxu0 0.0
    %670 = vmatpush.msra.mxu0 0.0
    %671 = vmatpush.msra.mxu0 0.0
    %672 = vmatpush.msra.mxu0 0.0
    %673 = vmatpush.msra.mxu0 0.0
    %674 = vmatpush.msra.mxu0 0.0
    %675 = vmatpush.msra.mxu0 0.0
    %v676 = vand.u32 %v620, 4294901760
    %v677 = vsub.f32 %v620, %v676
    %v678 = vand.u32 %v677, 4294901760
    %v679 = vsub.f32 %v677, %v678
    %v680 = vand.u32 %v679, 4294901760
    %681 = vmatpush.msra.mxu0 %v680
    %v682 = vand.u32 %v619, 4294901760
    %v683 = vsub.f32 %v619, %v682
    %v684 = vand.u32 %v683, 4294901760
    %v685 = vsub.f32 %v683, %v684
    %v686 = vand.u32 %v685, 4294901760
    %687 = vmatpush.msra.mxu0 %v686
    %v688 = vand.u32 %v618, 4294901760
    %v689 = vsub.f32 %v618, %v688
    %v690 = vand.u32 %v689, 4294901760
    %v691 = vsub.f32 %v689, %v690
    %v692 = vand.u32 %v691, 4294901760
    %693 = vmatpush.msra.mxu0 %v692
    %v694 = vand.u32 %v617, 4294901760
    %v695 = vsub.f32 %v617, %v694
    %v696 = vand.u32 %v695, 4294901760
    %v697 = vsub.f32 %v695, %v696
    %v698 = vand.u32 %v697, 4294901760
    %699 = vmatpush.msra.mxu0 %v698
    %v700 = vand.u32 %v622, 4294901760
    %701 = vmatmul.f32.gmra.mxu0 %v700
    %v702 = vpop.f32.mrf.mxu0
    %v703 = vadd.f32 %v654, %v702
    %v704 = vand.u32 %v625, 4294901760
    %705 = vmatmul.f32.gmra.mxu0 %v704
    %v706 = vpop.f32.mrf.mxu0
    %v707 = vadd.f32 %v662, %v706
    %708 = vdwg.mxu0
    %709 = vmatpush.msra.mxu0 0.0
    %710 = vmatpush.msra.mxu0 0.0
    %711 = vmatpush.msra.mxu0 0.0
    %712 = vmatpush.msra.mxu0 0.0
    %713 = vmatpush.msra.mxu0 0.0
    %714 = vmatpush.msra.mxu0 0.0
    %715 = vmatpush.msra.mxu0 0.0
    %716 = vmatpush.msra.mxu0 0.0
    %717 = vmatpush.msra.mxu0 0.0
    %718 = vmatpush.msra.mxu0 0.0
    %719 = vmatpush.msra.mxu0 0.0
    %720 = vmatpush.msra.mxu0 0.0
    %v721 = vand.u32 %v620, 4294901760
    %v722 = vsub.f32 %v620, %v721
    %723 = vmatpush.msra.mxu0 %v722
    %v724 = vand.u32 %v619, 4294901760
    %v725 = vsub.f32 %v619, %v724
    %726 = vmatpush.msra.mxu0 %v725
    %v727 = vand.u32 %v618, 4294901760
    %v728 = vsub.f32 %v618, %v727
    %729 = vmatpush.msra.mxu0 %v728
    %v730 = vand.u32 %v617, 4294901760
    %v731 = vsub.f32 %v617, %v730
    %732 = vmatpush.msra.mxu0 %v731
    %v733 = vand.u32 %v622, 4294901760
    %v734 = vsub.f32 %v622, %v733
    %735 = vmatmul.f32.gmra.mxu0 %v734
    %v736 = vpop.f32.mrf.mxu0
    %v737 = vadd.f32 %v703, %v736
    %v738 = vand.u32 %v625, 4294901760
    %v739 = vsub.f32 %v625, %v738
    %740 = vmatmul.f32.gmra.mxu0 %v739
    %v741 = vpop.f32.mrf.mxu0
    %v742 = vadd.f32 %v707, %v741
    %743 = vdwg.mxu0
    %744 = vmatpush.msra.mxu0 0.0
    %745 = vmatpush.msra.mxu0 0.0
    %746 = vmatpush.msra.mxu0 0.0
    %747 = vmatpush.msra.mxu0 0.0
    %748 = vmatpush.msra.mxu0 0.0
    %749 = vmatpush.msra.mxu0 0.0
    %750 = vmatpush.msra.mxu0 0.0
    %751 = vmatpush.msra.mxu0 0.0
    %752 = vmatpush.msra.mxu0 0.0
    %753 = vmatpush.msra.mxu0 0.0
    %754 = vmatpush.msra.mxu0 0.0
    %755 = vmatpush.msra.mxu0 0.0
    %v756 = vand.u32 %v620, 4294901760
    %757 = vmatpush.msra.mxu0 %v756
    %v758 = vand.u32 %v619, 4294901760
    %759 = vmatpush.msra.mxu0 %v758
    %v760 = vand.u32 %v618, 4294901760
    %761 = vmatpush.msra.mxu0 %v760
    %v762 = vand.u32 %v617, 4294901760
    %763 = vmatpush.msra.mxu0 %v762
    %v764 = vand.u32 %v622, 4294901760
    %v765 = vsub.f32 %v622, %v764
    %v766 = vand.u32 %v765, 4294901760
    %767 = vmatmul.f32.gmra.mxu0 %v766
    %v768 = vpop.f32.mrf.mxu0
    %v769 = vadd.f32 %v737, %v768
    %v770 = vand.u32 %v625, 4294901760
    %v771 = vsub.f32 %v625, %v770
    %v772 = vand.u32 %v771, 4294901760
    %773 = vmatmul.f32.gmra.mxu0 %v772
    %v774 = vpop.f32.mrf.mxu0
    %v775 = vadd.f32 %v742, %v774
    %776 = vdwg.mxu0
    %777 = vmatpush.msra.mxu0 0.0
    %778 = vmatpush.msra.mxu0 0.0
    %779 = vmatpush.msra.mxu0 0.0
    %780 = vmatpush.msra.mxu0 0.0
    %781 = vmatpush.msra.mxu0 0.0
    %782 = vmatpush.msra.mxu0 0.0
    %783 = vmatpush.msra.mxu0 0.0
    %784 = vmatpush.msra.mxu0 0.0
    %785 = vmatpush.msra.mxu0 0.0
    %786 = vmatpush.msra.mxu0 0.0
    %787 = vmatpush.msra.mxu0 0.0
    %788 = vmatpush.msra.mxu0 0.0
    %v789 = vand.u32 %v620, 4294901760
    %v790 = vsub.f32 %v620, %v789
    %v791 = vand.u32 %v790, 4294901760
    %792 = vmatpush.msra.mxu0 %v791
    %v793 = vand.u32 %v619, 4294901760
    %v794 = vsub.f32 %v619, %v793
    %v795 = vand.u32 %v794, 4294901760
    %796 = vmatpush.msra.mxu0 %v795
    %v797 = vand.u32 %v618, 4294901760
    %v798 = vsub.f32 %v618, %v797
    %v799 = vand.u32 %v798, 4294901760
    %800 = vmatpush.msra.mxu0 %v799
    %v801 = vand.u32 %v617, 4294901760
    %v802 = vsub.f32 %v617, %v801
    %v803 = vand.u32 %v802, 4294901760
    %804 = vmatpush.msra.mxu0 %v803
    %v805 = vand.u32 %v622, 4294901760
    %806 = vmatmul.f32.gmra.mxu0 %v805
    %v807 = vpop.f32.mrf.mxu0
    %v808 = vadd.f32 %v769, %v807
    %v809 = vand.u32 %v625, 4294901760
    %810 = vmatmul.f32.gmra.mxu0 %v809
    %v811 = vpop.f32.mrf.mxu0
    %v812 = vadd.f32 %v775, %v811
    %813 = vdwg.mxu0
    %814 = vmatpush.msra.mxu0 0.0
    %815 = vmatpush.msra.mxu0 0.0
    %816 = vmatpush.msra.mxu0 0.0
    %817 = vmatpush.msra.mxu0 0.0
    %818 = vmatpush.msra.mxu0 0.0
    %819 = vmatpush.msra.mxu0 0.0
    %820 = vmatpush.msra.mxu0 0.0
    %821 = vmatpush.msra.mxu0 0.0
    %822 = vmatpush.msra.mxu0 0.0
    %823 = vmatpush.msra.mxu0 0.0
    %824 = vmatpush.msra.mxu0 0.0
    %825 = vmatpush.msra.mxu0 0.0
    %v826 = vand.u32 %v620, 4294901760
    %827 = vmatpush.msra.mxu0 %v826
    %v828 = vand.u32 %v619, 4294901760
    %829 = vmatpush.msra.mxu0 %v828
    %v830 = vand.u32 %v618, 4294901760
    %831 = vmatpush.msra.mxu0 %v830
    %v832 = vand.u32 %v617, 4294901760
    %833 = vmatpush.msra.mxu0 %v832
    %v834 = vand.u32 %v622, 4294901760
    %835 = vmatmul.f32.gmra.mxu0 %v834
    %v836 = vpop.f32.mrf.mxu0
    %v837 = vadd.f32 %v808, %v836
    %v838 = vand.u32 %v625, 4294901760
    %839 = vmatmul.f32.gmra.mxu0 %v838
    %v840 = vpop.f32.mrf.mxu0
    %v841 = vadd.f32 %v812, %v840
    %842 = vdwg.mxu0
    %v843 = vadd.f32 %v608, %v837
    %v844 = vadd.f32 %v612, %v841
    %v845 = vld [vmem:[#allocation2 + $0x8] sm:$0xff]
    %v846 = vld [vmem:[#allocation2 + $0x10] sm:$0xff]
    %s847 = scalar_lea.vmem %s0, 96
    %v848 = vld [vmem:[%s847] sm:$0xff]
    %v849 = vld [vmem:[%s847 + $0x8] sm:$0xff]
    %v850 = vld [vmem:[%s847 + $0x10] sm:$0xff]
    %v851 = vld [vmem:[%s847 + $0x18] sm:$0xff]
    %v853 = vsel %vm169, %v845, 0
    %v856 = vsel %vm169, %v846, 0
    %858 = vmatpush.msra.mxu0 0.0
    %859 = vmatpush.msra.mxu0 0.0
    %860 = vmatpush.msra.mxu0 0.0
    %861 = vmatpush.msra.mxu0 0.0
    %862 = vmatpush.msra.mxu0 0.0
    %863 = vmatpush.msra.mxu0 0.0
    %864 = vmatpush.msra.mxu0 0.0
    %865 = vmatpush.msra.mxu0 0.0
    %866 = vmatpush.msra.mxu0 0.0
    %867 = vmatpush.msra.mxu0 0.0
    %868 = vmatpush.msra.mxu0 0.0
    %869 = vmatpush.msra.mxu0 0.0
    %v870 = vand.u32 %v851, 4294901760
    %871 = vmatpush.msra.mxu0 %v870
    %v872 = vand.u32 %v850, 4294901760
    %873 = vmatpush.msra.mxu0 %v872
    %v874 = vand.u32 %v849, 4294901760
    %875 = vmatpush.msra.mxu0 %v874
    %v876 = vand.u32 %v848, 4294901760
    %877 = vmatpush.msra.mxu0 %v876
    %v878 = vand.u32 %v853, 4294901760
    %v879 = vsub.f32 %v853, %v878
    %v880 = vand.u32 %v879, 4294901760
    %v881 = vsub.f32 %v879, %v880
    %v882 = vand.u32 %v881, 4294901760
    %883 = vmatmul.f32.gmra.mxu0 %v882
    %v884 = vpop.f32.mrf.mxu0
    %v885 = vadd.f32 0.0, %v884
    %v886 = vand.u32 %v856, 4294901760
    %v887 = vsub.f32 %v856, %v886
    %v888 = vand.u32 %v887, 4294901760
    %v889 = vsub.f32 %v887, %v888
    %v890 = vand.u32 %v889, 4294901760
    %891 = vmatmul.f32.gmra.mxu0 %v890
    %v892 = vpop.f32.mrf.mxu0
    %v893 = vadd.f32 0.0, %v892
    %894 = vdwg.mxu0
    %895 = vmatpush.msra.mxu0 0.0
    %896 = vmatpush.msra.mxu0 0.0
    %897 = vmatpush.msra.mxu0 0.0
    %898 = vmatpush.msra.mxu0 0.0
    %899 = vmatpush.msra.mxu0 0.0
    %900 = vmatpush.msra.mxu0 0.0
    %901 = vmatpush.msra.mxu0 0.0
    %902 = vmatpush.msra.mxu0 0.0
    %903 = vmatpush.msra.mxu0 0.0
    %904 = vmatpush.msra.mxu0 0.0
    %905 = vmatpush.msra.mxu0 0.0
    %906 = vmatpush.msra.mxu0 0.0
    %v907 = vand.u32 %v851, 4294901760
    %v908 = vsub.f32 %v851, %v907
    %v909 = vand.u32 %v908, 4294901760
    %v910 = vsub.f32 %v908, %v909
    %v911 = vand.u32 %v910, 4294901760
    %912 = vmatpush.msra.mxu0 %v911
    %v913 = vand.u32 %v850, 4294901760
    %v914 = vsub.f32 %v850, %v913
    %v915 = vand.u32 %v914, 4294901760
    %v916 = vsub.f32 %v914, %v915
    %v917 = vand.u32 %v916, 4294901760
    %918 = vmatpush.msra.mxu0 %v917
    %v919 = vand.u32 %v849, 4294901760
    %v920 = vsub.f32 %v849, %v919
    %v921 = vand.u32 %v920, 4294901760
    %v922 = vsub.f32 %v920, %v921
    %v923 = vand.u32 %v922, 4294901760
    %924 = vmatpush.msra.mxu0 %v923
    %v925 = vand.u32 %v848, 4294901760
    %v926 = vsub.f32 %v848, %v925
    %v927 = vand.u32 %v926, 4294901760
    %v928 = vsub.f32 %v926, %v927
    %v929 = vand.u32 %v928, 4294901760
    %930 = vmatpush.msra.mxu0 %v929
    %v931 = vand.u32 %v853, 4294901760
    %932 = vmatmul.f32.gmra.mxu0 %v931
    %v933 = vpop.f32.mrf.mxu0
    %v934 = vadd.f32 %v885, %v933
    %v935 = vand.u32 %v856, 4294901760
    %936 = vmatmul.f32.gmra.mxu0 %v935
    %v937 = vpop.f32.mrf.mxu0
    %v938 = vadd.f32 %v893, %v937
    %939 = vdwg.mxu0
    %940 = vmatpush.msra.mxu0 0.0
    %941 = vmatpush.msra.mxu0 0.0
    %942 = vmatpush.msra.mxu0 0.0
    %943 = vmatpush.msra.mxu0 0.0
    %944 = vmatpush.msra.mxu0 0.0
    %945 = vmatpush.msra.mxu0 0.0
    %946 = vmatpush.msra.mxu0 0.0
    %947 = vmatpush.msra.mxu0 0.0
    %948 = vmatpush.msra.mxu0 0.0
    %949 = vmatpush.msra.mxu0 0.0
    %950 = vmatpush.msra.mxu0 0.0
    %951 = vmatpush.msra.mxu0 0.0
    %v952 = vand.u32 %v851, 4294901760
    %v953 = vsub.f32 %v851, %v952
    %954 = vmatpush.msra.mxu0 %v953
    %v955 = vand.u32 %v850, 4294901760
    %v956 = vsub.f32 %v850, %v955
    %957 = vmatpush.msra.mxu0 %v956
    %v958 = vand.u32 %v849, 4294901760
    %v959 = vsub.f32 %v849, %v958
    %960 = vmatpush.msra.mxu0 %v959
    %v961 = vand.u32 %v848, 4294901760
    %v962 = vsub.f32 %v848, %v961
    %963 = vmatpush.msra.mxu0 %v962
    %v964 = vand.u32 %v853, 4294901760
    %v965 = vsub.f32 %v853, %v964
    %966 = vmatmul.f32.gmra.mxu0 %v965
    %v967 = vpop.f32.mrf.mxu0
    %v968 = vadd.f32 %v934, %v967
    %v969 = vand.u32 %v856, 4294901760
    %v970 = vsub.f32 %v856, %v969
    %971 = vmatmul.f32.gmra.mxu0 %v970
    %v972 = vpop.f32.mrf.mxu0
    %v973 = vadd.f32 %v938, %v972
    %974 = vdwg.mxu0
    %975 = vmatpush.msra.mxu0 0.0
    %976 = vmatpush.msra.mxu0 0.0
    %977 = vmatpush.msra.mxu0 0.0
    %978 = vmatpush.msra.mxu0 0.0
    %979 = vmatpush.msra.mxu0 0.0
    %980 = vmatpush.msra.mxu0 0.0
    %981 = vmatpush.msra.mxu0 0.0
    %982 = vmatpush.msra.mxu0 0.0
    %983 = vmatpush.msra.mxu0 0.0
    %984 = vmatpush.msra.mxu0 0.0
    %985 = vmatpush.msra.mxu0 0.0
    %986 = vmatpush.msra.mxu0 0.0
    %v987 = vand.u32 %v851, 4294901760
    %988 = vmatpush.msra.mxu0 %v987
    %v989 = vand.u32 %v850, 4294901760
    %990 = vmatpush.msra.mxu0 %v989
    %v991 = vand.u32 %v849, 4294901760
    %992 = vmatpush.msra.mxu0 %v991
    %v993 = vand.u32 %v848, 4294901760
    %994 = vmatpush.msra.mxu0 %v993
    %v995 = vand.u32 %v853, 4294901760
    %v996 = vsub.f32 %v853, %v995
    %v997 = vand.u32 %v996, 4294901760
    %998 = vmatmul.f32.gmra.mxu0 %v997
    %v999 = vpop.f32.mrf.mxu0
    %v1000 = vadd.f32 %v968, %v999
    %v1001 = vand.u32 %v856, 4294901760
    %v1002 = vsub.f32 %v856, %v1001
    %v1003 = vand.u32 %v1002, 4294901760
    %1004 = vmatmul.f32.gmra.mxu0 %v1003
    %v1005 = vpop.f32.mrf.mxu0
    %v1006 = vadd.f32 %v973, %v1005
    %1007 = vdwg.mxu0
    %1008 = vmatpush.msra.mxu0 0.0
    %1009 = vmatpush.msra.mxu0 0.0
    %1010 = vmatpush.msra.mxu0 0.0
    %1011 = vmatpush.msra.mxu0 0.0
    %1012 = vmatpush.msra.mxu0 0.0
    %1013 = vmatpush.msra.mxu0 0.0
    %1014 = vmatpush.msra.mxu0 0.0
    %1015 = vmatpush.msra.mxu0 0.0
    %1016 = vmatpush.msra.mxu0 0.0
    %1017 = vmatpush.msra.mxu0 0.0
    %1018 = vmatpush.msra.mxu0 0.0
    %1019 = vmatpush.msra.mxu0 0.0
    %v1020 = vand.u32 %v851, 4294901760
    %v1021 = vsub.f32 %v851, %v1020
    %v1022 = vand.u32 %v1021, 4294901760
    %1023 = vmatpush.msra.mxu0 %v1022
    %v1024 = vand.u32 %v850, 4294901760
    %v1025 = vsub.f32 %v850, %v1024
    %v1026 = vand.u32 %v1025, 4294901760
    %1027 = vmatpush.msra.mxu0 %v1026
    %v1028 = vand.u32 %v849, 4294901760
    %v1029 = vsub.f32 %v849, %v1028
    %v1030 = vand.u32 %v1029, 4294901760
    %1031 = vmatpush.msra.mxu0 %v1030
    %v1032 = vand.u32 %v848, 4294901760
    %v1033 = vsub.f32 %v848, %v1032
    %v1034 = vand.u32 %v1033, 4294901760
    %1035 = vmatpush.msra.mxu0 %v1034
    %v1036 = vand.u32 %v853, 4294901760
    %1037 = vmatmul.f32.gmra.mxu0 %v1036
    %v1038 = vpop.f32.mrf.mxu0
    %v1039 = vadd.f32 %v1000, %v1038
    %v1040 = vand.u32 %v856, 4294901760
    %1041 = vmatmul.f32.gmra.mxu0 %v1040
    %v1042 = vpop.f32.mrf.mxu0
    %v1043 = vadd.f32 %v1006, %v1042
    %1044 = vdwg.mxu0
    %1045 = vmatpush.msra.mxu0 0.0
    %1046 = vmatpush.msra.mxu0 0.0
    %1047 = vmatpush.msra.mxu0 0.0
    %1048 = vmatpush.msra.mxu0 0.0
    %1049 = vmatpush.msra.mxu0 0.0
    %1050 = vmatpush.msra.mxu0 0.0
    %1051 = vmatpush.msra.mxu0 0.0
    %1052 = vmatpush.msra.mxu0 0.0
    %1053 = vmatpush.msra.mxu0 0.0
    %1054 = vmatpush.msra.mxu0 0.0
    %1055 = vmatpush.msra.mxu0 0.0
    %1056 = vmatpush.msra.mxu0 0.0
    %v1057 = vand.u32 %v851, 4294901760
    %1058 = vmatpush.msra.mxu0 %v1057
    %v1059 = vand.u32 %v850, 4294901760
    %1060 = vmatpush.msra.mxu0 %v1059
    %v1061 = vand.u32 %v849, 4294901760
    %1062 = vmatpush.msra.mxu0 %v1061
    %v1063 = vand.u32 %v848, 4294901760
    %1064 = vmatpush.msra.mxu0 %v1063
    %v1065 = vand.u32 %v853, 4294901760
    %1066 = vmatmul.f32.gmra.mxu0 %v1065
    %v1067 = vpop.f32.mrf.mxu0
    %v1068 = vadd.f32 %v1039, %v1067
    %v1069 = vand.u32 %v856, 4294901760
    %1070 = vmatmul.f32.gmra.mxu0 %v1069
    %v1071 = vpop.f32.mrf.mxu0
    %v1072 = vadd.f32 %v1043, %v1071
    %1073 = vdwg.mxu0
    %v1074 = vadd.f32 %v843, %v1068
    %v1075 = vadd.f32 %v844, %v1072
    %v1076 = vld [vmem:[#allocation2 + $0x9] sm:$0xff]
    %v1077 = vld [vmem:[#allocation2 + $0x11] sm:$0xff]
    %s1078 = scalar_lea.vmem %s0, 128
    %v1079 = vld [vmem:[%s1078] sm:$0xff]
    %v1080 = vld [vmem:[%s1078 + $0x8] sm:$0xff]
    %v1081 = vld [vmem:[%s1078 + $0x10] sm:$0xff]
    %v1082 = vld [vmem:[%s1078 + $0x18] sm:$0xff]
    %v1084 = vsel %vm169, %v1076, 0
    %v1087 = vsel %vm169, %v1077, 0
    %1089 = vmatpush.msra.mxu0 0.0
    %1090 = vmatpush.msra.mxu0 0.0
    %1091 = vmatpush.msra.mxu0 0.0
    %1092 = vmatpush.msra.mxu0 0.0
    %1093 = vmatpush.msra.mxu0 0.0
    %1094 = vmatpush.msra.mxu0 0.0
    %1095 = vmatpush.msra.mxu0 0.0
    %1096 = vmatpush.msra.mxu0 0.0
    %1097 = vmatpush.msra.mxu0 0.0
    %1098 = vmatpush.msra.mxu0 0.0
    %1099 = vmatpush.msra.mxu0 0.0
    %1100 = vmatpush.msra.mxu0 0.0
    %v1101 = vand.u32 %v1082, 4294901760
    %1102 = vmatpush.msra.mxu0 %v1101
    %v1103 = vand.u32 %v1081, 4294901760
    %1104 = vmatpush.msra.mxu0 %v1103
    %v1105 = vand.u32 %v1080, 4294901760
    %1106 = vmatpush.msra.mxu0 %v1105
    %v1107 = vand.u32 %v1079, 4294901760
    %1108 = vmatpush.msra.mxu0 %v1107
    %v1109 = vand.u32 %v1084, 4294901760
    %v1110 = vsub.f32 %v1084, %v1109
    %v1111 = vand.u32 %v1110, 4294901760
    %v1112 = vsub.f32 %v1110, %v1111
    %v1113 = vand.u32 %v1112, 4294901760
    %1114 = vmatmul.f32.gmra.mxu0 %v1113
    %v1115 = vpop.f32.mrf.mxu0
    %v1116 = vadd.f32 0.0, %v1115
    %v1117 = vand.u32 %v1087, 4294901760
    %v1118 = vsub.f32 %v1087, %v1117
    %v1119 = vand.u32 %v1118, 4294901760
    %v1120 = vsub.f32 %v1118, %v1119
    %v1121 = vand.u32 %v1120, 4294901760
    %1122 = vmatmul.f32.gmra.mxu0 %v1121
    %v1123 = vpop.f32.mrf.mxu0
    %v1124 = vadd.f32 0.0, %v1123
    %1125 = vdwg.mxu0
    %1126 = vmatpush.msra.mxu0 0.0
    %1127 = vmatpush.msra.mxu0 0.0
    %1128 = vmatpush.msra.mxu0 0.0
    %1129 = vmatpush.msra.mxu0 0.0
    %1130 = vmatpush.msra.mxu0 0.0
    %1131 = vmatpush.msra.mxu0 0.0
    %1132 = vmatpush.msra.mxu0 0.0
    %1133 = vmatpush.msra.mxu0 0.0
    %1134 = vmatpush.msra.mxu0 0.0
    %1135 = vmatpush.msra.mxu0 0.0
    %1136 = vmatpush.msra.mxu0 0.0
    %1137 = vmatpush.msra.mxu0 0.0
    %v1138 = vand.u32 %v1082, 4294901760
    %v1139 = vsub.f32 %v1082, %v1138
    %v1140 = vand.u32 %v1139, 4294901760
    %v1141 = vsub.f32 %v1139, %v1140
    %v1142 = vand.u32 %v1141, 4294901760
    %1143 = vmatpush.msra.mxu0 %v1142
    %v1144 = vand.u32 %v1081, 4294901760
    %v1145 = vsub.f32 %v1081, %v1144
    %v1146 = vand.u32 %v1145, 4294901760
    %v1147 = vsub.f32 %v1145, %v1146
    %v1148 = vand.u32 %v1147, 4294901760
    %1149 = vmatpush.msra.mxu0 %v1148
    %v1150 = vand.u32 %v1080, 4294901760
    %v1151 = vsub.f32 %v1080, %v1150
    %v1152 = vand.u32 %v1151, 4294901760
    %v1153 = vsub.f32 %v1151, %v1152
    %v1154 = vand.u32 %v1153, 4294901760
    %1155 = vmatpush.msra.mxu0 %v1154
    %v1156 = vand.u32 %v1079, 4294901760
    %v1157 = vsub.f32 %v1079, %v1156
    %v1158 = vand.u32 %v1157, 4294901760
    %v1159 = vsub.f32 %v1157, %v1158
    %v1160 = vand.u32 %v1159, 4294901760
    %1161 = vmatpush.msra.mxu0 %v1160
    %v1162 = vand.u32 %v1084, 4294901760
    %1163 = vmatmul.f32.gmra.mxu0 %v1162
    %v1164 = vpop.f32.mrf.mxu0
    %v1165 = vadd.f32 %v1116, %v1164
    %v1166 = vand.u32 %v1087, 4294901760
    %1167 = vmatmul.f32.gmra.mxu0 %v1166
    %v1168 = vpop.f32.mrf.mxu0
    %v1169 = vadd.f32 %v1124, %v1168
    %1170 = vdwg.mxu0
    %1171 = vmatpush.msra.mxu0 0.0
    %1172 = vmatpush.msra.mxu0 0.0
    %1173 = vmatpush.msra.mxu0 0.0
    %1174 = vmatpush.msra.mxu0 0.0
    %1175 = vmatpush.msra.mxu0 0.0
    %1176 = vmatpush.msra.mxu0 0.0
    %1177 = vmatpush.msra.mxu0 0.0
    %1178 = vmatpush.msra.mxu0 0.0
    %1179 = vmatpush.msra.mxu0 0.0
    %1180 = vmatpush.msra.mxu0 0.0
    %1181 = vmatpush.msra.mxu0 0.0
    %1182 = vmatpush.msra.mxu0 0.0
    %v1183 = vand.u32 %v1082, 4294901760
    %v1184 = vsub.f32 %v1082, %v1183
    %1185 = vmatpush.msra.mxu0 %v1184
    %v1186 = vand.u32 %v1081, 4294901760
    %v1187 = vsub.f32 %v1081, %v1186
    %1188 = vmatpush.msra.mxu0 %v1187
    %v1189 = vand.u32 %v1080, 4294901760
    %v1190 = vsub.f32 %v1080, %v1189
    %1191 = vmatpush.msra.mxu0 %v1190
    %v1192 = vand.u32 %v1079, 4294901760
    %v1193 = vsub.f32 %v1079, %v1192
    %1194 = vmatpush.msra.mxu0 %v1193
    %v1195 = vand.u32 %v1084, 4294901760
    %v1196 = vsub.f32 %v1084, %v1195
    %1197 = vmatmul.f32.gmra.mxu0 %v1196
    %v1198 = vpop.f32.mrf.mxu0
    %v1199 = vadd.f32 %v1165, %v1198
    %v1200 = vand.u32 %v1087, 4294901760
    %v1201 = vsub.f32 %v1087, %v1200
    %1202 = vmatmul.f32.gmra.mxu0 %v1201
    %v1203 = vpop.f32.mrf.mxu0
    %v1204 = vadd.f32 %v1169, %v1203
    %1205 = vdwg.mxu0
    %1206 = vmatpush.msra.mxu0 0.0
    %1207 = vmatpush.msra.mxu0 0.0
    %1208 = vmatpush.msra.mxu0 0.0
    %1209 = vmatpush.msra.mxu0 0.0
    %1210 = vmatpush.msra.mxu0 0.0
    %1211 = vmatpush.msra.mxu0 0.0
    %1212 = vmatpush.msra.mxu0 0.0
    %1213 = vmatpush.msra.mxu0 0.0
    %1214 = vmatpush.msra.mxu0 0.0
    %1215 = vmatpush.msra.mxu0 0.0
    %1216 = vmatpush.msra.mxu0 0.0
    %1217 = vmatpush.msra.mxu0 0.0
    %v1218 = vand.u32 %v1082, 4294901760
    %1219 = vmatpush.msra.mxu0 %v1218
    %v1220 = vand.u32 %v1081, 4294901760
    %1221 = vmatpush.msra.mxu0 %v1220
    %v1222 = vand.u32 %v1080, 4294901760
    %1223 = vmatpush.msra.mxu0 %v1222
    %v1224 = vand.u32 %v1079, 4294901760
    %1225 = vmatpush.msra.mxu0 %v1224
    %v1226 = vand.u32 %v1084, 4294901760
    %v1227 = vsub.f32 %v1084, %v1226
    %v1228 = vand.u32 %v1227, 4294901760
    %1229 = vmatmul.f32.gmra.mxu0 %v1228
    %v1230 = vpop.f32.mrf.mxu0
    %v1231 = vadd.f32 %v1199, %v1230
    %v1232 = vand.u32 %v1087, 4294901760
    %v1233 = vsub.f32 %v1087, %v1232
    %v1234 = vand.u32 %v1233, 4294901760
    %1235 = vmatmul.f32.gmra.mxu0 %v1234
    %v1236 = vpop.f32.mrf.mxu0
    %v1237 = vadd.f32 %v1204, %v1236
    %1238 = vdwg.mxu0
    %1239 = vmatpush.msra.mxu0 0.0
    %1240 = vmatpush.msra.mxu0 0.0
    %1241 = vmatpush.msra.mxu0 0.0
    %1242 = vmatpush.msra.mxu0 0.0
    %1243 = vmatpush.msra.mxu0 0.0
    %1244 = vmatpush.msra.mxu0 0.0
    %1245 = vmatpush.msra.mxu0 0.0
    %1246 = vmatpush.msra.mxu0 0.0
    %1247 = vmatpush.msra.mxu0 0.0
    %1248 = vmatpush.msra.mxu0 0.0
    %1249 = vmatpush.msra.mxu0 0.0
    %1250 = vmatpush.msra.mxu0 0.0
    %v1251 = vand.u32 %v1082, 4294901760
    %v1252 = vsub.f32 %v1082, %v1251
    %v1253 = vand.u32 %v1252, 4294901760
    %1254 = vmatpush.msra.mxu0 %v1253
    %v1255 = vand.u32 %v1081, 4294901760
    %v1256 = vsub.f32 %v1081, %v1255
    %v1257 = vand.u32 %v1256, 4294901760
    %1258 = vmatpush.msra.mxu0 %v1257
    %v1259 = vand.u32 %v1080, 4294901760
    %v1260 = vsub.f32 %v1080, %v1259
    %v1261 = vand.u32 %v1260, 4294901760
    %1262 = vmatpush.msra.mxu0 %v1261
    %v1263 = vand.u32 %v1079, 4294901760
    %v1264 = vsub.f32 %v1079, %v1263
    %v1265 = vand.u32 %v1264, 4294901760
    %1266 = vmatpush.msra.mxu0 %v1265
    %v1267 = vand.u32 %v1084, 4294901760
    %1268 = vmatmul.f32.gmra.mxu0 %v1267
    %v1269 = vpop.f32.mrf.mxu0
    %v1270 = vadd.f32 %v1231, %v1269
    %v1271 = vand.u32 %v1087, 4294901760
    %1272 = vmatmul.f32.gmra.mxu0 %v1271
    %v1273 = vpop.f32.mrf.mxu0
    %v1274 = vadd.f32 %v1237, %v1273
    %1275 = vdwg.mxu0
    %1276 = vmatpush.msra.mxu0 0.0
    %1277 = vmatpush.msra.mxu0 0.0
    %1278 = vmatpush.msra.mxu0 0.0
    %1279 = vmatpush.msra.mxu0 0.0
    %1280 = vmatpush.msra.mxu0 0.0
    %1281 = vmatpush.msra.mxu0 0.0
    %1282 = vmatpush.msra.mxu0 0.0
    %1283 = vmatpush.msra.mxu0 0.0
    %1284 = vmatpush.msra.mxu0 0.0
    %1285 = vmatpush.msra.mxu0 0.0
    %1286 = vmatpush.msra.mxu0 0.0
    %1287 = vmatpush.msra.mxu0 0.0
    %v1288 = vand.u32 %v1082, 4294901760
    %1289 = vmatpush.msra.mxu0 %v1288
    %v1290 = vand.u32 %v1081, 4294901760
    %1291 = vmatpush.msra.mxu0 %v1290
    %v1292 = vand.u32 %v1080, 4294901760
    %1293 = vmatpush.msra.mxu0 %v1292
    %v1294 = vand.u32 %v1079, 4294901760
    %1295 = vmatpush.msra.mxu0 %v1294
    %v1296 = vand.u32 %v1084, 4294901760
    %1297 = vmatmul.f32.gmra.mxu0 %v1296
    %v1298 = vpop.f32.mrf.mxu0
    %v1299 = vadd.f32 %v1270, %v1298
    %v1300 = vand.u32 %v1087, 4294901760
    %1301 = vmatmul.f32.gmra.mxu0 %v1300
    %v1302 = vpop.f32.mrf.mxu0
    %v1303 = vadd.f32 %v1274, %v1302
    %1304 = vdwg.mxu0
    %v1305 = vadd.f32 %v1074, %v1299
    %v1306 = vadd.f32 %v1075, %v1303
    %v1307 = vld [vmem:[#allocation2 + $0xa] sm:$0xff]
    %v1308 = vld [vmem:[#allocation2 + $0x12] sm:$0xff]
    %s1309 = scalar_lea.vmem %s0, 160
    %v1310 = vld [vmem:[%s1309] sm:$0xff]
    %v1311 = vld [vmem:[%s1309 + $0x8] sm:$0xff]
    %v1312 = vld [vmem:[%s1309 + $0x10] sm:$0xff]
    %v1313 = vld [vmem:[%s1309 + $0x18] sm:$0xff]
    %v1315 = vsel %vm169, %v1307, 0
    %v1318 = vsel %vm169, %v1308, 0
    %1320 = vmatpush.msra.mxu0 0.0
    %1321 = vmatpush.msra.mxu0 0.0
    %1322 = vmatpush.msra.mxu0 0.0
    %1323 = vmatpush.msra.mxu0 0.0
    %1324 = vmatpush.msra.mxu0 0.0
    %1325 = vmatpush.msra.mxu0 0.0
    %1326 = vmatpush.msra.mxu0 0.0
    %1327 = vmatpush.msra.mxu0 0.0
    %1328 = vmatpush.msra.mxu0 0.0
    %1329 = vmatpush.msra.mxu0 0.0
    %1330 = vmatpush.msra.mxu0 0.0
    %1331 = vmatpush.msra.mxu0 0.0
    %v1332 = vand.u32 %v1313, 4294901760
    %1333 = vmatpush.msra.mxu0 %v1332
    %v1334 = vand.u32 %v1312, 4294901760
    %1335 = vmatpush.msra.mxu0 %v1334
    %v1336 = vand.u32 %v1311, 4294901760
    %1337 = vmatpush.msra.mxu0 %v1336
    %v1338 = vand.u32 %v1310, 4294901760
    %1339 = vmatpush.msra.mxu0 %v1338
    %v1340 = vand.u32 %v1315, 4294901760
    %v1341 = vsub.f32 %v1315, %v1340
    %v1342 = vand.u32 %v1341, 4294901760
    %v1343 = vsub.f32 %v1341, %v1342
    %v1344 = vand.u32 %v1343, 4294901760
    %1345 = vmatmul.f32.gmra.mxu0 %v1344
    %v1346 = vpop.f32.mrf.mxu0
    %v1347 = vadd.f32 0.0, %v1346
    %v1348 = vand.u32 %v1318, 4294901760
    %v1349 = vsub.f32 %v1318, %v1348
    %v1350 = vand.u32 %v1349, 4294901760
    %v1351 = vsub.f32 %v1349, %v1350
    %v1352 = vand.u32 %v1351, 4294901760
    %1353 = vmatmul.f32.gmra.mxu0 %v1352
    %v1354 = vpop.f32.mrf.mxu0
    %v1355 = vadd.f32 0.0, %v1354
    %1356 = vdwg.mxu0
    %1357 = vmatpush.msra.mxu0 0.0
    %1358 = vmatpush.msra.mxu0 0.0
    %1359 = vmatpush.msra.mxu0 0.0
    %1360 = vmatpush.msra.mxu0 0.0
    %1361 = vmatpush.msra.mxu0 0.0
    %1362 = vmatpush.msra.mxu0 0.0
    %1363 = vmatpush.msra.mxu0 0.0
    %1364 = vmatpush.msra.mxu0 0.0
    %1365 = vmatpush.msra.mxu0 0.0
    %1366 = vmatpush.msra.mxu0 0.0
    %1367 = vmatpush.msra.mxu0 0.0
    %1368 = vmatpush.msra.mxu0 0.0
    %v1369 = vand.u32 %v1313, 4294901760
    %v1370 = vsub.f32 %v1313, %v1369
    %v1371 = vand.u32 %v1370, 4294901760
    %v1372 = vsub.f32 %v1370, %v1371
    %v1373 = vand.u32 %v1372, 4294901760
    %1374 = vmatpush.msra.mxu0 %v1373
    %v1375 = vand.u32 %v1312, 4294901760
    %v1376 = vsub.f32 %v1312, %v1375
    %v1377 = vand.u32 %v1376, 4294901760
    %v1378 = vsub.f32 %v1376, %v1377
    %v1379 = vand.u32 %v1378, 4294901760
    %1380 = vmatpush.msra.mxu0 %v1379
    %v1381 = vand.u32 %v1311, 4294901760
    %v1382 = vsub.f32 %v1311, %v1381
    %v1383 = vand.u32 %v1382, 4294901760
    %v1384 = vsub.f32 %v1382, %v1383
    %v1385 = vand.u32 %v1384, 4294901760
    %1386 = vmatpush.msra.mxu0 %v1385
    %v1387 = vand.u32 %v1310, 4294901760
    %v1388 = vsub.f32 %v1310, %v1387
    %v1389 = vand.u32 %v1388, 4294901760
    %v1390 = vsub.f32 %v1388, %v1389
    %v1391 = vand.u32 %v1390, 4294901760
    %1392 = vmatpush.msra.mxu0 %v1391
    %v1393 = vand.u32 %v1315, 4294901760
    %1394 = vmatmul.f32.gmra.mxu0 %v1393
    %v1395 = vpop.f32.mrf.mxu0
    %v1396 = vadd.f32 %v1347, %v1395
    %v1397 = vand.u32 %v1318, 4294901760
    %1398 = vmatmul.f32.gmra.mxu0 %v1397
    %v1399 = vpop.f32.mrf.mxu0
    %v1400 = vadd.f32 %v1355, %v1399
    %1401 = vdwg.mxu0
    %1402 = vmatpush.msra.mxu0 0.0
    %1403 = vmatpush.msra.mxu0 0.0
    %1404 = vmatpush.msra.mxu0 0.0
    %1405 = vmatpush.msra.mxu0 0.0
    %1406 = vmatpush.msra.mxu0 0.0
    %1407 = vmatpush.msra.mxu0 0.0
    %1408 = vmatpush.msra.mxu0 0.0
    %1409 = vmatpush.msra.mxu0 0.0
    %1410 = vmatpush.msra.mxu0 0.0
    %1411 = vmatpush.msra.mxu0 0.0
    %1412 = vmatpush.msra.mxu0 0.0
    %1413 = vmatpush.msra.mxu0 0.0
    %v1414 = vand.u32 %v1313, 4294901760
    %v1415 = vsub.f32 %v1313, %v1414
    %1416 = vmatpush.msra.mxu0 %v1415
    %v1417 = vand.u32 %v1312, 4294901760
    %v1418 = vsub.f32 %v1312, %v1417
    %1419 = vmatpush.msra.mxu0 %v1418
    %v1420 = vand.u32 %v1311, 4294901760
    %v1421 = vsub.f32 %v1311, %v1420
    %1422 = vmatpush.msra.mxu0 %v1421
    %v1423 = vand.u32 %v1310, 4294901760
    %v1424 = vsub.f32 %v1310, %v1423
    %1425 = vmatpush.msra.mxu0 %v1424
    %v1426 = vand.u32 %v1315, 4294901760
    %v1427 = vsub.f32 %v1315, %v1426
    %1428 = vmatmul.f32.gmra.mxu0 %v1427
    %v1429 = vpop.f32.mrf.mxu0
    %v1430 = vadd.f32 %v1396, %v1429
    %v1431 = vand.u32 %v1318, 4294901760
    %v1432 = vsub.f32 %v1318, %v1431
    %1433 = vmatmul.f32.gmra.mxu0 %v1432
    %v1434 = vpop.f32.mrf.mxu0
    %v1435 = vadd.f32 %v1400, %v1434
    %1436 = vdwg.mxu0
    %1437 = vmatpush.msra.mxu0 0.0
    %1438 = vmatpush.msra.mxu0 0.0
    %1439 = vmatpush.msra.mxu0 0.0
    %1440 = vmatpush.msra.mxu0 0.0
    %1441 = vmatpush.msra.mxu0 0.0
    %1442 = vmatpush.msra.mxu0 0.0
    %1443 = vmatpush.msra.mxu0 0.0
    %1444 = vmatpush.msra.mxu0 0.0
    %1445 = vmatpush.msra.mxu0 0.0
    %1446 = vmatpush.msra.mxu0 0.0
    %1447 = vmatpush.msra.mxu0 0.0
    %1448 = vmatpush.msra.mxu0 0.0
    %v1449 = vand.u32 %v1313, 4294901760
    %1450 = vmatpush.msra.mxu0 %v1449
    %v1451 = vand.u32 %v1312, 4294901760
    %1452 = vmatpush.msra.mxu0 %v1451
    %v1453 = vand.u32 %v1311, 4294901760
    %1454 = vmatpush.msra.mxu0 %v1453
    %v1455 = vand.u32 %v1310, 4294901760
    %1456 = vmatpush.msra.mxu0 %v1455
    %v1457 = vand.u32 %v1315, 4294901760
    %v1458 = vsub.f32 %v1315, %v1457
    %v1459 = vand.u32 %v1458, 4294901760
    %1460 = vmatmul.f32.gmra.mxu0 %v1459
    %v1461 = vpop.f32.mrf.mxu0
    %v1462 = vadd.f32 %v1430, %v1461
    %v1463 = vand.u32 %v1318, 4294901760
    %v1464 = vsub.f32 %v1318, %v1463
    %v1465 = vand.u32 %v1464, 4294901760
    %1466 = vmatmul.f32.gmra.mxu0 %v1465
    %v1467 = vpop.f32.mrf.mxu0
    %v1468 = vadd.f32 %v1435, %v1467
    %1469 = vdwg.mxu0
    %1470 = vmatpush.msra.mxu0 0.0
    %1471 = vmatpush.msra.mxu0 0.0
    %1472 = vmatpush.msra.mxu0 0.0
    %1473 = vmatpush.msra.mxu0 0.0
    %1474 = vmatpush.msra.mxu0 0.0
    %1475 = vmatpush.msra.mxu0 0.0
    %1476 = vmatpush.msra.mxu0 0.0
    %1477 = vmatpush.msra.mxu0 0.0
    %1478 = vmatpush.msra.mxu0 0.0
    %1479 = vmatpush.msra.mxu0 0.0
    %1480 = vmatpush.msra.mxu0 0.0
    %1481 = vmatpush.msra.mxu0 0.0
    %v1482 = vand.u32 %v1313, 4294901760
    %v1483 = vsub.f32 %v1313, %v1482
    %v1484 = vand.u32 %v1483, 4294901760
    %1485 = vmatpush.msra.mxu0 %v1484
    %v1486 = vand.u32 %v1312, 4294901760
    %v1487 = vsub.f32 %v1312, %v1486
    %v1488 = vand.u32 %v1487, 4294901760
    %1489 = vmatpush.msra.mxu0 %v1488
    %v1490 = vand.u32 %v1311, 4294901760
    %v1491 = vsub.f32 %v1311, %v1490
    %v1492 = vand.u32 %v1491, 4294901760
    %1493 = vmatpush.msra.mxu0 %v1492
    %v1494 = vand.u32 %v1310, 4294901760
    %v1495 = vsub.f32 %v1310, %v1494
    %v1496 = vand.u32 %v1495, 4294901760
    %1497 = vmatpush.msra.mxu0 %v1496
    %v1498 = vand.u32 %v1315, 4294901760
    %1499 = vmatmul.f32.gmra.mxu0 %v1498
    %v1500 = vpop.f32.mrf.mxu0
    %v1501 = vadd.f32 %v1462, %v1500
    %v1502 = vand.u32 %v1318, 4294901760
    %1503 = vmatmul.f32.gmra.mxu0 %v1502
    %v1504 = vpop.f32.mrf.mxu0
    %v1505 = vadd.f32 %v1468, %v1504
    %1506 = vdwg.mxu0
    %1507 = vmatpush.msra.mxu0 0.0
    %1508 = vmatpush.msra.mxu0 0.0
    %1509 = vmatpush.msra.mxu0 0.0
    %1510 = vmatpush.msra.mxu0 0.0
    %1511 = vmatpush.msra.mxu0 0.0
    %1512 = vmatpush.msra.mxu0 0.0
    %1513 = vmatpush.msra.mxu0 0.0
    %1514 = vmatpush.msra.mxu0 0.0
    %1515 = vmatpush.msra.mxu0 0.0
    %1516 = vmatpush.msra.mxu0 0.0
    %1517 = vmatpush.msra.mxu0 0.0
    %1518 = vmatpush.msra.mxu0 0.0
    %v1519 = vand.u32 %v1313, 4294901760
    %1520 = vmatpush.msra.mxu0 %v1519
    %v1521 = vand.u32 %v1312, 4294901760
    %1522 = vmatpush.msra.mxu0 %v1521
    %v1523 = vand.u32 %v1311, 4294901760
    %1524 = vmatpush.msra.mxu0 %v1523
    %v1525 = vand.u32 %v1310, 4294901760
    %1526 = vmatpush.msra.mxu0 %v1525
    %v1527 = vand.u32 %v1315, 4294901760
    %1528 = vmatmul.f32.gmra.mxu0 %v1527
    %v1529 = vpop.f32.mrf.mxu0
    %v1530 = vadd.f32 %v1501, %v1529
    %v1531 = vand.u32 %v1318, 4294901760
    %1532 = vmatmul.f32.gmra.mxu0 %v1531
    %v1533 = vpop.f32.mrf.mxu0
    %v1534 = vadd.f32 %v1505, %v1533
    %1535 = vdwg.mxu0
    %v1536 = vadd.f32 %v1305, %v1530
    %v1537 = vadd.f32 %v1306, %v1534
    %v1538 = vld [vmem:[#allocation2 + $0xb] sm:$0xff]
    %v1539 = vld [vmem:[#allocation2 + $0x13] sm:$0xff]
    %s1540 = scalar_lea.vmem %s0, 192
    %v1541 = vld [vmem:[%s1540] sm:$0xff]
    %v1542 = vld [vmem:[%s1540 + $0x8] sm:$0xff]
    %v1543 = vld [vmem:[%s1540 + $0x10] sm:$0xff]
    %v1544 = vld [vmem:[%s1540 + $0x18] sm:$0xff]
    %v1546 = vsel %vm169, %v1538, 0
    %v1549 = vsel %vm169, %v1539, 0
    %1551 = vmatpush.msra.mxu0 0.0
    %1552 = vmatpush.msra.mxu0 0.0
    %1553 = vmatpush.msra.mxu0 0.0
    %1554 = vmatpush.msra.mxu0 0.0
    %1555 = vmatpush.msra.mxu0 0.0
    %1556 = vmatpush.msra.mxu0 0.0
    %1557 = vmatpush.msra.mxu0 0.0
    %1558 = vmatpush.msra.mxu0 0.0
    %1559 = vmatpush.msra.mxu0 0.0
    %1560 = vmatpush.msra.mxu0 0.0
    %1561 = vmatpush.msra.mxu0 0.0
    %1562 = vmatpush.msra.mxu0 0.0
    %v1563 = vand.u32 %v1544, 4294901760
    %1564 = vmatpush.msra.mxu0 %v1563
    %v1565 = vand.u32 %v1543, 4294901760
    %1566 = vmatpush.msra.mxu0 %v1565
    %v1567 = vand.u32 %v1542, 4294901760
    %1568 = vmatpush.msra.mxu0 %v1567
    %v1569 = vand.u32 %v1541, 4294901760
    %1570 = vmatpush.msra.mxu0 %v1569
    %v1571 = vand.u32 %v1546, 4294901760
    %v1572 = vsub.f32 %v1546, %v1571
    %v1573 = vand.u32 %v1572, 4294901760
    %v1574 = vsub.f32 %v1572, %v1573
    %v1575 = vand.u32 %v1574, 4294901760
    %1576 = vmatmul.f32.gmra.mxu0 %v1575
    %v1577 = vpop.f32.mrf.mxu0
    %v1578 = vadd.f32 0.0, %v1577
    %v1579 = vand.u32 %v1549, 4294901760
    %v1580 = vsub.f32 %v1549, %v1579
    %v1581 = vand.u32 %v1580, 4294901760
    %v1582 = vsub.f32 %v1580, %v1581
    %v1583 = vand.u32 %v1582, 4294901760
    %1584 = vmatmul.f32.gmra.mxu0 %v1583
    %v1585 = vpop.f32.mrf.mxu0
    %v1586 = vadd.f32 0.0, %v1585
    %1587 = vdwg.mxu0
    %1588 = vmatpush.msra.mxu0 0.0
    %1589 = vmatpush.msra.mxu0 0.0
    %1590 = vmatpush.msra.mxu0 0.0
    %1591 = vmatpush.msra.mxu0 0.0
    %1592 = vmatpush.msra.mxu0 0.0
    %1593 = vmatpush.msra.mxu0 0.0
    %1594 = vmatpush.msra.mxu0 0.0
    %1595 = vmatpush.msra.mxu0 0.0
    %1596 = vmatpush.msra.mxu0 0.0
    %1597 = vmatpush.msra.mxu0 0.0
    %1598 = vmatpush.msra.mxu0 0.0
    %1599 = vmatpush.msra.mxu0 0.0
    %v1600 = vand.u32 %v1544, 4294901760
    %v1601 = vsub.f32 %v1544, %v1600
    %v1602 = vand.u32 %v1601, 4294901760
    %v1603 = vsub.f32 %v1601, %v1602
    %v1604 = vand.u32 %v1603, 4294901760
    %1605 = vmatpush.msra.mxu0 %v1604
    %v1606 = vand.u32 %v1543, 4294901760
    %v1607 = vsub.f32 %v1543, %v1606
    %v1608 = vand.u32 %v1607, 4294901760
    %v1609 = vsub.f32 %v1607, %v1608
    %v1610 = vand.u32 %v1609, 4294901760
    %1611 = vmatpush.msra.mxu0 %v1610
    %v1612 = vand.u32 %v1542, 4294901760
    %v1613 = vsub.f32 %v1542, %v1612
    %v1614 = vand.u32 %v1613, 4294901760
    %v1615 = vsub.f32 %v1613, %v1614
    %v1616 = vand.u32 %v1615, 4294901760
    %1617 = vmatpush.msra.mxu0 %v1616
    %v1618 = vand.u32 %v1541, 4294901760
    %v1619 = vsub.f32 %v1541, %v1618
    %v1620 = vand.u32 %v1619, 4294901760
    %v1621 = vsub.f32 %v1619, %v1620
    %v1622 = vand.u32 %v1621, 4294901760
    %1623 = vmatpush.msra.mxu0 %v1622
    %v1624 = vand.u32 %v1546, 4294901760
    %1625 = vmatmul.f32.gmra.mxu0 %v1624
    %v1626 = vpop.f32.mrf.mxu0
    %v1627 = vadd.f32 %v1578, %v1626
    %v1628 = vand.u32 %v1549, 4294901760
    %1629 = vmatmul.f32.gmra.mxu0 %v1628
    %v1630 = vpop.f32.mrf.mxu0
    %v1631 = vadd.f32 %v1586, %v1630
    %1632 = vdwg.mxu0
    %1633 = vmatpush.msra.mxu0 0.0
    %1634 = vmatpush.msra.mxu0 0.0
    %1635 = vmatpush.msra.mxu0 0.0
    %1636 = vmatpush.msra.mxu0 0.0
    %1637 = vmatpush.msra.mxu0 0.0
    %1638 = vmatpush.msra.mxu0 0.0
    %1639 = vmatpush.msra.mxu0 0.0
    %1640 = vmatpush.msra.mxu0 0.0
    %1641 = vmatpush.msra.mxu0 0.0
    %1642 = vmatpush.msra.mxu0 0.0
    %1643 = vmatpush.msra.mxu0 0.0
    %1644 = vmatpush.msra.mxu0 0.0
    %v1645 = vand.u32 %v1544, 4294901760
    %v1646 = vsub.f32 %v1544, %v1645
    %1647 = vmatpush.msra.mxu0 %v1646
    %v1648 = vand.u32 %v1543, 4294901760
    %v1649 = vsub.f32 %v1543, %v1648
    %1650 = vmatpush.msra.mxu0 %v1649
    %v1651 = vand.u32 %v1542, 4294901760
    %v1652 = vsub.f32 %v1542, %v1651
    %1653 = vmatpush.msra.mxu0 %v1652
    %v1654 = vand.u32 %v1541, 4294901760
    %v1655 = vsub.f32 %v1541, %v1654
    %1656 = vmatpush.msra.mxu0 %v1655
    %v1657 = vand.u32 %v1546, 4294901760
    %v1658 = vsub.f32 %v1546, %v1657
    %1659 = vmatmul.f32.gmra.mxu0 %v1658
    %v1660 = vpop.f32.mrf.mxu0
    %v1661 = vadd.f32 %v1627, %v1660
    %v1662 = vand.u32 %v1549, 4294901760
    %v1663 = vsub.f32 %v1549, %v1662
    %1664 = vmatmul.f32.gmra.mxu0 %v1663
    %v1665 = vpop.f32.mrf.mxu0
    %v1666 = vadd.f32 %v1631, %v1665
    %1667 = vdwg.mxu0
    %1668 = vmatpush.msra.mxu0 0.0
    %1669 = vmatpush.msra.mxu0 0.0
    %1670 = vmatpush.msra.mxu0 0.0
    %1671 = vmatpush.msra.mxu0 0.0
    %1672 = vmatpush.msra.mxu0 0.0
    %1673 = vmatpush.msra.mxu0 0.0
    %1674 = vmatpush.msra.mxu0 0.0
    %1675 = vmatpush.msra.mxu0 0.0
    %1676 = vmatpush.msra.mxu0 0.0
    %1677 = vmatpush.msra.mxu0 0.0
    %1678 = vmatpush.msra.mxu0 0.0
    %1679 = vmatpush.msra.mxu0 0.0
    %v1680 = vand.u32 %v1544, 4294901760
    %1681 = vmatpush.msra.mxu0 %v1680
    %v1682 = vand.u32 %v1543, 4294901760
    %1683 = vmatpush.msra.mxu0 %v1682
    %v1684 = vand.u32 %v1542, 4294901760
    %1685 = vmatpush.msra.mxu0 %v1684
    %v1686 = vand.u32 %v1541, 4294901760
    %1687 = vmatpush.msra.mxu0 %v1686
    %v1688 = vand.u32 %v1546, 4294901760
    %v1689 = vsub.f32 %v1546, %v1688
    %v1690 = vand.u32 %v1689, 4294901760
    %1691 = vmatmul.f32.gmra.mxu0 %v1690
    %v1692 = vpop.f32.mrf.mxu0
    %v1693 = vadd.f32 %v1661, %v1692
    %v1694 = vand.u32 %v1549, 4294901760
    %v1695 = vsub.f32 %v1549, %v1694
    %v1696 = vand.u32 %v1695, 4294901760
    %1697 = vmatmul.f32.gmra.mxu0 %v1696
    %v1698 = vpop.f32.mrf.mxu0
    %v1699 = vadd.f32 %v1666, %v1698
    %1700 = vdwg.mxu0
    %1701 = vmatpush.msra.mxu0 0.0
    %1702 = vmatpush.msra.mxu0 0.0
    %1703 = vmatpush.msra.mxu0 0.0
    %1704 = vmatpush.msra.mxu0 0.0
    %1705 = vmatpush.msra.mxu0 0.0
    %1706 = vmatpush.msra.mxu0 0.0
    %1707 = vmatpush.msra.mxu0 0.0
    %1708 = vmatpush.msra.mxu0 0.0
    %1709 = vmatpush.msra.mxu0 0.0
    %1710 = vmatpush.msra.mxu0 0.0
    %1711 = vmatpush.msra.mxu0 0.0
    %1712 = vmatpush.msra.mxu0 0.0
    %v1713 = vand.u32 %v1544, 4294901760
    %v1714 = vsub.f32 %v1544, %v1713
    %v1715 = vand.u32 %v1714, 4294901760
    %1716 = vmatpush.msra.mxu0 %v1715
    %v1717 = vand.u32 %v1543, 4294901760
    %v1718 = vsub.f32 %v1543, %v1717
    %v1719 = vand.u32 %v1718, 4294901760
    %1720 = vmatpush.msra.mxu0 %v1719
    %v1721 = vand.u32 %v1542, 4294901760
    %v1722 = vsub.f32 %v1542, %v1721
    %v1723 = vand.u32 %v1722, 4294901760
    %1724 = vmatpush.msra.mxu0 %v1723
    %v1725 = vand.u32 %v1541, 4294901760
    %v1726 = vsub.f32 %v1541, %v1725
    %v1727 = vand.u32 %v1726, 4294901760
    %1728 = vmatpush.msra.mxu0 %v1727
    %v1729 = vand.u32 %v1546, 4294901760
    %1730 = vmatmul.f32.gmra.mxu0 %v1729
    %v1731 = vpop.f32.mrf.mxu0
    %v1732 = vadd.f32 %v1693, %v1731
    %v1733 = vand.u32 %v1549, 4294901760
    %1734 = vmatmul.f32.gmra.mxu0 %v1733
    %v1735 = vpop.f32.mrf.mxu0
    %v1736 = vadd.f32 %v1699, %v1735
    %1737 = vdwg.mxu0
    %1738 = vmatpush.msra.mxu0 0.0
    %1739 = vmatpush.msra.mxu0 0.0
    %1740 = vmatpush.msra.mxu0 0.0
    %1741 = vmatpush.msra.mxu0 0.0
    %1742 = vmatpush.msra.mxu0 0.0
    %1743 = vmatpush.msra.mxu0 0.0
    %1744 = vmatpush.msra.mxu0 0.0
    %1745 = vmatpush.msra.mxu0 0.0
    %1746 = vmatpush.msra.mxu0 0.0
    %1747 = vmatpush.msra.mxu0 0.0
    %1748 = vmatpush.msra.mxu0 0.0
    %1749 = vmatpush.msra.mxu0 0.0
    %v1750 = vand.u32 %v1544, 4294901760
    %1751 = vmatpush.msra.mxu0 %v1750
    %v1752 = vand.u32 %v1543, 4294901760
    %1753 = vmatpush.msra.mxu0 %v1752
    %v1754 = vand.u32 %v1542, 4294901760
    %1755 = vmatpush.msra.mxu0 %v1754
    %v1756 = vand.u32 %v1541, 4294901760
    %1757 = vmatpush.msra.mxu0 %v1756
    %v1758 = vand.u32 %v1546, 4294901760
    %1759 = vmatmul.f32.gmra.mxu0 %v1758
    %v1760 = vpop.f32.mrf.mxu0
    %v1761 = vadd.f32 %v1732, %v1760
    %v1762 = vand.u32 %v1549, 4294901760
    %1763 = vmatmul.f32.gmra.mxu0 %v1762
    %v1764 = vpop.f32.mrf.mxu0
    %v1765 = vadd.f32 %v1736, %v1764
    %1766 = vdwg.mxu0
    %v1767 = vadd.f32 %v1536, %v1761
    %v1768 = vadd.f32 %v1537, %v1765
    %v1769 = vxor.u32 %v1767, 2147483648
    %v1770 = vxor.u32 %v1768, 2147483648
    %v1771 = vmul.f32 %v1769, 1.442695
    %v1772 = vpow.pop %v1771
    %v1773 = vmul.f32 %v1770, 1.442695
    %v1774 = vpow.pop %v1773
    %v1775 = vadd.f32 %v1772, 1.0
    %v1776 = vadd.f32 %v1774, 1.0
    %v1777 = vrcp.pop %v1775
    %v1778 = vmul.f32 %v1775, %v1777
    %v1779 = vsub.f32 1.0, %v1778
    %v1780 = vmul.f32 %v1777, %v1779
    %v1781 = vadd.f32 %v1777, %v1780
    %vm1782 = vweird.f32 %v1775
    %vm1783 = vweird.f32 %v1777
    %vm1784 = vmor %vm1782, %vm1783
    %v1785 = vsel %vm1784, %v1777, %v1781
    %v1786 = vand.u32 2147483647, %v1775
    %vm1787 = vcmp.eq.f32.partialorder %v1786, 8.507059e+37
    %v1788 = vand.u32 %v1775, 2147483648
    %v1789 = vor.u32 1.1754944e-38, %v1788
    %v1790 = vsel %vm1787, %v1789, %v1785
    %v1791 = vmul.f32 1.0, %v1790
    %v1792 = vrcp.pop %v1776
    %v1793 = vmul.f32 %v1776, %v1792
    %v1794 = vsub.f32 1.0, %v1793
    %v1795 = vmul.f32 %v1792, %v1794
    %v1796 = vadd.f32 %v1792, %v1795
    %vm1797 = vweird.f32 %v1776
    %vm1798 = vweird.f32 %v1792
    %vm1799 = vmor %vm1797, %vm1798
    %v1800 = vsel %vm1799, %v1792, %v1796
    %v1801 = vand.u32 2147483647, %v1776
    %vm1802 = vcmp.eq.f32.partialorder %v1801, 8.507059e+37
    %v1803 = vand.u32 %v1776, 2147483648
    %v1804 = vor.u32 1.1754944e-38, %v1803
    %v1805 = vsel %vm1802, %v1804, %v1800
    %v1806 = vmul.f32 1.0, %v1805
    %1807 = vst.msk [vmem:[#allocation3] sm:$0xff] %vm35, %v1791
    %1808 = vst.msk [vmem:[#allocation3 + $0x8] sm:$0xff] %vm35, %v1806
    %s1809 = scalar_lea.vmem %s1, 8
    %v1810 = vld [vmem:[%s1809] ss:$4 sm:$0x3]
    %v1811 = vadd.f32 %v1810, 0.0
    %s1812 = scalar_lea.vmem %s1809, 1
    %v1813 = vld [vmem:[%s1812] ss:$4 sm:$0x3]
    %v1814 = vadd.f32 %v1811, %v1813
    %v1815 = vmax.f32 %v1810, %v1813
    %s1816 = scalar_lea.vmem %s1809, 2
    %v1817 = vld [vmem:[%s1816] ss:$4 sm:$0x3]
    %v1818 = vadd.f32 %v1814, %v1817
    %v1819 = vmax.f32 %v1815, %v1817
    %s1820 = scalar_lea.vmem %s1809, 3
    %v1821 = vld [vmem:[%s1820] ss:$4 sm:$0x3]
    %v1822 = vadd.f32 %v1818, %v1821
    %v1823 = vmax.f32 %v1819, %v1821
    %v1824 = vmul.f32 %v1822, 0.25
    %v1826 = vperm.slane %v1823, 0
    %1827 = vrot.lane.b32.xlu0 %v1826, 16
    %v1828 = vpop.permute.xlu0 %1827
    %v1830 = vsel %vm35, %v1824, %v1828
    %1831 = vst.msk [vmem:[#allocation2 + $0x8] sm:$0x1] %vm37, %v1830
    %v1833 = vperm.slane %v1824, 0
    %1834 = vrot.lane.b32.xlu0 %v1833, 112
    %v1835 = vpop.permute.xlu0 %1834
    %v1837 = vsel %vm35, %v1835, %v1823
    %1838 = vst.msk [vmem:[#allocation2 + $0x9] sm:$0x1] %vm37, %v1837
    %1839 = vrot.lane.b32.xlu0 %v1833, 96
    %v1840 = vpop.permute.xlu0 %1839
    %1842 = vrot.lane.b32.xlu0 %v1826, 112
    %v1843 = vpop.permute.xlu0 %1842
    %v1845 = vsel %vm35, %v1840, %v1843
    %1846 = vst.msk [vmem:[#allocation2 + $0xa] sm:$0x1] %vm37, %v1845
    %1847 = vrot.lane.b32.xlu0 %v1833, 80
    %v1848 = vpop.permute.xlu0 %1847
    %1850 = vrot.lane.b32.xlu0 %v1826, 96
    %v1851 = vpop.permute.xlu0 %1850
    %v1853 = vsel %vm35, %v1848, %v1851
    %1854 = vst.msk [vmem:[#allocation2 + $0xb] sm:$0x1] %vm37, %v1853
    %1855 = vrot.lane.b32.xlu0 %v1833, 64
    %v1856 = vpop.permute.xlu0 %1855
    %1858 = vrot.lane.b32.xlu0 %v1826, 80
    %v1859 = vpop.permute.xlu0 %1858
    %v1861 = vsel %vm35, %v1856, %v1859
    %1862 = vst.msk [vmem:[#allocation2 + $0xc] sm:$0x1] %vm37, %v1861
    %1863 = vrot.lane.b32.xlu0 %v1833, 48
    %v1864 = vpop.permute.xlu0 %1863
    %1866 = vrot.lane.b32.xlu0 %v1826, 64
    %v1867 = vpop.permute.xlu0 %1866
    %v1869 = vsel %vm35, %v1864, %v1867
    %1870 = vst.msk [vmem:[#allocation2 + $0xd] sm:$0x1] %vm37, %v1869
    %1871 = vrot.lane.b32.xlu0 %v1833, 32
    %v1872 = vpop.permute.xlu0 %1871
    %1874 = vrot.lane.b32.xlu0 %v1826, 48
    %v1875 = vpop.permute.xlu0 %1874
    %v1877 = vsel %vm35, %v1872, %v1875
    %1878 = vst.msk [vmem:[#allocation2 + $0xe] sm:$0x1] %vm37, %v1877
    %1879 = vrot.lane.b32.xlu0 %v1833, 16
    %v1880 = vpop.permute.xlu0 %1879
    %1882 = vrot.lane.b32.xlu0 %v1826, 32
    %v1883 = vpop.permute.xlu0 %1882
    %v1885 = vsel %vm35, %v1880, %v1883
    %1886 = vst.msk [vmem:[#allocation2 + $0xf] sm:$0x1] %vm37, %v1885
    %v1887 = vperm.slane %v1824, 1
    %v1889 = vperm.slane %v1823, 1
    %1890 = vrot.lane.b32.xlu0 %v1889, 16
    %v1891 = vpop.permute.xlu0 %1890
    %v1893 = vsel %vm35, %v1887, %v1891
    %1894 = vst.msk [vmem:[#allocation2 + $0x10] sm:$0x1] %vm37, %v1893
    %1895 = vrot.lane.b32.xlu0 %v1887, 112
    %v1896 = vpop.permute.xlu0 %1895
    %v1899 = vsel %vm35, %v1896, %v1889
    %1900 = vst.msk [vmem:[#allocation2 + $0x11] sm:$0x1] %vm37, %v1899
    %1901 = vrot.lane.b32.xlu0 %v1887, 96
    %v1902 = vpop.permute.xlu0 %1901
    %1904 = vrot.lane.b32.xlu0 %v1889, 112
    %v1905 = vpop.permute.xlu0 %1904
    %v1907 = vsel %vm35, %v1902, %v1905
    %1908 = vst.msk [vmem:[#allocation2 + $0x12] sm:$0x1] %vm37, %v1907
    %1909 = vrot.lane.b32.xlu0 %v1887, 80
    %v1910 = vpop.permute.xlu0 %1909
    %1912 = vrot.lane.b32.xlu0 %v1889, 96
    %v1913 = vpop.permute.xlu0 %1912
    %v1915 = vsel %vm35, %v1910, %v1913
    %1916 = vst.msk [vmem:[#allocation2 + $0x13] sm:$0x1] %vm37, %v1915
    %1917 = vrot.lane.b32.xlu0 %v1887, 64
    %v1918 = vpop.permute.xlu0 %1917
    %1920 = vrot.lane.b32.xlu0 %v1889, 80
    %v1921 = vpop.permute.xlu0 %1920
    %v1923 = vsel %vm35, %v1918, %v1921
    %1924 = vst.msk [vmem:[#allocation2 + $0x14] sm:$0x1] %vm37, %v1923
    %1925 = vrot.lane.b32.xlu0 %v1887, 48
    %v1926 = vpop.permute.xlu0 %1925
    %1928 = vrot.lane.b32.xlu0 %v1889, 64
    %v1929 = vpop.permute.xlu0 %1928
    %v1931 = vsel %vm35, %v1926, %v1929
    %1932 = vst.msk [vmem:[#allocation2 + $0x15] sm:$0x1] %vm37, %v1931
    %1933 = vrot.lane.b32.xlu0 %v1887, 32
    %v1934 = vpop.permute.xlu0 %1933
    %1936 = vrot.lane.b32.xlu0 %v1889, 48
    %v1937 = vpop.permute.xlu0 %1936
    %v1939 = vsel %vm35, %v1934, %v1937
    %1940 = vst.msk [vmem:[#allocation2 + $0x16] sm:$0x1] %vm37, %v1939
    %1941 = vrot.lane.b32.xlu0 %v1887, 16
    %v1942 = vpop.permute.xlu0 %1941
    %1944 = vrot.lane.b32.xlu0 %v1889, 32
    %v1945 = vpop.permute.xlu0 %1944
    %v1947 = vsel %vm35, %v1942, %v1945
    %1948 = vst.msk [vmem:[#allocation2 + $0x17] sm:$0x1] %vm37, %v1947
    %v1949 = vld [vmem:[#allocation2 + $0x5] sm:$0xff]
    %v1950 = vld [vmem:[#allocation2 + $0xd] sm:$0xff]
    %v1951 = vld [vmem:[%s0] sm:$0xff]
    %v1952 = vld [vmem:[%s0 + $0x8] sm:$0xff]
    %v1953 = vld [vmem:[%s0 + $0x10] sm:$0xff]
    %v1954 = vld [vmem:[%s0 + $0x18] sm:$0xff]
    %v1955 = vld [vmem:[#allocation2 + $0x6] sm:$0xff]
    %v1956 = vld [vmem:[#allocation2 + $0xe] sm:$0xff]
    %v1957 = vld [vmem:[%s164] sm:$0xff]
    %v1958 = vld [vmem:[%s164 + $0x8] sm:$0xff]
    %v1959 = vld [vmem:[%s164 + $0x10] sm:$0xff]
    %v1960 = vld [vmem:[%s164 + $0x18] sm:$0xff]
    %v1962 = vsel %vm169, %v1955, 0
    %v1965 = vsel %vm169, %v1956, 0
    %1967 = vmatpush.msra.mxu0 0.0
    %1968 = vmatpush.msra.mxu0 0.0
    %1969 = vmatpush.msra.mxu0 0.0
    %1970 = vmatpush.msra.mxu0 0.0
    %1971 = vmatpush.msra.mxu0 0.0
    %1972 = vmatpush.msra.mxu0 0.0
    %1973 = vmatpush.msra.mxu0 0.0
    %1974 = vmatpush.msra.mxu0 0.0
    %1975 = vmatpush.msra.mxu0 0.0
    %1976 = vmatpush.msra.mxu0 0.0
    %1977 = vmatpush.msra.mxu0 0.0
    %1978 = vmatpush.msra.mxu0 0.0
    %v1979 = vand.u32 %v1960, 4294901760
    %1980 = vmatpush.msra.mxu0 %v1979
    %v1981 = vand.u32 %v1959, 4294901760
    %1982 = vmatpush.msra.mxu0 %v1981
    %v1983 = vand.u32 %v1958, 4294901760
    %1984 = vmatpush.msra.mxu0 %v1983
    %v1985 = vand.u32 %v1957, 4294901760
    %1986 = vmatpush.msra.mxu0 %v1985
    %v1987 = vand.u32 %v1962, 4294901760
    %v1988 = vsub.f32 %v1962, %v1987
    %v1989 = vand.u32 %v1988, 4294901760
    %v1990 = vsub.f32 %v1988, %v1989
    %v1991 = vand.u32 %v1990, 4294901760
    %1992 = vmatmul.f32.gmra.mxu0 %v1991
    %v1993 = vpop.f32.mrf.mxu0
    %v1994 = vadd.f32 0.0, %v1993
    %v1995 = vand.u32 %v1965, 4294901760
    %v1996 = vsub.f32 %v1965, %v1995
    %v1997 = vand.u32 %v1996, 4294901760
    %v1998 = vsub.f32 %v1996, %v1997
    %v1999 = vand.u32 %v1998, 4294901760
    %2000 = vmatmul.f32.gmra.mxu0 %v1999
    %v2001 = vpop.f32.mrf.mxu0
    %v2002 = vadd.f32 0.0, %v2001
    %2003 = vdwg.mxu0
    %2004 = vmatpush.msra.mxu0 0.0
    %2005 = vmatpush.msra.mxu0 0.0
    %2006 = vmatpush.msra.mxu0 0.0
    %2007 = vmatpush.msra.mxu0 0.0
    %2008 = vmatpush.msra.mxu0 0.0
    %2009 = vmatpush.msra.mxu0 0.0
    %2010 = vmatpush.msra.mxu0 0.0
    %2011 = vmatpush.msra.mxu0 0.0
    %2012 = vmatpush.msra.mxu0 0.0
    %2013 = vmatpush.msra.mxu0 0.0
    %2014 = vmatpush.msra.mxu0 0.0
    %2015 = vmatpush.msra.mxu0 0.0
    %v2016 = vand.u32 %v1960, 4294901760
    %v2017 = vsub.f32 %v1960, %v2016
    %v2018 = vand.u32 %v2017, 4294901760
    %v2019 = vsub.f32 %v2017, %v2018
    %v2020 = vand.u32 %v2019, 4294901760
    %2021 = vmatpush.msra.mxu0 %v2020
    %v2022 = vand.u32 %v1959, 4294901760
    %v2023 = vsub.f32 %v1959, %v2022
    %v2024 = vand.u32 %v2023, 4294901760
    %v2025 = vsub.f32 %v2023, %v2024
    %v2026 = vand.u32 %v2025, 4294901760
    %2027 = vmatpush.msra.mxu0 %v2026
    %v2028 = vand.u32 %v1958, 4294901760
    %v2029 = vsub.f32 %v1958, %v2028
    %v2030 = vand.u32 %v2029, 4294901760
    %v2031 = vsub.f32 %v2029, %v2030
    %v2032 = vand.u32 %v2031, 4294901760
    %2033 = vmatpush.msra.mxu0 %v2032
    %v2034 = vand.u32 %v1957, 4294901760
    %v2035 = vsub.f32 %v1957, %v2034
    %v2036 = vand.u32 %v2035, 4294901760
    %v2037 = vsub.f32 %v2035, %v2036
    %v2038 = vand.u32 %v2037, 4294901760
    %2039 = vmatpush.msra.mxu0 %v2038
    %v2040 = vand.u32 %v1962, 4294901760
    %2041 = vmatmul.f32.gmra.mxu0 %v2040
    %v2042 = vpop.f32.mrf.mxu0
    %v2043 = vadd.f32 %v1994, %v2042
    %v2044 = vand.u32 %v1965, 4294901760
    %2045 = vmatmul.f32.gmra.mxu0 %v2044
    %v2046 = vpop.f32.mrf.mxu0
    %v2047 = vadd.f32 %v2002, %v2046
    %2048 = vdwg.mxu0
    %2049 = vmatpush.msra.mxu0 0.0
    %2050 = vmatpush.msra.mxu0 0.0
    %2051 = vmatpush.msra.mxu0 0.0
    %2052 = vmatpush.msra.mxu0 0.0
    %2053 = vmatpush.msra.mxu0 0.0
    %2054 = vmatpush.msra.mxu0 0.0
    %2055 = vmatpush.msra.mxu0 0.0
    %2056 = vmatpush.msra.mxu0 0.0
    %2057 = vmatpush.msra.mxu0 0.0
    %2058 = vmatpush.msra.mxu0 0.0
    %2059 = vmatpush.msra.mxu0 0.0
    %2060 = vmatpush.msra.mxu0 0.0
    %v2061 = vand.u32 %v1960, 4294901760
    %v2062 = vsub.f32 %v1960, %v2061
    %2063 = vmatpush.msra.mxu0 %v2062
    %v2064 = vand.u32 %v1959, 4294901760
    %v2065 = vsub.f32 %v1959, %v2064
    %2066 = vmatpush.msra.mxu0 %v2065
    %v2067 = vand.u32 %v1958, 4294901760
    %v2068 = vsub.f32 %v1958, %v2067
    %2069 = vmatpush.msra.mxu0 %v2068
    %v2070 = vand.u32 %v1957, 4294901760
    %v2071 = vsub.f32 %v1957, %v2070
    %2072 = vmatpush.msra.mxu0 %v2071
    %v2073 = vand.u32 %v1962, 4294901760
    %v2074 = vsub.f32 %v1962, %v2073
    %2075 = vmatmul.f32.gmra.mxu0 %v2074
    %v2076 = vpop.f32.mrf.mxu0
    %v2077 = vadd.f32 %v2043, %v2076
    %v2078 = vand.u32 %v1965, 4294901760
    %v2079 = vsub.f32 %v1965, %v2078
    %2080 = vmatmul.f32.gmra.mxu0 %v2079
    %v2081 = vpop.f32.mrf.mxu0
    %v2082 = vadd.f32 %v2047, %v2081
    %2083 = vdwg.mxu0
    %2084 = vmatpush.msra.mxu0 0.0
    %2085 = vmatpush.msra.mxu0 0.0
    %2086 = vmatpush.msra.mxu0 0.0
    %2087 = vmatpush.msra.mxu0 0.0
    %2088 = vmatpush.msra.mxu0 0.0
    %2089 = vmatpush.msra.mxu0 0.0
    %2090 = vmatpush.msra.mxu0 0.0
    %2091 = vmatpush.msra.mxu0 0.0
    %2092 = vmatpush.msra.mxu0 0.0
    %2093 = vmatpush.msra.mxu0 0.0
    %2094 = vmatpush.msra.mxu0 0.0
    %2095 = vmatpush.msra.mxu0 0.0
    %v2096 = vand.u32 %v1960, 4294901760
    %2097 = vmatpush.msra.mxu0 %v2096
    %v2098 = vand.u32 %v1959, 4294901760
    %2099 = vmatpush.msra.mxu0 %v2098
    %v2100 = vand.u32 %v1958, 4294901760
    %2101 = vmatpush.msra.mxu0 %v2100
    %v2102 = vand.u32 %v1957, 4294901760
    %2103 = vmatpush.msra.mxu0 %v2102
    %v2104 = vand.u32 %v1962, 4294901760
    %v2105 = vsub.f32 %v1962, %v2104
    %v2106 = vand.u32 %v2105, 4294901760
    %2107 = vmatmul.f32.gmra.mxu0 %v2106
    %v2108 = vpop.f32.mrf.mxu0
    %v2109 = vadd.f32 %v2077, %v2108
    %v2110 = vand.u32 %v1965, 4294901760
    %v2111 = vsub.f32 %v1965, %v2110
    %v2112 = vand.u32 %v2111, 4294901760
    %2113 = vmatmul.f32.gmra.mxu0 %v2112
    %v2114 = vpop.f32.mrf.mxu0
    %v2115 = vadd.f32 %v2082, %v2114
    %2116 = vdwg.mxu0
    %2117 = vmatpush.msra.mxu0 0.0
    %2118 = vmatpush.msra.mxu0 0.0
    %2119 = vmatpush.msra.mxu0 0.0
    %2120 = vmatpush.msra.mxu0 0.0
    %2121 = vmatpush.msra.mxu0 0.0
    %2122 = vmatpush.msra.mxu0 0.0
    %2123 = vmatpush.msra.mxu0 0.0
    %2124 = vmatpush.msra.mxu0 0.0
    %2125 = vmatpush.msra.mxu0 0.0
    %2126 = vmatpush.msra.mxu0 0.0
    %2127 = vmatpush.msra.mxu0 0.0
    %2128 = vmatpush.msra.mxu0 0.0
    %v2129 = vand.u32 %v1960, 4294901760
    %v2130 = vsub.f32 %v1960, %v2129
    %v2131 = vand.u32 %v2130, 4294901760
    %2132 = vmatpush.msra.mxu0 %v2131
    %v2133 = vand.u32 %v1959, 4294901760
    %v2134 = vsub.f32 %v1959, %v2133
    %v2135 = vand.u32 %v2134, 4294901760
    %2136 = vmatpush.msra.mxu0 %v2135
    %v2137 = vand.u32 %v1958, 4294901760
    %v2138 = vsub.f32 %v1958, %v2137
    %v2139 = vand.u32 %v2138, 4294901760
    %2140 = vmatpush.msra.mxu0 %v2139
    %v2141 = vand.u32 %v1957, 4294901760
    %v2142 = vsub.f32 %v1957, %v2141
    %v2143 = vand.u32 %v2142, 4294901760
    %2144 = vmatpush.msra.mxu0 %v2143
    %v2145 = vand.u32 %v1962, 4294901760
    %2146 = vmatmul.f32.gmra.mxu0 %v2145
    %v2147 = vpop.f32.mrf.mxu0
    %v2148 = vadd.f32 %v2109, %v2147
    %v2149 = vand.u32 %v1965, 4294901760
    %2150 = vmatmul.f32.gmra.mxu0 %v2149
    %v2151 = vpop.f32.mrf.mxu0
    %v2152 = vadd.f32 %v2115, %v2151
    %2153 = vdwg.mxu0
    %2154 = vmatpush.msra.mxu0 0.0
    %2155 = vmatpush.msra.mxu0 0.0
    %2156 = vmatpush.msra.mxu0 0.0
    %2157 = vmatpush.msra.mxu0 0.0
    %2158 = vmatpush.msra.mxu0 0.0
    %2159 = vmatpush.msra.mxu0 0.0
    %2160 = vmatpush.msra.mxu0 0.0
    %2161 = vmatpush.msra.mxu0 0.0
    %2162 = vmatpush.msra.mxu0 0.0
    %2163 = vmatpush.msra.mxu0 0.0
    %2164 = vmatpush.msra.mxu0 0.0
    %2165 = vmatpush.msra.mxu0 0.0
    %v2166 = vand.u32 %v1960, 4294901760
    %2167 = vmatpush.msra.mxu0 %v2166
    %v2168 = vand.u32 %v1959, 4294901760
    %2169 = vmatpush.msra.mxu0 %v2168
    %v2170 = vand.u32 %v1958, 4294901760
    %2171 = vmatpush.msra.mxu0 %v2170
    %v2172 = vand.u32 %v1957, 4294901760
    %2173 = vmatpush.msra.mxu0 %v2172
    %v2174 = vand.u32 %v1962, 4294901760
    %2175 = vmatmul.f32.gmra.mxu0 %v2174
    %v2176 = vpop.f32.mrf.mxu0
    %v2177 = vadd.f32 %v2148, %v2176
    %v2178 = vand.u32 %v1965, 4294901760
    %2179 = vmatmul.f32.gmra.mxu0 %v2178
    %v2180 = vpop.f32.mrf.mxu0
    %v2181 = vadd.f32 %v2152, %v2180
    %2182 = vdwg.mxu0
    %v2184 = vsel %vm169, %v1949, 0
    %v2187 = vsel %vm169, %v1950, 0
    %2189 = vmatpush.msra.mxu0 0.0
    %2190 = vmatpush.msra.mxu0 0.0
    %2191 = vmatpush.msra.mxu0 0.0
    %2192 = vmatpush.msra.mxu0 0.0
    %2193 = vmatpush.msra.mxu0 0.0
    %2194 = vmatpush.msra.mxu0 0.0
    %2195 = vmatpush.msra.mxu0 0.0
    %2196 = vmatpush.msra.mxu0 0.0
    %2197 = vmatpush.msra.mxu0 0.0
    %2198 = vmatpush.msra.mxu0 0.0
    %2199 = vmatpush.msra.mxu0 0.0
    %2200 = vmatpush.msra.mxu0 0.0
    %v2201 = vand.u32 %v1954, 4294901760
    %2202 = vmatpush.msra.mxu0 %v2201
    %v2203 = vand.u32 %v1953, 4294901760
    %2204 = vmatpush.msra.mxu0 %v2203
    %v2205 = vand.u32 %v1952, 4294901760
    %2206 = vmatpush.msra.mxu0 %v2205
    %v2207 = vand.u32 %v1951, 4294901760
    %2208 = vmatpush.msra.mxu0 %v2207
    %v2209 = vand.u32 %v2184, 4294901760
    %v2210 = vsub.f32 %v2184, %v2209
    %v2211 = vand.u32 %v2210, 4294901760
    %v2212 = vsub.f32 %v2210, %v2211
    %v2213 = vand.u32 %v2212, 4294901760
    %2214 = vmatmul.f32.gmra.mxu0 %v2213
    %v2215 = vpop.f32.mrf.mxu0
    %v2216 = vadd.f32 %v2177, %v2215
    %v2217 = vand.u32 %v2187, 4294901760
    %v2218 = vsub.f32 %v2187, %v2217
    %v2219 = vand.u32 %v2218, 4294901760
    %v2220 = vsub.f32 %v2218, %v2219
    %v2221 = vand.u32 %v2220, 4294901760
    %2222 = vmatmul.f32.gmra.mxu0 %v2221
    %v2223 = vpop.f32.mrf.mxu0
    %v2224 = vadd.f32 %v2181, %v2223
    %2225 = vdwg.mxu0
    %2226 = vmatpush.msra.mxu0 0.0
    %2227 = vmatpush.msra.mxu0 0.0
    %2228 = vmatpush.msra.mxu0 0.0
    %2229 = vmatpush.msra.mxu0 0.0
    %2230 = vmatpush.msra.mxu0 0.0
    %2231 = vmatpush.msra.mxu0 0.0
    %2232 = vmatpush.msra.mxu0 0.0
    %2233 = vmatpush.msra.mxu0 0.0
    %2234 = vmatpush.msra.mxu0 0.0
    %2235 = vmatpush.msra.mxu0 0.0
    %2236 = vmatpush.msra.mxu0 0.0
    %2237 = vmatpush.msra.mxu0 0.0
    %v2238 = vand.u32 %v1954, 4294901760
    %v2239 = vsub.f32 %v1954, %v2238
    %v2240 = vand.u32 %v2239, 4294901760
    %v2241 = vsub.f32 %v2239, %v2240
    %v2242 = vand.u32 %v2241, 4294901760
    %2243 = vmatpush.msra.mxu0 %v2242
    %v2244 = vand.u32 %v1953, 4294901760
    %v2245 = vsub.f32 %v1953, %v2244
    %v2246 = vand.u32 %v2245, 4294901760
    %v2247 = vsub.f32 %v2245, %v2246
    %v2248 = vand.u32 %v2247, 4294901760
    %2249 = vmatpush.msra.mxu0 %v2248
    %v2250 = vand.u32 %v1952, 4294901760
    %v2251 = vsub.f32 %v1952, %v2250
    %v2252 = vand.u32 %v2251, 4294901760
    %v2253 = vsub.f32 %v2251, %v2252
    %v2254 = vand.u32 %v2253, 4294901760
    %2255 = vmatpush.msra.mxu0 %v2254
    %v2256 = vand.u32 %v1951, 4294901760
    %v2257 = vsub.f32 %v1951, %v2256
    %v2258 = vand.u32 %v2257, 4294901760
    %v2259 = vsub.f32 %v2257, %v2258
    %v2260 = vand.u32 %v2259, 4294901760
    %2261 = vmatpush.msra.mxu0 %v2260
    %v2262 = vand.u32 %v2184, 4294901760
    %2263 = vmatmul.f32.gmra.mxu0 %v2262
    %v2264 = vpop.f32.mrf.mxu0
    %v2265 = vadd.f32 %v2216, %v2264
    %v2266 = vand.u32 %v2187, 4294901760
    %2267 = vmatmul.f32.gmra.mxu0 %v2266
    %v2268 = vpop.f32.mrf.mxu0
    %v2269 = vadd.f32 %v2224, %v2268
    %2270 = vdwg.mxu0
    %2271 = vmatpush.msra.mxu0 0.0
    %2272 = vmatpush.msra.mxu0 0.0
    %2273 = vmatpush.msra.mxu0 0.0
    %2274 = vmatpush.msra.mxu0 0.0
    %2275 = vmatpush.msra.mxu0 0.0
    %2276 = vmatpush.msra.mxu0 0.0
    %2277 = vmatpush.msra.mxu0 0.0
    %2278 = vmatpush.msra.mxu0 0.0
    %2279 = vmatpush.msra.mxu0 0.0
    %2280 = vmatpush.msra.mxu0 0.0
    %2281 = vmatpush.msra.mxu0 0.0
    %2282 = vmatpush.msra.mxu0 0.0
    %v2283 = vand.u32 %v1954, 4294901760
    %v2284 = vsub.f32 %v1954, %v2283
    %2285 = vmatpush.msra.mxu0 %v2284
    %v2286 = vand.u32 %v1953, 4294901760
    %v2287 = vsub.f32 %v1953, %v2286
    %2288 = vmatpush.msra.mxu0 %v2287
    %v2289 = vand.u32 %v1952, 4294901760
    %v2290 = vsub.f32 %v1952, %v2289
    %2291 = vmatpush.msra.mxu0 %v2290
    %v2292 = vand.u32 %v1951, 4294901760
    %v2293 = vsub.f32 %v1951, %v2292
    %2294 = vmatpush.msra.mxu0 %v2293
    %v2295 = vand.u32 %v2184, 4294901760
    %v2296 = vsub.f32 %v2184, %v2295
    %2297 = vmatmul.f32.gmra.mxu0 %v2296
    %v2298 = vpop.f32.mrf.mxu0
    %v2299 = vadd.f32 %v2265, %v2298
    %v2300 = vand.u32 %v2187, 4294901760
    %v2301 = vsub.f32 %v2187, %v2300
    %2302 = vmatmul.f32.gmra.mxu0 %v2301
    %v2303 = vpop.f32.mrf.mxu0
    %v2304 = vadd.f32 %v2269, %v2303
    %2305 = vdwg.mxu0
    %2306 = vmatpush.msra.mxu0 0.0
    %2307 = vmatpush.msra.mxu0 0.0
    %2308 = vmatpush.msra.mxu0 0.0
    %2309 = vmatpush.msra.mxu0 0.0
    %2310 = vmatpush.msra.mxu0 0.0
    %2311 = vmatpush.msra.mxu0 0.0
    %2312 = vmatpush.msra.mxu0 0.0
    %2313 = vmatpush.msra.mxu0 0.0
    %2314 = vmatpush.msra.mxu0 0.0
    %2315 = vmatpush.msra.mxu0 0.0
    %2316 = vmatpush.msra.mxu0 0.0
    %2317 = vmatpush.msra.mxu0 0.0
    %v2318 = vand.u32 %v1954, 4294901760
    %2319 = vmatpush.msra.mxu0 %v2318
    %v2320 = vand.u32 %v1953, 4294901760
    %2321 = vmatpush.msra.mxu0 %v2320
    %v2322 = vand.u32 %v1952, 4294901760
    %2323 = vmatpush.msra.mxu0 %v2322
    %v2324 = vand.u32 %v1951, 4294901760
    %2325 = vmatpush.msra.mxu0 %v2324
    %v2326 = vand.u32 %v2184, 4294901760
    %v2327 = vsub.f32 %v2184, %v2326
    %v2328 = vand.u32 %v2327, 4294901760
    %2329 = vmatmul.f32.gmra.mxu0 %v2328
    %v2330 = vpop.f32.mrf.mxu0
    %v2331 = vadd.f32 %v2299, %v2330
    %v2332 = vand.u32 %v2187, 4294901760
    %v2333 = vsub.f32 %v2187, %v2332
    %v2334 = vand.u32 %v2333, 4294901760
    %2335 = vmatmul.f32.gmra.mxu0 %v2334
    %v2336 = vpop.f32.mrf.mxu0
    %v2337 = vadd.f32 %v2304, %v2336
    %2338 = vdwg.mxu0
    %2339 = vmatpush.msra.mxu0 0.0
    %2340 = vmatpush.msra.mxu0 0.0
    %2341 = vmatpush.msra.mxu0 0.0
    %2342 = vmatpush.msra.mxu0 0.0
    %2343 = vmatpush.msra.mxu0 0.0
    %2344 = vmatpush.msra.mxu0 0.0
    %2345 = vmatpush.msra.mxu0 0.0
    %2346 = vmatpush.msra.mxu0 0.0
    %2347 = vmatpush.msra.mxu0 0.0
    %2348 = vmatpush.msra.mxu0 0.0
    %2349 = vmatpush.msra.mxu0 0.0
    %2350 = vmatpush.msra.mxu0 0.0
    %v2351 = vand.u32 %v1954, 4294901760
    %v2352 = vsub.f32 %v1954, %v2351
    %v2353 = vand.u32 %v2352, 4294901760
    %2354 = vmatpush.msra.mxu0 %v2353
    %v2355 = vand.u32 %v1953, 4294901760
    %v2356 = vsub.f32 %v1953, %v2355
    %v2357 = vand.u32 %v2356, 4294901760
    %2358 = vmatpush.msra.mxu0 %v2357
    %v2359 = vand.u32 %v1952, 4294901760
    %v2360 = vsub.f32 %v1952, %v2359
    %v2361 = vand.u32 %v2360, 4294901760
    %2362 = vmatpush.msra.mxu0 %v2361
    %v2363 = vand.u32 %v1951, 4294901760
    %v2364 = vsub.f32 %v1951, %v2363
    %v2365 = vand.u32 %v2364, 4294901760
    %2366 = vmatpush.msra.mxu0 %v2365
    %v2367 = vand.u32 %v2184, 4294901760
    %2368 = vmatmul.f32.gmra.mxu0 %v2367
    %v2369 = vpop.f32.mrf.mxu0
    %v2370 = vadd.f32 %v2331, %v2369
    %v2371 = vand.u32 %v2187, 4294901760
    %2372 = vmatmul.f32.gmra.mxu0 %v2371
    %v2373 = vpop.f32.mrf.mxu0
    %v2374 = vadd.f32 %v2337, %v2373
    %2375 = vdwg.mxu0
    %2376 = vmatpush.msra.mxu0 0.0
    %2377 = vmatpush.msra.mxu0 0.0
    %2378 = vmatpush.msra.mxu0 0.0
    %2379 = vmatpush.msra.mxu0 0.0
    %2380 = vmatpush.msra.mxu0 0.0
    %2381 = vmatpush.msra.mxu0 0.0
    %2382 = vmatpush.msra.mxu0 0.0
    %2383 = vmatpush.msra.mxu0 0.0
    %2384 = vmatpush.msra.mxu0 0.0
    %2385 = vmatpush.msra.mxu0 0.0
    %2386 = vmatpush.msra.mxu0 0.0
    %2387 = vmatpush.msra.mxu0 0.0
    %v2388 = vand.u32 %v1954, 4294901760
    %2389 = vmatpush.msra.mxu0 %v2388
    %v2390 = vand.u32 %v1953, 4294901760
    %2391 = vmatpush.msra.mxu0 %v2390
    %v2392 = vand.u32 %v1952, 4294901760
    %2393 = vmatpush.msra.mxu0 %v2392
    %v2394 = vand.u32 %v1951, 4294901760
    %2395 = vmatpush.msra.mxu0 %v2394
    %v2396 = vand.u32 %v2184, 4294901760
    %2397 = vmatmul.f32.gmra.mxu0 %v2396
    %v2398 = vpop.f32.mrf.mxu0
    %v2399 = vadd.f32 %v2370, %v2398
    %v2400 = vand.u32 %v2187, 4294901760
    %2401 = vmatmul.f32.gmra.mxu0 %v2400
    %v2402 = vpop.f32.mrf.mxu0
    %v2403 = vadd.f32 %v2374, %v2402
    %2404 = vdwg.mxu0
    %v2405 = vld [vmem:[#allocation2 + $0x7] sm:$0xff]
    %v2406 = vld [vmem:[#allocation2 + $0xf] sm:$0xff]
    %v2407 = vld [vmem:[%s616] sm:$0xff]
    %v2408 = vld [vmem:[%s616 + $0x8] sm:$0xff]
    %v2409 = vld [vmem:[%s616 + $0x10] sm:$0xff]
    %v2410 = vld [vmem:[%s616 + $0x18] sm:$0xff]
    %v2412 = vsel %vm169, %v2405, 0
    %v2415 = vsel %vm169, %v2406, 0
    %2417 = vmatpush.msra.mxu0 0.0
    %2418 = vmatpush.msra.mxu0 0.0
    %2419 = vmatpush.msra.mxu0 0.0
    %2420 = vmatpush.msra.mxu0 0.0
    %2421 = vmatpush.msra.mxu0 0.0
    %2422 = vmatpush.msra.mxu0 0.0
    %2423 = vmatpush.msra.mxu0 0.0
    %2424 = vmatpush.msra.mxu0 0.0
    %2425 = vmatpush.msra.mxu0 0.0
    %2426 = vmatpush.msra.mxu0 0.0
    %2427 = vmatpush.msra.mxu0 0.0
    %2428 = vmatpush.msra.mxu0 0.0
    %v2429 = vand.u32 %v2410, 4294901760
    %2430 = vmatpush.msra.mxu0 %v2429
    %v2431 = vand.u32 %v2409, 4294901760
    %2432 = vmatpush.msra.mxu0 %v2431
    %v2433 = vand.u32 %v2408, 4294901760
    %2434 = vmatpush.msra.mxu0 %v2433
    %v2435 = vand.u32 %v2407, 4294901760
    %2436 = vmatpush.msra.mxu0 %v2435
    %v2437 = vand.u32 %v2412, 4294901760
    %v2438 = vsub.f32 %v2412, %v2437
    %v2439 = vand.u32 %v2438, 4294901760
    %v2440 = vsub.f32 %v2438, %v2439
    %v2441 = vand.u32 %v2440, 4294901760
    %2442 = vmatmul.f32.gmra.mxu0 %v2441
    %v2443 = vpop.f32.mrf.mxu0
    %v2444 = vadd.f32 0.0, %v2443
    %v2445 = vand.u32 %v2415, 4294901760
    %v2446 = vsub.f32 %v2415, %v2445
    %v2447 = vand.u32 %v2446, 4294901760
    %v2448 = vsub.f32 %v2446, %v2447
    %v2449 = vand.u32 %v2448, 4294901760
    %2450 = vmatmul.f32.gmra.mxu0 %v2449
    %v2451 = vpop.f32.mrf.mxu0
    %v2452 = vadd.f32 0.0, %v2451
    %2453 = vdwg.mxu0
    %2454 = vmatpush.msra.mxu0 0.0
    %2455 = vmatpush.msra.mxu0 0.0
    %2456 = vmatpush.msra.mxu0 0.0
    %2457 = vmatpush.msra.mxu0 0.0
    %2458 = vmatpush.msra.mxu0 0.0
    %2459 = vmatpush.msra.mxu0 0.0
    %2460 = vmatpush.msra.mxu0 0.0
    %2461 = vmatpush.msra.mxu0 0.0
    %2462 = vmatpush.msra.mxu0 0.0
    %2463 = vmatpush.msra.mxu0 0.0
    %2464 = vmatpush.msra.mxu0 0.0
    %2465 = vmatpush.msra.mxu0 0.0
    %v2466 = vand.u32 %v2410, 4294901760
    %v2467 = vsub.f32 %v2410, %v2466
    %v2468 = vand.u32 %v2467, 4294901760
    %v2469 = vsub.f32 %v2467, %v2468
    %v2470 = vand.u32 %v2469, 4294901760
    %2471 = vmatpush.msra.mxu0 %v2470
    %v2472 = vand.u32 %v2409, 4294901760
    %v2473 = vsub.f32 %v2409, %v2472
    %v2474 = vand.u32 %v2473, 4294901760
    %v2475 = vsub.f32 %v2473, %v2474
    %v2476 = vand.u32 %v2475, 4294901760
    %2477 = vmatpush.msra.mxu0 %v2476
    %v2478 = vand.u32 %v2408, 4294901760
    %v2479 = vsub.f32 %v2408, %v2478
    %v2480 = vand.u32 %v2479, 4294901760
    %v2481 = vsub.f32 %v2479, %v2480
    %v2482 = vand.u32 %v2481, 4294901760
    %2483 = vmatpush.msra.mxu0 %v2482
    %v2484 = vand.u32 %v2407, 4294901760
    %v2485 = vsub.f32 %v2407, %v2484
    %v2486 = vand.u32 %v2485, 4294901760
    %v2487 = vsub.f32 %v2485, %v2486
    %v2488 = vand.u32 %v2487, 4294901760
    %2489 = vmatpush.msra.mxu0 %v2488
    %v2490 = vand.u32 %v2412, 4294901760
    %2491 = vmatmul.f32.gmra.mxu0 %v2490
    %v2492 = vpop.f32.mrf.mxu0
    %v2493 = vadd.f32 %v2444, %v2492
    %v2494 = vand.u32 %v2415, 4294901760
    %2495 = vmatmul.f32.gmra.mxu0 %v2494
    %v2496 = vpop.f32.mrf.mxu0
    %v2497 = vadd.f32 %v2452, %v2496
    %2498 = vdwg.mxu0
    %2499 = vmatpush.msra.mxu0 0.0
    %2500 = vmatpush.msra.mxu0 0.0
    %2501 = vmatpush.msra.mxu0 0.0
    %2502 = vmatpush.msra.mxu0 0.0
    %2503 = vmatpush.msra.mxu0 0.0
    %2504 = vmatpush.msra.mxu0 0.0
    %2505 = vmatpush.msra.mxu0 0.0
    %2506 = vmatpush.msra.mxu0 0.0
    %2507 = vmatpush.msra.mxu0 0.0
    %2508 = vmatpush.msra.mxu0 0.0
    %2509 = vmatpush.msra.mxu0 0.0
    %2510 = vmatpush.msra.mxu0 0.0
    %v2511 = vand.u32 %v2410, 4294901760
    %v2512 = vsub.f32 %v2410, %v2511
    %2513 = vmatpush.msra.mxu0 %v2512
    %v2514 = vand.u32 %v2409, 4294901760
    %v2515 = vsub.f32 %v2409, %v2514
    %2516 = vmatpush.msra.mxu0 %v2515
    %v2517 = vand.u32 %v2408, 4294901760
    %v2518 = vsub.f32 %v2408, %v2517
    %2519 = vmatpush.msra.mxu0 %v2518
    %v2520 = vand.u32 %v2407, 4294901760
    %v2521 = vsub.f32 %v2407, %v2520
    %2522 = vmatpush.msra.mxu0 %v2521
    %v2523 = vand.u32 %v2412, 4294901760
    %v2524 = vsub.f32 %v2412, %v2523
    %2525 = vmatmul.f32.gmra.mxu0 %v2524
    %v2526 = vpop.f32.mrf.mxu0
    %v2527 = vadd.f32 %v2493, %v2526
    %v2528 = vand.u32 %v2415, 4294901760
    %v2529 = vsub.f32 %v2415, %v2528
    %2530 = vmatmul.f32.gmra.mxu0 %v2529
    %v2531 = vpop.f32.mrf.mxu0
    %v2532 = vadd.f32 %v2497, %v2531
    %2533 = vdwg.mxu0
    %2534 = vmatpush.msra.mxu0 0.0
    %2535 = vmatpush.msra.mxu0 0.0
    %2536 = vmatpush.msra.mxu0 0.0
    %2537 = vmatpush.msra.mxu0 0.0
    %2538 = vmatpush.msra.mxu0 0.0
    %2539 = vmatpush.msra.mxu0 0.0
    %2540 = vmatpush.msra.mxu0 0.0
    %2541 = vmatpush.msra.mxu0 0.0
    %2542 = vmatpush.msra.mxu0 0.0
    %2543 = vmatpush.msra.mxu0 0.0
    %2544 = vmatpush.msra.mxu0 0.0
    %2545 = vmatpush.msra.mxu0 0.0
    %v2546 = vand.u32 %v2410, 4294901760
    %2547 = vmatpush.msra.mxu0 %v2546
    %v2548 = vand.u32 %v2409, 4294901760
    %2549 = vmatpush.msra.mxu0 %v2548
    %v2550 = vand.u32 %v2408, 4294901760
    %2551 = vmatpush.msra.mxu0 %v2550
    %v2552 = vand.u32 %v2407, 4294901760
    %2553 = vmatpush.msra.mxu0 %v2552
    %v2554 = vand.u32 %v2412, 4294901760
    %v2555 = vsub.f32 %v2412, %v2554
    %v2556 = vand.u32 %v2555, 4294901760
    %2557 = vmatmul.f32.gmra.mxu0 %v2556
    %v2558 = vpop.f32.mrf.mxu0
    %v2559 = vadd.f32 %v2527, %v2558
    %v2560 = vand.u32 %v2415, 4294901760
    %v2561 = vsub.f32 %v2415, %v2560
    %v2562 = vand.u32 %v2561, 4294901760
    %2563 = vmatmul.f32.gmra.mxu0 %v2562
    %v2564 = vpop.f32.mrf.mxu0
    %v2565 = vadd.f32 %v2532, %v2564
    %2566 = vdwg.mxu0
    %2567 = vmatpush.msra.mxu0 0.0
    %2568 = vmatpush.msra.mxu0 0.0
    %2569 = vmatpush.msra.mxu0 0.0
    %2570 = vmatpush.msra.mxu0 0.0
    %2571 = vmatpush.msra.mxu0 0.0
    %2572 = vmatpush.msra.mxu0 0.0
    %2573 = vmatpush.msra.mxu0 0.0
    %2574 = vmatpush.msra.mxu0 0.0
    %2575 = vmatpush.msra.mxu0 0.0
    %2576 = vmatpush.msra.mxu0 0.0
    %2577 = vmatpush.msra.mxu0 0.0
    %2578 = vmatpush.msra.mxu0 0.0
    %v2579 = vand.u32 %v2410, 4294901760
    %v2580 = vsub.f32 %v2410, %v2579
    %v2581 = vand.u32 %v2580, 4294901760
    %2582 = vmatpush.msra.mxu0 %v2581
    %v2583 = vand.u32 %v2409, 4294901760
    %v2584 = vsub.f32 %v2409, %v2583
    %v2585 = vand.u32 %v2584, 4294901760
    %2586 = vmatpush.msra.mxu0 %v2585
    %v2587 = vand.u32 %v2408, 4294901760
    %v2588 = vsub.f32 %v2408, %v2587
    %v2589 = vand.u32 %v2588, 4294901760
    %2590 = vmatpush.msra.mxu0 %v2589
    %v2591 = vand.u32 %v2407, 4294901760
    %v2592 = vsub.f32 %v2407, %v2591
    %v2593 = vand.u32 %v2592, 4294901760
    %2594 = vmatpush.msra.mxu0 %v2593
    %v2595 = vand.u32 %v2412, 4294901760
    %2596 = vmatmul.f32.gmra.mxu0 %v2595
    %v2597 = vpop.f32.mrf.mxu0
    %v2598 = vadd.f32 %v2559, %v2597
    %v2599 = vand.u32 %v2415, 4294901760
    %2600 = vmatmul.f32.gmra.mxu0 %v2599
    %v2601 = vpop.f32.mrf.mxu0
    %v2602 = vadd.f32 %v2565, %v2601
    %2603 = vdwg.mxu0
    %2604 = vmatpush.msra.mxu0 0.0
    %2605 = vmatpush.msra.mxu0 0.0
    %2606 = vmatpush.msra.mxu0 0.0
    %2607 = vmatpush.msra.mxu0 0.0
    %2608 = vmatpush.msra.mxu0 0.0
    %2609 = vmatpush.msra.mxu0 0.0
    %2610 = vmatpush.msra.mxu0 0.0
    %2611 = vmatpush.msra.mxu0 0.0
    %2612 = vmatpush.msra.mxu0 0.0
    %2613 = vmatpush.msra.mxu0 0.0
    %2614 = vmatpush.msra.mxu0 0.0
    %2615 = vmatpush.msra.mxu0 0.0
    %v2616 = vand.u32 %v2410, 4294901760
    %2617 = vmatpush.msra.mxu0 %v2616
    %v2618 = vand.u32 %v2409, 4294901760
    %2619 = vmatpush.msra.mxu0 %v2618
    %v2620 = vand.u32 %v2408, 4294901760
    %2621 = vmatpush.msra.mxu0 %v2620
    %v2622 = vand.u32 %v2407, 4294901760
    %2623 = vmatpush.msra.mxu0 %v2622
    %v2624 = vand.u32 %v2412, 4294901760
    %2625 = vmatmul.f32.gmra.mxu0 %v2624
    %v2626 = vpop.f32.mrf.mxu0
    %v2627 = vadd.f32 %v2598, %v2626
    %v2628 = vand.u32 %v2415, 4294901760
    %2629 = vmatmul.f32.gmra.mxu0 %v2628
    %v2630 = vpop.f32.mrf.mxu0
    %v2631 = vadd.f32 %v2602, %v2630
    %2632 = vdwg.mxu0
    %v2633 = vadd.f32 %v2399, %v2627
    %v2634 = vadd.f32 %v2403, %v2631
    %v2635 = vld [vmem:[#allocation2 + $0x8] sm:$0xff]
    %v2636 = vld [vmem:[#allocation2 + $0x10] sm:$0xff]
    %v2637 = vld [vmem:[%s847] sm:$0xff]
    %v2638 = vld [vmem:[%s847 + $0x8] sm:$0xff]
    %v2639 = vld [vmem:[%s847 + $0x10] sm:$0xff]
    %v2640 = vld [vmem:[%s847 + $0x18] sm:$0xff]
    %v2642 = vsel %vm169, %v2635, 0
    %v2645 = vsel %vm169, %v2636, 0
    %2647 = vmatpush.msra.mxu0 0.0
    %2648 = vmatpush.msra.mxu0 0.0
    %2649 = vmatpush.msra.mxu0 0.0
    %2650 = vmatpush.msra.mxu0 0.0
    %2651 = vmatpush.msra.mxu0 0.0
    %2652 = vmatpush.msra.mxu0 0.0
    %2653 = vmatpush.msra.mxu0 0.0
    %2654 = vmatpush.msra.mxu0 0.0
    %2655 = vmatpush.msra.mxu0 0.0
    %2656 = vmatpush.msra.mxu0 0.0
    %2657 = vmatpush.msra.mxu0 0.0
    %2658 = vmatpush.msra.mxu0 0.0
    %v2659 = vand.u32 %v2640, 4294901760
    %2660 = vmatpush.msra.mxu0 %v2659
    %v2661 = vand.u32 %v2639, 4294901760
    %2662 = vmatpush.msra.mxu0 %v2661
    %v2663 = vand.u32 %v2638, 4294901760
    %2664 = vmatpush.msra.mxu0 %v2663
    %v2665 = vand.u32 %v2637, 4294901760
    %2666 = vmatpush.msra.mxu0 %v2665
    %v2667 = vand.u32 %v2642, 4294901760
    %v2668 = vsub.f32 %v2642, %v2667
    %v2669 = vand.u32 %v2668, 4294901760
    %v2670 = vsub.f32 %v2668, %v2669
    %v2671 = vand.u32 %v2670, 4294901760
    %2672 = vmatmul.f32.gmra.mxu0 %v2671
    %v2673 = vpop.f32.mrf.mxu0
    %v2674 = vadd.f32 0.0, %v2673
    %v2675 = vand.u32 %v2645, 4294901760
    %v2676 = vsub.f32 %v2645, %v2675
    %v2677 = vand.u32 %v2676, 4294901760
    %v2678 = vsub.f32 %v2676, %v2677
    %v2679 = vand.u32 %v2678, 4294901760
    %2680 = vmatmul.f32.gmra.mxu0 %v2679
    %v2681 = vpop.f32.mrf.mxu0
    %v2682 = vadd.f32 0.0, %v2681
    %2683 = vdwg.mxu0
    %2684 = vmatpush.msra.mxu0 0.0
    %2685 = vmatpush.msra.mxu0 0.0
    %2686 = vmatpush.msra.mxu0 0.0
    %2687 = vmatpush.msra.mxu0 0.0
    %2688 = vmatpush.msra.mxu0 0.0
    %2689 = vmatpush.msra.mxu0 0.0
    %2690 = vmatpush.msra.mxu0 0.0
    %2691 = vmatpush.msra.mxu0 0.0
    %2692 = vmatpush.msra.mxu0 0.0
    %2693 = vmatpush.msra.mxu0 0.0
    %2694 = vmatpush.msra.mxu0 0.0
    %2695 = vmatpush.msra.mxu0 0.0
    %v2696 = vand.u32 %v2640, 4294901760
    %v2697 = vsub.f32 %v2640, %v2696
    %v2698 = vand.u32 %v2697, 4294901760
    %v2699 = vsub.f32 %v2697, %v2698
    %v2700 = vand.u32 %v2699, 4294901760
    %2701 = vmatpush.msra.mxu0 %v2700
    %v2702 = vand.u32 %v2639, 4294901760
    %v2703 = vsub.f32 %v2639, %v2702
    %v2704 = vand.u32 %v2703, 4294901760
    %v2705 = vsub.f32 %v2703, %v2704
    %v2706 = vand.u32 %v2705, 4294901760
    %2707 = vmatpush.msra.mxu0 %v2706
    %v2708 = vand.u32 %v2638, 4294901760
    %v2709 = vsub.f32 %v2638, %v2708
    %v2710 = vand.u32 %v2709, 4294901760
    %v2711 = vsub.f32 %v2709, %v2710
    %v2712 = vand.u32 %v2711, 4294901760
    %2713 = vmatpush.msra.mxu0 %v2712
    %v2714 = vand.u32 %v2637, 4294901760
    %v2715 = vsub.f32 %v2637, %v2714
    %v2716 = vand.u32 %v2715, 4294901760
    %v2717 = vsub.f32 %v2715, %v2716
    %v2718 = vand.u32 %v2717, 4294901760
    %2719 = vmatpush.msra.mxu0 %v2718
    %v2720 = vand.u32 %v2642, 4294901760
    %2721 = vmatmul.f32.gmra.mxu0 %v2720
    %v2722 = vpop.f32.mrf.mxu0
    %v2723 = vadd.f32 %v2674, %v2722
    %v2724 = vand.u32 %v2645, 4294901760
    %2725 = vmatmul.f32.gmra.mxu0 %v2724
    %v2726 = vpop.f32.mrf.mxu0
    %v2727 = vadd.f32 %v2682, %v2726
    %2728 = vdwg.mxu0
    %2729 = vmatpush.msra.mxu0 0.0
    %2730 = vmatpush.msra.mxu0 0.0
    %2731 = vmatpush.msra.mxu0 0.0
    %2732 = vmatpush.msra.mxu0 0.0
    %2733 = vmatpush.msra.mxu0 0.0
    %2734 = vmatpush.msra.mxu0 0.0
    %2735 = vmatpush.msra.mxu0 0.0
    %2736 = vmatpush.msra.mxu0 0.0
    %2737 = vmatpush.msra.mxu0 0.0
    %2738 = vmatpush.msra.mxu0 0.0
    %2739 = vmatpush.msra.mxu0 0.0
    %2740 = vmatpush.msra.mxu0 0.0
    %v2741 = vand.u32 %v2640, 4294901760
    %v2742 = vsub.f32 %v2640, %v2741
    %2743 = vmatpush.msra.mxu0 %v2742
    %v2744 = vand.u32 %v2639, 4294901760
    %v2745 = vsub.f32 %v2639, %v2744
    %2746 = vmatpush.msra.mxu0 %v2745
    %v2747 = vand.u32 %v2638, 4294901760
    %v2748 = vsub.f32 %v2638, %v2747
    %2749 = vmatpush.msra.mxu0 %v2748
    %v2750 = vand.u32 %v2637, 4294901760
    %v2751 = vsub.f32 %v2637, %v2750
    %2752 = vmatpush.msra.mxu0 %v2751
    %v2753 = vand.u32 %v2642, 4294901760
    %v2754 = vsub.f32 %v2642, %v2753
    %2755 = vmatmul.f32.gmra.mxu0 %v2754
    %v2756 = vpop.f32.mrf.mxu0
    %v2757 = vadd.f32 %v2723, %v2756
    %v2758 = vand.u32 %v2645, 4294901760
    %v2759 = vsub.f32 %v2645, %v2758
    %2760 = vmatmul.f32.gmra.mxu0 %v2759
    %v2761 = vpop.f32.mrf.mxu0
    %v2762 = vadd.f32 %v2727, %v2761
    %2763 = vdwg.mxu0
    %2764 = vmatpush.msra.mxu0 0.0
    %2765 = vmatpush.msra.mxu0 0.0
    %2766 = vmatpush.msra.mxu0 0.0
    %2767 = vmatpush.msra.mxu0 0.0
    %2768 = vmatpush.msra.mxu0 0.0
    %2769 = vmatpush.msra.mxu0 0.0
    %2770 = vmatpush.msra.mxu0 0.0
    %2771 = vmatpush.msra.mxu0 0.0
    %2772 = vmatpush.msra.mxu0 0.0
    %2773 = vmatpush.msra.mxu0 0.0
    %2774 = vmatpush.msra.mxu0 0.0
    %2775 = vmatpush.msra.mxu0 0.0
    %v2776 = vand.u32 %v2640, 4294901760
    %2777 = vmatpush.msra.mxu0 %v2776
    %v2778 = vand.u32 %v2639, 4294901760
    %2779 = vmatpush.msra.mxu0 %v2778
    %v2780 = vand.u32 %v2638, 4294901760
    %2781 = vmatpush.msra.mxu0 %v2780
    %v2782 = vand.u32 %v2637, 4294901760
    %2783 = vmatpush.msra.mxu0 %v2782
    %v2784 = vand.u32 %v2642, 4294901760
    %v2785 = vsub.f32 %v2642, %v2784
    %v2786 = vand.u32 %v2785, 4294901760
    %2787 = vmatmul.f32.gmra.mxu0 %v2786
    %v2788 = vpop.f32.mrf.mxu0
    %v2789 = vadd.f32 %v2757, %v2788
    %v2790 = vand.u32 %v2645, 4294901760
    %v2791 = vsub.f32 %v2645, %v2790
    %v2792 = vand.u32 %v2791, 4294901760
    %2793 = vmatmul.f32.gmra.mxu0 %v2792
    %v2794 = vpop.f32.mrf.mxu0
    %v2795 = vadd.f32 %v2762, %v2794
    %2796 = vdwg.mxu0
    %2797 = vmatpush.msra.mxu0 0.0
    %2798 = vmatpush.msra.mxu0 0.0
    %2799 = vmatpush.msra.mxu0 0.0
    %2800 = vmatpush.msra.mxu0 0.0
    %2801 = vmatpush.msra.mxu0 0.0
    %2802 = vmatpush.msra.mxu0 0.0
    %2803 = vmatpush.msra.mxu0 0.0
    %2804 = vmatpush.msra.mxu0 0.0
    %2805 = vmatpush.msra.mxu0 0.0
    %2806 = vmatpush.msra.mxu0 0.0
    %2807 = vmatpush.msra.mxu0 0.0
    %2808 = vmatpush.msra.mxu0 0.0
    %v2809 = vand.u32 %v2640, 4294901760
    %v2810 = vsub.f32 %v2640, %v2809
    %v2811 = vand.u32 %v2810, 4294901760
    %2812 = vmatpush.msra.mxu0 %v2811
    %v2813 = vand.u32 %v2639, 4294901760
    %v2814 = vsub.f32 %v2639, %v2813
    %v2815 = vand.u32 %v2814, 4294901760
    %2816 = vmatpush.msra.mxu0 %v2815
    %v2817 = vand.u32 %v2638, 4294901760
    %v2818 = vsub.f32 %v2638, %v2817
    %v2819 = vand.u32 %v2818, 4294901760
    %2820 = vmatpush.msra.mxu0 %v2819
    %v2821 = vand.u32 %v2637, 4294901760
    %v2822 = vsub.f32 %v2637, %v2821
    %v2823 = vand.u32 %v2822, 4294901760
    %2824 = vmatpush.msra.mxu0 %v2823
    %v2825 = vand.u32 %v2642, 4294901760
    %2826 = vmatmul.f32.gmra.mxu0 %v2825
    %v2827 = vpop.f32.mrf.mxu0
    %v2828 = vadd.f32 %v2789, %v2827
    %v2829 = vand.u32 %v2645, 4294901760
    %2830 = vmatmul.f32.gmra.mxu0 %v2829
    %v2831 = vpop.f32.mrf.mxu0
    %v2832 = vadd.f32 %v2795, %v2831
    %2833 = vdwg.mxu0
    %2834 = vmatpush.msra.mxu0 0.0
    %2835 = vmatpush.msra.mxu0 0.0
    %2836 = vmatpush.msra.mxu0 0.0
    %2837 = vmatpush.msra.mxu0 0.0
    %2838 = vmatpush.msra.mxu0 0.0
    %2839 = vmatpush.msra.mxu0 0.0
    %2840 = vmatpush.msra.mxu0 0.0
    %2841 = vmatpush.msra.mxu0 0.0
    %2842 = vmatpush.msra.mxu0 0.0
    %2843 = vmatpush.msra.mxu0 0.0
    %2844 = vmatpush.msra.mxu0 0.0
    %2845 = vmatpush.msra.mxu0 0.0
    %v2846 = vand.u32 %v2640, 4294901760
    %2847 = vmatpush.msra.mxu0 %v2846
    %v2848 = vand.u32 %v2639, 4294901760
    %2849 = vmatpush.msra.mxu0 %v2848
    %v2850 = vand.u32 %v2638, 4294901760
    %2851 = vmatpush.msra.mxu0 %v2850
    %v2852 = vand.u32 %v2637, 4294901760
    %2853 = vmatpush.msra.mxu0 %v2852
    %v2854 = vand.u32 %v2642, 4294901760
    %2855 = vmatmul.f32.gmra.mxu0 %v2854
    %v2856 = vpop.f32.mrf.mxu0
    %v2857 = vadd.f32 %v2828, %v2856
    %v2858 = vand.u32 %v2645, 4294901760
    %2859 = vmatmul.f32.gmra.mxu0 %v2858
    %v2860 = vpop.f32.mrf.mxu0
    %v2861 = vadd.f32 %v2832, %v2860
    %2862 = vdwg.mxu0
    %v2863 = vadd.f32 %v2633, %v2857
    %v2864 = vadd.f32 %v2634, %v2861
    %v2865 = vld [vmem:[#allocation2 + $0x9] sm:$0xff]
    %v2866 = vld [vmem:[#allocation2 + $0x11] sm:$0xff]
    %v2867 = vld [vmem:[%s1078] sm:$0xff]
    %v2868 = vld [vmem:[%s1078 + $0x8] sm:$0xff]
    %v2869 = vld [vmem:[%s1078 + $0x10] sm:$0xff]
    %v2870 = vld [vmem:[%s1078 + $0x18] sm:$0xff]
    %v2872 = vsel %vm169, %v2865, 0
    %v2875 = vsel %vm169, %v2866, 0
    %2877 = vmatpush.msra.mxu0 0.0
    %2878 = vmatpush.msra.mxu0 0.0
    %2879 = vmatpush.msra.mxu0 0.0
    %2880 = vmatpush.msra.mxu0 0.0
    %2881 = vmatpush.msra.mxu0 0.0
    %2882 = vmatpush.msra.mxu0 0.0
    %2883 = vmatpush.msra.mxu0 0.0
    %2884 = vmatpush.msra.mxu0 0.0
    %2885 = vmatpush.msra.mxu0 0.0
    %2886 = vmatpush.msra.mxu0 0.0
    %2887 = vmatpush.msra.mxu0 0.0
    %2888 = vmatpush.msra.mxu0 0.0
    %v2889 = vand.u32 %v2870, 4294901760
    %2890 = vmatpush.msra.mxu0 %v2889
    %v2891 = vand.u32 %v2869, 4294901760
    %2892 = vmatpush.msra.mxu0 %v2891
    %v2893 = vand.u32 %v2868, 4294901760
    %2894 = vmatpush.msra.mxu0 %v2893
    %v2895 = vand.u32 %v2867, 4294901760
    %2896 = vmatpush.msra.mxu0 %v2895
    %v2897 = vand.u32 %v2872, 4294901760
    %v2898 = vsub.f32 %v2872, %v2897
    %v2899 = vand.u32 %v2898, 4294901760
    %v2900 = vsub.f32 %v2898, %v2899
    %v2901 = vand.u32 %v2900, 4294901760
    %2902 = vmatmul.f32.gmra.mxu0 %v2901
    %v2903 = vpop.f32.mrf.mxu0
    %v2904 = vadd.f32 0.0, %v2903
    %v2905 = vand.u32 %v2875, 4294901760
    %v2906 = vsub.f32 %v2875, %v2905
    %v2907 = vand.u32 %v2906, 4294901760
    %v2908 = vsub.f32 %v2906, %v2907
    %v2909 = vand.u32 %v2908, 4294901760
    %2910 = vmatmul.f32.gmra.mxu0 %v2909
    %v2911 = vpop.f32.mrf.mxu0
    %v2912 = vadd.f32 0.0, %v2911
    %2913 = vdwg.mxu0
    %2914 = vmatpush.msra.mxu0 0.0
    %2915 = vmatpush.msra.mxu0 0.0
    %2916 = vmatpush.msra.mxu0 0.0
    %2917 = vmatpush.msra.mxu0 0.0
    %2918 = vmatpush.msra.mxu0 0.0
    %2919 = vmatpush.msra.mxu0 0.0
    %2920 = vmatpush.msra.mxu0 0.0
    %2921 = vmatpush.msra.mxu0 0.0
    %2922 = vmatpush.msra.mxu0 0.0
    %2923 = vmatpush.msra.mxu0 0.0
    %2924 = vmatpush.msra.mxu0 0.0
    %2925 = vmatpush.msra.mxu0 0.0
    %v2926 = vand.u32 %v2870, 4294901760
    %v2927 = vsub.f32 %v2870, %v2926
    %v2928 = vand.u32 %v2927, 4294901760
    %v2929 = vsub.f32 %v2927, %v2928
    %v2930 = vand.u32 %v2929, 4294901760
    %2931 = vmatpush.msra.mxu0 %v2930
    %v2932 = vand.u32 %v2869, 4294901760
    %v2933 = vsub.f32 %v2869, %v2932
    %v2934 = vand.u32 %v2933, 4294901760
    %v2935 = vsub.f32 %v2933, %v2934
    %v2936 = vand.u32 %v2935, 4294901760
    %2937 = vmatpush.msra.mxu0 %v2936
    %v2938 = vand.u32 %v2868, 4294901760
    %v2939 = vsub.f32 %v2868, %v2938
    %v2940 = vand.u32 %v2939, 4294901760
    %v2941 = vsub.f32 %v2939, %v2940
    %v2942 = vand.u32 %v2941, 4294901760
    %2943 = vmatpush.msra.mxu0 %v2942
    %v2944 = vand.u32 %v2867, 4294901760
    %v2945 = vsub.f32 %v2867, %v2944
    %v2946 = vand.u32 %v2945, 4294901760
    %v2947 = vsub.f32 %v2945, %v2946
    %v2948 = vand.u32 %v2947, 4294901760
    %2949 = vmatpush.msra.mxu0 %v2948
    %v2950 = vand.u32 %v2872, 4294901760
    %2951 = vmatmul.f32.gmra.mxu0 %v2950
    %v2952 = vpop.f32.mrf.mxu0
    %v2953 = vadd.f32 %v2904, %v2952
    %v2954 = vand.u32 %v2875, 4294901760
    %2955 = vmatmul.f32.gmra.mxu0 %v2954
    %v2956 = vpop.f32.mrf.mxu0
    %v2957 = vadd.f32 %v2912, %v2956
    %2958 = vdwg.mxu0
    %2959 = vmatpush.msra.mxu0 0.0
    %2960 = vmatpush.msra.mxu0 0.0
    %2961 = vmatpush.msra.mxu0 0.0
    %2962 = vmatpush.msra.mxu0 0.0
    %2963 = vmatpush.msra.mxu0 0.0
    %2964 = vmatpush.msra.mxu0 0.0
    %2965 = vmatpush.msra.mxu0 0.0
    %2966 = vmatpush.msra.mxu0 0.0
    %2967 = vmatpush.msra.mxu0 0.0
    %2968 = vmatpush.msra.mxu0 0.0
    %2969 = vmatpush.msra.mxu0 0.0
    %2970 = vmatpush.msra.mxu0 0.0
    %v2971 = vand.u32 %v2870, 4294901760
    %v2972 = vsub.f32 %v2870, %v2971
    %2973 = vmatpush.msra.mxu0 %v2972
    %v2974 = vand.u32 %v2869, 4294901760
    %v2975 = vsub.f32 %v2869, %v2974
    %2976 = vmatpush.msra.mxu0 %v2975
    %v2977 = vand.u32 %v2868, 4294901760
    %v2978 = vsub.f32 %v2868, %v2977
    %2979 = vmatpush.msra.mxu0 %v2978
    %v2980 = vand.u32 %v2867, 4294901760
    %v2981 = vsub.f32 %v2867, %v2980
    %2982 = vmatpush.msra.mxu0 %v2981
    %v2983 = vand.u32 %v2872, 4294901760
    %v2984 = vsub.f32 %v2872, %v2983
    %2985 = vmatmul.f32.gmra.mxu0 %v2984
    %v2986 = vpop.f32.mrf.mxu0
    %v2987 = vadd.f32 %v2953, %v2986
    %v2988 = vand.u32 %v2875, 4294901760
    %v2989 = vsub.f32 %v2875, %v2988
    %2990 = vmatmul.f32.gmra.mxu0 %v2989
    %v2991 = vpop.f32.mrf.mxu0
    %v2992 = vadd.f32 %v2957, %v2991
    %2993 = vdwg.mxu0
    %2994 = vmatpush.msra.mxu0 0.0
    %2995 = vmatpush.msra.mxu0 0.0
    %2996 = vmatpush.msra.mxu0 0.0
    %2997 = vmatpush.msra.mxu0 0.0
    %2998 = vmatpush.msra.mxu0 0.0
    %2999 = vmatpush.msra.mxu0 0.0
    %3000 = vmatpush.msra.mxu0 0.0
    %3001 = vmatpush.msra.mxu0 0.0
    %3002 = vmatpush.msra.mxu0 0.0
    %3003 = vmatpush.msra.mxu0 0.0
    %3004 = vmatpush.msra.mxu0 0.0
    %3005 = vmatpush.msra.mxu0 0.0
    %v3006 = vand.u32 %v2870, 4294901760
    %3007 = vmatpush.msra.mxu0 %v3006
    %v3008 = vand.u32 %v2869, 4294901760
    %3009 = vmatpush.msra.mxu0 %v3008
    %v3010 = vand.u32 %v2868, 4294901760
    %3011 = vmatpush.msra.mxu0 %v3010
    %v3012 = vand.u32 %v2867, 4294901760
    %3013 = vmatpush.msra.mxu0 %v3012
    %v3014 = vand.u32 %v2872, 4294901760
    %v3015 = vsub.f32 %v2872, %v3014
    %v3016 = vand.u32 %v3015, 4294901760
    %3017 = vmatmul.f32.gmra.mxu0 %v3016
    %v3018 = vpop.f32.mrf.mxu0
    %v3019 = vadd.f32 %v2987, %v3018
    %v3020 = vand.u32 %v2875, 4294901760
    %v3021 = vsub.f32 %v2875, %v3020
    %v3022 = vand.u32 %v3021, 4294901760
    %3023 = vmatmul.f32.gmra.mxu0 %v3022
    %v3024 = vpop.f32.mrf.mxu0
    %v3025 = vadd.f32 %v2992, %v3024
    %3026 = vdwg.mxu0
    %3027 = vmatpush.msra.mxu0 0.0
    %3028 = vmatpush.msra.mxu0 0.0
    %3029 = vmatpush.msra.mxu0 0.0
    %3030 = vmatpush.msra.mxu0 0.0
    %3031 = vmatpush.msra.mxu0 0.0
    %3032 = vmatpush.msra.mxu0 0.0
    %3033 = vmatpush.msra.mxu0 0.0
    %3034 = vmatpush.msra.mxu0 0.0
    %3035 = vmatpush.msra.mxu0 0.0
    %3036 = vmatpush.msra.mxu0 0.0
    %3037 = vmatpush.msra.mxu0 0.0
    %3038 = vmatpush.msra.mxu0 0.0
    %v3039 = vand.u32 %v2870, 4294901760
    %v3040 = vsub.f32 %v2870, %v3039
    %v3041 = vand.u32 %v3040, 4294901760
    %3042 = vmatpush.msra.mxu0 %v3041
    %v3043 = vand.u32 %v2869, 4294901760
    %v3044 = vsub.f32 %v2869, %v3043
    %v3045 = vand.u32 %v3044, 4294901760
    %3046 = vmatpush.msra.mxu0 %v3045
    %v3047 = vand.u32 %v2868, 4294901760
    %v3048 = vsub.f32 %v2868, %v3047
    %v3049 = vand.u32 %v3048, 4294901760
    %3050 = vmatpush.msra.mxu0 %v3049
    %v3051 = vand.u32 %v2867, 4294901760
    %v3052 = vsub.f32 %v2867, %v3051
    %v3053 = vand.u32 %v3052, 4294901760
    %3054 = vmatpush.msra.mxu0 %v3053
    %v3055 = vand.u32 %v2872, 4294901760
    %3056 = vmatmul.f32.gmra.mxu0 %v3055
    %v3057 = vpop.f32.mrf.mxu0
    %v3058 = vadd.f32 %v3019, %v3057
    %v3059 = vand.u32 %v2875, 4294901760
    %3060 = vmatmul.f32.gmra.mxu0 %v3059
    %v3061 = vpop.f32.mrf.mxu0
    %v3062 = vadd.f32 %v3025, %v3061
    %3063 = vdwg.mxu0
    %3064 = vmatpush.msra.mxu0 0.0
    %3065 = vmatpush.msra.mxu0 0.0
    %3066 = vmatpush.msra.mxu0 0.0
    %3067 = vmatpush.msra.mxu0 0.0
    %3068 = vmatpush.msra.mxu0 0.0
    %3069 = vmatpush.msra.mxu0 0.0
    %3070 = vmatpush.msra.mxu0 0.0
    %3071 = vmatpush.msra.mxu0 0.0
    %3072 = vmatpush.msra.mxu0 0.0
    %3073 = vmatpush.msra.mxu0 0.0
    %3074 = vmatpush.msra.mxu0 0.0
    %3075 = vmatpush.msra.mxu0 0.0
    %v3076 = vand.u32 %v2870, 4294901760
    %3077 = vmatpush.msra.mxu0 %v3076
    %v3078 = vand.u32 %v2869, 4294901760
    %3079 = vmatpush.msra.mxu0 %v3078
    %v3080 = vand.u32 %v2868, 4294901760
    %3081 = vmatpush.msra.mxu0 %v3080
    %v3082 = vand.u32 %v2867, 4294901760
    %3083 = vmatpush.msra.mxu0 %v3082
    %v3084 = vand.u32 %v2872, 4294901760
    %3085 = vmatmul.f32.gmra.mxu0 %v3084
    %v3086 = vpop.f32.mrf.mxu0
    %v3087 = vadd.f32 %v3058, %v3086
    %v3088 = vand.u32 %v2875, 4294901760
    %3089 = vmatmul.f32.gmra.mxu0 %v3088
    %v3090 = vpop.f32.mrf.mxu0
    %v3091 = vadd.f32 %v3062, %v3090
    %3092 = vdwg.mxu0
    %v3093 = vadd.f32 %v2863, %v3087
    %v3094 = vadd.f32 %v2864, %v3091
    %v3095 = vld [vmem:[#allocation2 + $0xa] sm:$0xff]
    %v3096 = vld [vmem:[#allocation2 + $0x12] sm:$0xff]
    %v3097 = vld [vmem:[%s1309] sm:$0xff]
    %v3098 = vld [vmem:[%s1309 + $0x8] sm:$0xff]
    %v3099 = vld [vmem:[%s1309 + $0x10] sm:$0xff]
    %v3100 = vld [vmem:[%s1309 + $0x18] sm:$0xff]
    %v3102 = vsel %vm169, %v3095, 0
    %v3105 = vsel %vm169, %v3096, 0
    %3107 = vmatpush.msra.mxu0 0.0
    %3108 = vmatpush.msra.mxu0 0.0
    %3109 = vmatpush.msra.mxu0 0.0
    %3110 = vmatpush.msra.mxu0 0.0
    %3111 = vmatpush.msra.mxu0 0.0
    %3112 = vmatpush.msra.mxu0 0.0
    %3113 = vmatpush.msra.mxu0 0.0
    %3114 = vmatpush.msra.mxu0 0.0
    %3115 = vmatpush.msra.mxu0 0.0
    %3116 = vmatpush.msra.mxu0 0.0
    %3117 = vmatpush.msra.mxu0 0.0
    %3118 = vmatpush.msra.mxu0 0.0
    %v3119 = vand.u32 %v3100, 4294901760
    %3120 = vmatpush.msra.mxu0 %v3119
    %v3121 = vand.u32 %v3099, 4294901760
    %3122 = vmatpush.msra.mxu0 %v3121
    %v3123 = vand.u32 %v3098, 4294901760
    %3124 = vmatpush.msra.mxu0 %v3123
    %v3125 = vand.u32 %v3097, 4294901760
    %3126 = vmatpush.msra.mxu0 %v3125
    %v3127 = vand.u32 %v3102, 4294901760
    %v3128 = vsub.f32 %v3102, %v3127
    %v3129 = vand.u32 %v3128, 4294901760
    %v3130 = vsub.f32 %v3128, %v3129
    %v3131 = vand.u32 %v3130, 4294901760
    %3132 = vmatmul.f32.gmra.mxu0 %v3131
    %v3133 = vpop.f32.mrf.mxu0
    %v3134 = vadd.f32 0.0, %v3133
    %v3135 = vand.u32 %v3105, 4294901760
    %v3136 = vsub.f32 %v3105, %v3135
    %v3137 = vand.u32 %v3136, 4294901760
    %v3138 = vsub.f32 %v3136, %v3137
    %v3139 = vand.u32 %v3138, 4294901760
    %3140 = vmatmul.f32.gmra.mxu0 %v3139
    %v3141 = vpop.f32.mrf.mxu0
    %v3142 = vadd.f32 0.0, %v3141
    %3143 = vdwg.mxu0
    %3144 = vmatpush.msra.mxu0 0.0
    %3145 = vmatpush.msra.mxu0 0.0
    %3146 = vmatpush.msra.mxu0 0.0
    %3147 = vmatpush.msra.mxu0 0.0
    %3148 = vmatpush.msra.mxu0 0.0
    %3149 = vmatpush.msra.mxu0 0.0
    %3150 = vmatpush.msra.mxu0 0.0
    %3151 = vmatpush.msra.mxu0 0.0
    %3152 = vmatpush.msra.mxu0 0.0
    %3153 = vmatpush.msra.mxu0 0.0
    %3154 = vmatpush.msra.mxu0 0.0
    %3155 = vmatpush.msra.mxu0 0.0
    %v3156 = vand.u32 %v3100, 4294901760
    %v3157 = vsub.f32 %v3100, %v3156
    %v3158 = vand.u32 %v3157, 4294901760
    %v3159 = vsub.f32 %v3157, %v3158
    %v3160 = vand.u32 %v3159, 4294901760
    %3161 = vmatpush.msra.mxu0 %v3160
    %v3162 = vand.u32 %v3099, 4294901760
    %v3163 = vsub.f32 %v3099, %v3162
    %v3164 = vand.u32 %v3163, 4294901760
    %v3165 = vsub.f32 %v3163, %v3164
    %v3166 = vand.u32 %v3165, 4294901760
    %3167 = vmatpush.msra.mxu0 %v3166
    %v3168 = vand.u32 %v3098, 4294901760
    %v3169 = vsub.f32 %v3098, %v3168
    %v3170 = vand.u32 %v3169, 4294901760
    %v3171 = vsub.f32 %v3169, %v3170
    %v3172 = vand.u32 %v3171, 4294901760
    %3173 = vmatpush.msra.mxu0 %v3172
    %v3174 = vand.u32 %v3097, 4294901760
    %v3175 = vsub.f32 %v3097, %v3174
    %v3176 = vand.u32 %v3175, 4294901760
    %v3177 = vsub.f32 %v3175, %v3176
    %v3178 = vand.u32 %v3177, 4294901760
    %3179 = vmatpush.msra.mxu0 %v3178
    %v3180 = vand.u32 %v3102, 4294901760
    %3181 = vmatmul.f32.gmra.mxu0 %v3180
    %v3182 = vpop.f32.mrf.mxu0
    %v3183 = vadd.f32 %v3134, %v3182
    %v3184 = vand.u32 %v3105, 4294901760
    %3185 = vmatmul.f32.gmra.mxu0 %v3184
    %v3186 = vpop.f32.mrf.mxu0
    %v3187 = vadd.f32 %v3142, %v3186
    %3188 = vdwg.mxu0
    %3189 = vmatpush.msra.mxu0 0.0
    %3190 = vmatpush.msra.mxu0 0.0
    %3191 = vmatpush.msra.mxu0 0.0
    %3192 = vmatpush.msra.mxu0 0.0
    %3193 = vmatpush.msra.mxu0 0.0
    %3194 = vmatpush.msra.mxu0 0.0
    %3195 = vmatpush.msra.mxu0 0.0
    %3196 = vmatpush.msra.mxu0 0.0
    %3197 = vmatpush.msra.mxu0 0.0
    %3198 = vmatpush.msra.mxu0 0.0
    %3199 = vmatpush.msra.mxu0 0.0
    %3200 = vmatpush.msra.mxu0 0.0
    %v3201 = vand.u32 %v3100, 4294901760
    %v3202 = vsub.f32 %v3100, %v3201
    %3203 = vmatpush.msra.mxu0 %v3202
    %v3204 = vand.u32 %v3099, 4294901760
    %v3205 = vsub.f32 %v3099, %v3204
    %3206 = vmatpush.msra.mxu0 %v3205
    %v3207 = vand.u32 %v3098, 4294901760
    %v3208 = vsub.f32 %v3098, %v3207
    %3209 = vmatpush.msra.mxu0 %v3208
    %v3210 = vand.u32 %v3097, 4294901760
    %v3211 = vsub.f32 %v3097, %v3210
    %3212 = vmatpush.msra.mxu0 %v3211
    %v3213 = vand.u32 %v3102, 4294901760
    %v3214 = vsub.f32 %v3102, %v3213
    %3215 = vmatmul.f32.gmra.mxu0 %v3214
    %v3216 = vpop.f32.mrf.mxu0
    %v3217 = vadd.f32 %v3183, %v3216
    %v3218 = vand.u32 %v3105, 4294901760
    %v3219 = vsub.f32 %v3105, %v3218
    %3220 = vmatmul.f32.gmra.mxu0 %v3219
    %v3221 = vpop.f32.mrf.mxu0
    %v3222 = vadd.f32 %v3187, %v3221
    %3223 = vdwg.mxu0
    %3224 = vmatpush.msra.mxu0 0.0
    %3225 = vmatpush.msra.mxu0 0.0
    %3226 = vmatpush.msra.mxu0 0.0
    %3227 = vmatpush.msra.mxu0 0.0
    %3228 = vmatpush.msra.mxu0 0.0
    %3229 = vmatpush.msra.mxu0 0.0
    %3230 = vmatpush.msra.mxu0 0.0
    %3231 = vmatpush.msra.mxu0 0.0
    %3232 = vmatpush.msra.mxu0 0.0
    %3233 = vmatpush.msra.mxu0 0.0
    %3234 = vmatpush.msra.mxu0 0.0
    %3235 = vmatpush.msra.mxu0 0.0
    %v3236 = vand.u32 %v3100, 4294901760
    %3237 = vmatpush.msra.mxu0 %v3236
    %v3238 = vand.u32 %v3099, 4294901760
    %3239 = vmatpush.msra.mxu0 %v3238
    %v3240 = vand.u32 %v3098, 4294901760
    %3241 = vmatpush.msra.mxu0 %v3240
    %v3242 = vand.u32 %v3097, 4294901760
    %3243 = vmatpush.msra.mxu0 %v3242
    %v3244 = vand.u32 %v3102, 4294901760
    %v3245 = vsub.f32 %v3102, %v3244
    %v3246 = vand.u32 %v3245, 4294901760
    %3247 = vmatmul.f32.gmra.mxu0 %v3246
    %v3248 = vpop.f32.mrf.mxu0
    %v3249 = vadd.f32 %v3217, %v3248
    %v3250 = vand.u32 %v3105, 4294901760
    %v3251 = vsub.f32 %v3105, %v3250
    %v3252 = vand.u32 %v3251, 4294901760
    %3253 = vmatmul.f32.gmra.mxu0 %v3252
    %v3254 = vpop.f32.mrf.mxu0
    %v3255 = vadd.f32 %v3222, %v3254
    %3256 = vdwg.mxu0
    %3257 = vmatpush.msra.mxu0 0.0
    %3258 = vmatpush.msra.mxu0 0.0
    %3259 = vmatpush.msra.mxu0 0.0
    %3260 = vmatpush.msra.mxu0 0.0
    %3261 = vmatpush.msra.mxu0 0.0
    %3262 = vmatpush.msra.mxu0 0.0
    %3263 = vmatpush.msra.mxu0 0.0
    %3264 = vmatpush.msra.mxu0 0.0
    %3265 = vmatpush.msra.mxu0 0.0
    %3266 = vmatpush.msra.mxu0 0.0
    %3267 = vmatpush.msra.mxu0 0.0
    %3268 = vmatpush.msra.mxu0 0.0
    %v3269 = vand.u32 %v3100, 4294901760
    %v3270 = vsub.f32 %v3100, %v3269
    %v3271 = vand.u32 %v3270, 4294901760
    %3272 = vmatpush.msra.mxu0 %v3271
    %v3273 = vand.u32 %v3099, 4294901760
    %v3274 = vsub.f32 %v3099, %v3273
    %v3275 = vand.u32 %v3274, 4294901760
    %3276 = vmatpush.msra.mxu0 %v3275
    %v3277 = vand.u32 %v3098, 4294901760
    %v3278 = vsub.f32 %v3098, %v3277
    %v3279 = vand.u32 %v3278, 4294901760
    %3280 = vmatpush.msra.mxu0 %v3279
    %v3281 = vand.u32 %v3097, 4294901760
    %v3282 = vsub.f32 %v3097, %v3281
    %v3283 = vand.u32 %v3282, 4294901760
    %3284 = vmatpush.msra.mxu0 %v3283
    %v3285 = vand.u32 %v3102, 4294901760
    %3286 = vmatmul.f32.gmra.mxu0 %v3285
    %v3287 = vpop.f32.mrf.mxu0
    %v3288 = vadd.f32 %v3249, %v3287
    %v3289 = vand.u32 %v3105, 4294901760
    %3290 = vmatmul.f32.gmra.mxu0 %v3289
    %v3291 = vpop.f32.mrf.mxu0
    %v3292 = vadd.f32 %v3255, %v3291
    %3293 = vdwg.mxu0
    %3294 = vmatpush.msra.mxu0 0.0
    %3295 = vmatpush.msra.mxu0 0.0
    %3296 = vmatpush.msra.mxu0 0.0
    %3297 = vmatpush.msra.mxu0 0.0
    %3298 = vmatpush.msra.mxu0 0.0
    %3299 = vmatpush.msra.mxu0 0.0
    %3300 = vmatpush.msra.mxu0 0.0
    %3301 = vmatpush.msra.mxu0 0.0
    %3302 = vmatpush.msra.mxu0 0.0
    %3303 = vmatpush.msra.mxu0 0.0
    %3304 = vmatpush.msra.mxu0 0.0
    %3305 = vmatpush.msra.mxu0 0.0
    %v3306 = vand.u32 %v3100, 4294901760
    %3307 = vmatpush.msra.mxu0 %v3306
    %v3308 = vand.u32 %v3099, 4294901760
    %3309 = vmatpush.msra.mxu0 %v3308
    %v3310 = vand.u32 %v3098, 4294901760
    %3311 = vmatpush.msra.mxu0 %v3310
    %v3312 = vand.u32 %v3097, 4294901760
    %3313 = vmatpush.msra.mxu0 %v3312
    %v3314 = vand.u32 %v3102, 4294901760
    %3315 = vmatmul.f32.gmra.mxu0 %v3314
    %v3316 = vpop.f32.mrf.mxu0
    %v3317 = vadd.f32 %v3288, %v3316
    %v3318 = vand.u32 %v3105, 4294901760
    %3319 = vmatmul.f32.gmra.mxu0 %v3318
    %v3320 = vpop.f32.mrf.mxu0
    %v3321 = vadd.f32 %v3292, %v3320
    %3322 = vdwg.mxu0
    %v3323 = vadd.f32 %v3093, %v3317
    %v3324 = vadd.f32 %v3094, %v3321
    %v3325 = vld [vmem:[#allocation2 + $0xb] sm:$0xff]
    %v3326 = vld [vmem:[#allocation2 + $0x13] sm:$0xff]
    %v3327 = vld [vmem:[%s1540] sm:$0xff]
    %v3328 = vld [vmem:[%s1540 + $0x8] sm:$0xff]
    %v3329 = vld [vmem:[%s1540 + $0x10] sm:$0xff]
    %v3330 = vld [vmem:[%s1540 + $0x18] sm:$0xff]
    %v3332 = vsel %vm169, %v3325, 0
    %v3335 = vsel %vm169, %v3326, 0
    %3337 = vmatpush.msra.mxu0 0.0
    %3338 = vmatpush.msra.mxu0 0.0
    %3339 = vmatpush.msra.mxu0 0.0
    %3340 = vmatpush.msra.mxu0 0.0
    %3341 = vmatpush.msra.mxu0 0.0
    %3342 = vmatpush.msra.mxu0 0.0
    %3343 = vmatpush.msra.mxu0 0.0
    %3344 = vmatpush.msra.mxu0 0.0
    %3345 = vmatpush.msra.mxu0 0.0
    %3346 = vmatpush.msra.mxu0 0.0
    %3347 = vmatpush.msra.mxu0 0.0
    %3348 = vmatpush.msra.mxu0 0.0
    %v3349 = vand.u32 %v3330, 4294901760
    %3350 = vmatpush.msra.mxu0 %v3349
    %v3351 = vand.u32 %v3329, 4294901760
    %3352 = vmatpush.msra.mxu0 %v3351
    %v3353 = vand.u32 %v3328, 4294901760
    %3354 = vmatpush.msra.mxu0 %v3353
    %v3355 = vand.u32 %v3327, 4294901760
    %3356 = vmatpush.msra.mxu0 %v3355
    %v3357 = vand.u32 %v3332, 4294901760
    %v3358 = vsub.f32 %v3332, %v3357
    %v3359 = vand.u32 %v3358, 4294901760
    %v3360 = vsub.f32 %v3358, %v3359
    %v3361 = vand.u32 %v3360, 4294901760
    %3362 = vmatmul.f32.gmra.mxu0 %v3361
    %v3363 = vpop.f32.mrf.mxu0
    %v3364 = vadd.f32 0.0, %v3363
    %v3365 = vand.u32 %v3335, 4294901760
    %v3366 = vsub.f32 %v3335, %v3365
    %v3367 = vand.u32 %v3366, 4294901760
    %v3368 = vsub.f32 %v3366, %v3367
    %v3369 = vand.u32 %v3368, 4294901760
    %3370 = vmatmul.f32.gmra.mxu0 %v3369
    %v3371 = vpop.f32.mrf.mxu0
    %v3372 = vadd.f32 0.0, %v3371
    %3373 = vdwg.mxu0
    %3374 = vmatpush.msra.mxu0 0.0
    %3375 = vmatpush.msra.mxu0 0.0
    %3376 = vmatpush.msra.mxu0 0.0
    %3377 = vmatpush.msra.mxu0 0.0
    %3378 = vmatpush.msra.mxu0 0.0
    %3379 = vmatpush.msra.mxu0 0.0
    %3380 = vmatpush.msra.mxu0 0.0
    %3381 = vmatpush.msra.mxu0 0.0
    %3382 = vmatpush.msra.mxu0 0.0
    %3383 = vmatpush.msra.mxu0 0.0
    %3384 = vmatpush.msra.mxu0 0.0
    %3385 = vmatpush.msra.mxu0 0.0
    %v3386 = vand.u32 %v3330, 4294901760
    %v3387 = vsub.f32 %v3330, %v3386
    %v3388 = vand.u32 %v3387, 4294901760
    %v3389 = vsub.f32 %v3387, %v3388
    %v3390 = vand.u32 %v3389, 4294901760
    %3391 = vmatpush.msra.mxu0 %v3390
    %v3392 = vand.u32 %v3329, 4294901760
    %v3393 = vsub.f32 %v3329, %v3392
    %v3394 = vand.u32 %v3393, 4294901760
    %v3395 = vsub.f32 %v3393, %v3394
    %v3396 = vand.u32 %v3395, 4294901760
    %3397 = vmatpush.msra.mxu0 %v3396
    %v3398 = vand.u32 %v3328, 4294901760
    %v3399 = vsub.f32 %v3328, %v3398
    %v3400 = vand.u32 %v3399, 4294901760
    %v3401 = vsub.f32 %v3399, %v3400
    %v3402 = vand.u32 %v3401, 4294901760
    %3403 = vmatpush.msra.mxu0 %v3402
    %v3404 = vand.u32 %v3327, 4294901760
    %v3405 = vsub.f32 %v3327, %v3404
    %v3406 = vand.u32 %v3405, 4294901760
    %v3407 = vsub.f32 %v3405, %v3406
    %v3408 = vand.u32 %v3407, 4294901760
    %3409 = vmatpush.msra.mxu0 %v3408
    %v3410 = vand.u32 %v3332, 4294901760
    %3411 = vmatmul.f32.gmra.mxu0 %v3410
    %v3412 = vpop.f32.mrf.mxu0
    %v3413 = vadd.f32 %v3364, %v3412
    %v3414 = vand.u32 %v3335, 4294901760
    %3415 = vmatmul.f32.gmra.mxu0 %v3414
    %v3416 = vpop.f32.mrf.mxu0
    %v3417 = vadd.f32 %v3372, %v3416
    %3418 = vdwg.mxu0
    %3419 = vmatpush.msra.mxu0 0.0
    %3420 = vmatpush.msra.mxu0 0.0
    %3421 = vmatpush.msra.mxu0 0.0
    %3422 = vmatpush.msra.mxu0 0.0
    %3423 = vmatpush.msra.mxu0 0.0
    %3424 = vmatpush.msra.mxu0 0.0
    %3425 = vmatpush.msra.mxu0 0.0
    %3426 = vmatpush.msra.mxu0 0.0
    %3427 = vmatpush.msra.mxu0 0.0
    %3428 = vmatpush.msra.mxu0 0.0
    %3429 = vmatpush.msra.mxu0 0.0
    %3430 = vmatpush.msra.mxu0 0.0
    %v3431 = vand.u32 %v3330, 4294901760
    %v3432 = vsub.f32 %v3330, %v3431
    %3433 = vmatpush.msra.mxu0 %v3432
    %v3434 = vand.u32 %v3329, 4294901760
    %v3435 = vsub.f32 %v3329, %v3434
    %3436 = vmatpush.msra.mxu0 %v3435
    %v3437 = vand.u32 %v3328, 4294901760
    %v3438 = vsub.f32 %v3328, %v3437
    %3439 = vmatpush.msra.mxu0 %v3438
    %v3440 = vand.u32 %v3327, 4294901760
    %v3441 = vsub.f32 %v3327, %v3440
    %3442 = vmatpush.msra.mxu0 %v3441
    %v3443 = vand.u32 %v3332, 4294901760
    %v3444 = vsub.f32 %v3332, %v3443
    %3445 = vmatmul.f32.gmra.mxu0 %v3444
    %v3446 = vpop.f32.mrf.mxu0
    %v3447 = vadd.f32 %v3413, %v3446
    %v3448 = vand.u32 %v3335, 4294901760
    %v3449 = vsub.f32 %v3335, %v3448
    %3450 = vmatmul.f32.gmra.mxu0 %v3449
    %v3451 = vpop.f32.mrf.mxu0
    %v3452 = vadd.f32 %v3417, %v3451
    %3453 = vdwg.mxu0
    %3454 = vmatpush.msra.mxu0 0.0
    %3455 = vmatpush.msra.mxu0 0.0
    %3456 = vmatpush.msra.mxu0 0.0
    %3457 = vmatpush.msra.mxu0 0.0
    %3458 = vmatpush.msra.mxu0 0.0
    %3459 = vmatpush.msra.mxu0 0.0
    %3460 = vmatpush.msra.mxu0 0.0
    %3461 = vmatpush.msra.mxu0 0.0
    %3462 = vmatpush.msra.mxu0 0.0
    %3463 = vmatpush.msra.mxu0 0.0
    %3464 = vmatpush.msra.mxu0 0.0
    %3465 = vmatpush.msra.mxu0 0.0
    %v3466 = vand.u32 %v3330, 4294901760
    %3467 = vmatpush.msra.mxu0 %v3466
    %v3468 = vand.u32 %v3329, 4294901760
    %3469 = vmatpush.msra.mxu0 %v3468
    %v3470 = vand.u32 %v3328, 4294901760
    %3471 = vmatpush.msra.mxu0 %v3470
    %v3472 = vand.u32 %v3327, 4294901760
    %3473 = vmatpush.msra.mxu0 %v3472
    %v3474 = vand.u32 %v3332, 4294901760
    %v3475 = vsub.f32 %v3332, %v3474
    %v3476 = vand.u32 %v3475, 4294901760
    %3477 = vmatmul.f32.gmra.mxu0 %v3476
    %v3478 = vpop.f32.mrf.mxu0
    %v3479 = vadd.f32 %v3447, %v3478
    %v3480 = vand.u32 %v3335, 4294901760
    %v3481 = vsub.f32 %v3335, %v3480
    %v3482 = vand.u32 %v3481, 4294901760
    %3483 = vmatmul.f32.gmra.mxu0 %v3482
    %v3484 = vpop.f32.mrf.mxu0
    %v3485 = vadd.f32 %v3452, %v3484
    %3486 = vdwg.mxu0
    %3487 = vmatpush.msra.mxu0 0.0
    %3488 = vmatpush.msra.mxu0 0.0
    %3489 = vmatpush.msra.mxu0 0.0
    %3490 = vmatpush.msra.mxu0 0.0
    %3491 = vmatpush.msra.mxu0 0.0
    %3492 = vmatpush.msra.mxu0 0.0
    %3493 = vmatpush.msra.mxu0 0.0
    %3494 = vmatpush.msra.mxu0 0.0
    %3495 = vmatpush.msra.mxu0 0.0
    %3496 = vmatpush.msra.mxu0 0.0
    %3497 = vmatpush.msra.mxu0 0.0
    %3498 = vmatpush.msra.mxu0 0.0
    %v3499 = vand.u32 %v3330, 4294901760
    %v3500 = vsub.f32 %v3330, %v3499
    %v3501 = vand.u32 %v3500, 4294901760
    %3502 = vmatpush.msra.mxu0 %v3501
    %v3503 = vand.u32 %v3329, 4294901760
    %v3504 = vsub.f32 %v3329, %v3503
    %v3505 = vand.u32 %v3504, 4294901760
    %3506 = vmatpush.msra.mxu0 %v3505
    %v3507 = vand.u32 %v3328, 4294901760
    %v3508 = vsub.f32 %v3328, %v3507
    %v3509 = vand.u32 %v3508, 4294901760
    %3510 = vmatpush.msra.mxu0 %v3509
    %v3511 = vand.u32 %v3327, 4294901760
    %v3512 = vsub.f32 %v3327, %v3511
    %v3513 = vand.u32 %v3512, 4294901760
    %3514 = vmatpush.msra.mxu0 %v3513
    %v3515 = vand.u32 %v3332, 4294901760
    %3516 = vmatmul.f32.gmra.mxu0 %v3515
    %v3517 = vpop.f32.mrf.mxu0
    %v3518 = vadd.f32 %v3479, %v3517
    %v3519 = vand.u32 %v3335, 4294901760
    %3520 = vmatmul.f32.gmra.mxu0 %v3519
    %v3521 = vpop.f32.mrf.mxu0
    %v3522 = vadd.f32 %v3485, %v3521
    %3523 = vdwg.mxu0
    %3524 = vmatpush.msra.mxu0 0.0
    %3525 = vmatpush.msra.mxu0 0.0
    %3526 = vmatpush.msra.mxu0 0.0
    %3527 = vmatpush.msra.mxu0 0.0
    %3528 = vmatpush.msra.mxu0 0.0
    %3529 = vmatpush.msra.mxu0 0.0
    %3530 = vmatpush.msra.mxu0 0.0
    %3531 = vmatpush.msra.mxu0 0.0
    %3532 = vmatpush.msra.mxu0 0.0
    %3533 = vmatpush.msra.mxu0 0.0
    %3534 = vmatpush.msra.mxu0 0.0
    %3535 = vmatpush.msra.mxu0 0.0
    %v3536 = vand.u32 %v3330, 4294901760
    %3537 = vmatpush.msra.mxu0 %v3536
    %v3538 = vand.u32 %v3329, 4294901760
    %3539 = vmatpush.msra.mxu0 %v3538
    %v3540 = vand.u32 %v3328, 4294901760
    %3541 = vmatpush.msra.mxu0 %v3540
    %v3542 = vand.u32 %v3327, 4294901760
    %3543 = vmatpush.msra.mxu0 %v3542
    %v3544 = vand.u32 %v3332, 4294901760
    %3545 = vmatmul.f32.gmra.mxu0 %v3544
    %v3546 = vpop.f32.mrf.mxu0
    %v3547 = vadd.f32 %v3518, %v3546
    %v3548 = vand.u32 %v3335, 4294901760
    %3549 = vmatmul.f32.gmra.mxu0 %v3548
    %v3550 = vpop.f32.mrf.mxu0
    %v3551 = vadd.f32 %v3522, %v3550
    %3552 = vdwg.mxu0
    %v3553 = vadd.f32 %v3323, %v3547
    %v3554 = vadd.f32 %v3324, %v3551
    %v3555 = vxor.u32 %v3553, 2147483648
    %v3556 = vxor.u32 %v3554, 2147483648
    %v3557 = vmul.f32 %v3555, 1.442695
    %v3558 = vpow.pop %v3557
    %v3559 = vmul.f32 %v3556, 1.442695
    %v3560 = vpow.pop %v3559
    %v3561 = vadd.f32 %v3558, 1.0
    %v3562 = vadd.f32 %v3560, 1.0
    %v3563 = vrcp.pop %v3561
    %v3564 = vmul.f32 %v3561, %v3563
    %v3565 = vsub.f32 1.0, %v3564
    %v3566 = vmul.f32 %v3563, %v3565
    %v3567 = vadd.f32 %v3563, %v3566
    %vm3568 = vweird.f32 %v3561
    %vm3569 = vweird.f32 %v3563
    %vm3570 = vmor %vm3568, %vm3569
    %v3571 = vsel %vm3570, %v3563, %v3567
    %v3572 = vand.u32 2147483647, %v3561
    %vm3573 = vcmp.eq.f32.partialorder %v3572, 8.507059e+37
    %v3574 = vand.u32 %v3561, 2147483648
    %v3575 = vor.u32 1.1754944e-38, %v3574
    %v3576 = vsel %vm3573, %v3575, %v3571
    %v3577 = vmul.f32 1.0, %v3576
    %v3578 = vrcp.pop %v3562
    %v3579 = vmul.f32 %v3562, %v3578
    %v3580 = vsub.f32 1.0, %v3579
    %v3581 = vmul.f32 %v3578, %v3580
    %v3582 = vadd.f32 %v3578, %v3581
    %vm3583 = vweird.f32 %v3562
    %vm3584 = vweird.f32 %v3578
    %vm3585 = vmor %vm3583, %vm3584
    %v3586 = vsel %vm3585, %v3578, %v3582
    %v3587 = vand.u32 2147483647, %v3562
    %vm3588 = vcmp.eq.f32.partialorder %v3587, 8.507059e+37
    %v3589 = vand.u32 %v3562, 2147483648
    %v3590 = vor.u32 1.1754944e-38, %v3589
    %v3591 = vsel %vm3588, %v3590, %v3586
    %v3592 = vmul.f32 1.0, %v3591
    %s3593 = scalar_lea.vmem [#allocation3], 16
    %3594 = vst.msk [vmem:[%s3593] sm:$0xff] %vm35, %v3577
    %3595 = vst.msk [vmem:[%s3593 + $0x8] sm:$0xff] %vm35, %v3592
    // Predicated region
    $region10: #{tpu_custom_call.1} parent=1 // pred_check
      _
    $region11: #{tpu_custom_call.1} parent=1 // pred_check_branch
      %3597 = sbr.rel (0) target = $region13
    $region12: #{tpu_custom_call.1} parent=1 // pred_region
      %3599 = vsyncadd [#allocation4], 0
      %s3600 = sshll.u32 [#allocation3], 4
      %s3601 = int_to_ptr.vmem [resolvable:$true] %s3600
      %s3602 = sshll.u32 %s2, 4
      %s3603 = int_to_ptr.hbm [resolvable:$true] %s3602
      %3608 = dma.vmem_to_hbm [thread:$0]  %s3601, 512, %s3603, [#allocation4], 128, 128, 8
    $region13: #{tpu_custom_call.1} parent=1 // pred_fallthru
      _
    // Predicated region
    $region14: #{tpu_custom_call.1} parent=1 // pred_check
      _
    $region15: #{tpu_custom_call.1} parent=1 // pred_check_branch
      %3610 = sbr.rel (0) target = $region17
    $region16: #{tpu_custom_call.1} parent=1 // pred_region
      %3612 = dma.done [#allocation4], 512
    $region17: #{tpu_custom_call.1} parent=1 // pred_fallthru
      _
    %3613 = vsyncpa [#allocation4], 1

</llo_original>
